<compile_context>
chip_gen: v6e
topology: v6e:2x2x1
jax: 0.10.0
libtpu: 0.0.40
codegen_flags: <defaults>
</compile_context>

<pallas_src>
import functools

import numpy as np

import jax
import jax.numpy as jnp
from jax import lax
from jax.experimental import pallas as pl
from jax.experimental.pallas import tpu as pltpu


# --------------------------------------------------------------------------
# trace-time constants (numpy)
# --------------------------------------------------------------------------

def _up_matrix_1d(n_out, n_in):
    """1-D bilinear interpolation matrix (align_corners=True), (n_out, n_in)."""
    U = np.zeros((n_out, n_in), np.float32)
    if n_in == 1:
        U[:, 0] = 1.0
        return U
    scale = (n_in - 1) / (n_out - 1)
    for i in range(n_out):
        s = i * scale
        i0 = int(np.floor(s))
        i1 = min(i0 + 1, n_in - 1)
        f = s - i0
        U[i, i0] += 1.0 - f
        U[i, i1] += f
    return U


def _upsample_matrix_t(sp_out, sp_in):
    """Transposed 2x bilinear upsample matrix: (Hin*Win, Hout*Wout)."""
    (ho, wo), (hi, wi) = sp_out, sp_in
    U = np.kron(_up_matrix_1d(ho, hi), _up_matrix_1d(wo, wi))   # (HoWo, HiWi)
    return jnp.asarray(U.T)


def _tap_masks(h, w):
    """(9, H*W) float32 border-validity masks for the 3x3 / pad=1 conv taps."""
    idx = np.arange(h * w)
    hi, wi = idx // w, idx % w
    m = np.zeros((9, h * w), np.float32)
    for kh in range(3):
        for kw in range(3):
            dh, dw = kh - 1, kw - 1
            ok = ((hi + dh >= 0) & (hi + dh < h) &
                  (wi + dw >= 0) & (wi + dw < w))
            m[kh * 3 + kw] = ok.astype(np.float32)
    return m


def _const_pipeline_kwargs():
    """Use single-buffering for grid-invariant constant blocks when supported."""
    if not hasattr(pl, "Buffered"):
        return {}
    try:
        pl.BlockSpec((8, 128), lambda i: (0, 0), pipeline_mode=pl.Buffered(1))
        return {"pipeline_mode": pl.Buffered(1)}
    except Exception:   # older signature without pipeline_mode
        return {}


_CONST_PIPELINE = _const_pipeline_kwargs()


# --------------------------------------------------------------------------
# fused Pallas kernel
# --------------------------------------------------------------------------

def _fpn_kernel(spatial, cins, offs,
                c2_ref, c3_ref, c4_ref, c5_ref,
                w1s_ref, bias_ref, w2s_ref, masks_ref,
                u2_ref, u3_ref, u4_ref,
                out_ref):
    """Whole top-down path for one image, channel-major (C, H*W) layout."""
    masks = masks_ref[...]          # (9, sum HW)  -- tiny, loaded once
    bias = bias_ref[...]            # (4, Cout, 2)

    def level(l, cur_ref, up):
        h, w = spatial[l]
        hw = h * w
        cin = cins[l]
        off = offs[l]

        # conv1: 1x1 conv + bias (one MXU matmul), fuse upsampled higher level.
        w1 = w1s_ref[l, :, :cin]                           # (Cout, Cin) view
        x = jnp.dot(w1, cur_ref[...],
                    preferred_element_type=jnp.float32) + bias[l, :, 0:1]
        if up is not None:
            x = x + up

        # conv2: 3x3 conv (pad=1) as ONE K=9*Cout matmul over an in-VMEM
        # im2col slab.  Shifts are static lane slices of a zero-extended copy;
        # borders are a single constant-mask multiply per tap.
        cout = x.shape[0]
        zpad = jnp.zeros((cout, w + 1), jnp.float32)
        xp = jnp.concatenate([zpad, x, zpad], axis=-1)     # (Cout, hw + 2w + 2)
        cols = []
        for kh in range(3):
            for kw in range(3):
                k = kh * 3 + kw
                s = (kh - 1) * w + (kw - 1)
                xs = xp[:, w + 1 + s: w + 1 + s + hw]      # shifted taps
                cols.append(xs * masks[k:k + 1, off:off + hw])
        xcol = jnp.concatenate(cols, axis=0)               # (9*Cout, hw)
        out = jnp.dot(w2s_ref[l], xcol,
                      preferred_element_type=jnp.float32) + bias[l, :, 1:2]

        out_ref[:, off:off + hw] = out.astype(out_ref.dtype)
        return x, out

    # P5 (top of the pyramid: no higher-level fusion).
    x5, out5 = level(3, c5_ref, None)

    # P6 = MaxPool2d(kernel_size=1, stride=2)(outP5): static column selection.
    h5, w5 = spatial[3]
    cols6 = [2 * i * w5 + 2 * j
             for i in range((h5 - 1) // 2 + 1)
             for j in range((w5 - 1) // 2 + 1)]
    p6 = jnp.concatenate([out5[:, c:c + 1] for c in cols6], axis=-1)
    out_ref[:, offs[4]:offs[4] + len(cols6)] = p6.astype(out_ref.dtype)

    # P4 .. P2: add the bilinearly upsampled x of the level above (all in VMEM).
    up4 = jnp.dot(x5, u4_ref[...], preferred_element_type=jnp.float32)
    x4, _ = level(2, c4_ref, up4)
    up3 = jnp.dot(x4, u3_ref[...], preferred_element_type=jnp.float32)
    x3, _ = level(1, c3_ref, up3)
    up2 = jnp.dot(x3, u2_ref[...], preferred_element_type=jnp.float32)
    level(0, c2_ref, up2)


# --------------------------------------------------------------------------
# wrapper
# --------------------------------------------------------------------------

def fpn_forward(params, C2, C3, C4, C5):
    """FPN forward pass. Inputs and outputs are NCHW (PyTorch convention)."""
    laterals = (C2, C3, C4, C5)
    n = C2.shape[0]
    spatial = tuple((int(t.shape[2]), int(t.shape[3])) for t in laterals)
    for (hl, wl), (hh, wh) in zip(spatial[:-1], spatial[1:]):
        assert hl == 2 * hh and wl == 2 * wh, "FPN expects 2x spatial steps"

    names = ("P2", "P3", "P4", "P5")
    cins = tuple(int(params[nm]["w1"].shape[1]) for nm in names)
    cout = int(params["P2"]["w1"].shape[0])
    max_cin = max(cins)

    # NCHW -> (N, C, H*W): free reshapes, no transposes.
    flat_in = [t.reshape(t.shape[0], t.shape[1], -1) for t in laterals]

    # ---- consolidated constants (7 inputs instead of ~25) ----
    # 1x1 conv weights, zero-padded on Cin and stacked: (4, Cout, max_cin).
    w1s = jnp.stack([
        jnp.pad(params[nm]["w1"].reshape(cout, cins[i]),
                ((0, 0), (0, max_cin - cins[i])))
        for i, nm in enumerate(names)])
    # conv1/conv2 biases: (4, Cout, 2).
    bias = jnp.stack([
        jnp.stack([params[nm]["b1"], params[nm]["b2"]], axis=-1)
        for nm in names])
    # 3x3 conv weights, im2col-stacked: (4, Cout, 9*Cout); block k = kh*3+kw.
    w2s = jnp.stack([
        jnp.transpose(params[nm]["w2"], (0, 2, 3, 1)).reshape(cout, 9 * cout)
        for nm in names])
    # Border masks packed across levels along the lane axis: (9, sum HW).
    masks = jnp.asarray(
        np.concatenate([_tap_masks(h, w) for (h, w) in spatial], axis=1))

    # Upsample matrices (transposed for right multiplication).
    u4 = _upsample_matrix_t(spatial[2], spatial[3])
    u3 = _upsample_matrix_t(spatial[1], spatial[2])
    u2 = _upsample_matrix_t(spatial[0], spatial[1])

    # Packed output slab layout: [P2 | P3 | P4 | P5 | P6 | pad] along lanes.
    hws = [h * w for (h, w) in spatial]
    offs = [0]
    for m in hws:
        offs.append(offs[-1] + m)
    h5, w5 = spatial[3]
    h6, w6 = (h5 - 1) // 2 + 1, (w5 - 1) // 2 + 1
    total = offs[4] + h6 * w6
    slab_w = ((total + 127) // 128) * 128          # lane-dense (multiple of 128)

    inputs = flat_in + [w1s, bias, w2s, masks, u2, u3, u4]

    def batch_spec(a):
        return pl.BlockSpec((None,) + tuple(a.shape[1:]), lambda i: (i, 0, 0))

    def const_spec(a):
        nd = a.ndim
        return pl.BlockSpec(tuple(a.shape), lambda i, _nd=nd: (0,) * _nd,
                            **_CONST_PIPELINE)

    in_specs = ([batch_spec(a) for a in flat_in] +
                [const_spec(a) for a in inputs[len(flat_in):]])

    out_shape = jax.ShapeDtypeStruct((n, cout, slab_w), jnp.float32)
    out_specs = pl.BlockSpec((None, cout, slab_w), lambda i: (i, 0, 0))

    kernel = functools.partial(_fpn_kernel, spatial, cins, tuple(offs))
    slab = pl.pallas_call(
        kernel,
        grid=(n,),
        in_specs=in_specs,
        out_specs=out_specs,
        out_shape=out_shape,
        compiler_params=pltpu.CompilerParams(
            dimension_semantics=("parallel",),
        ),
    )(*inputs)

    outs = []
    for (h, w), off in zip(spatial, offs[:4]):
        outs.append(slab[:, :, off:off + h * w].reshape(n, cout, h, w))
    outs.append(slab[:, :, offs[4]:offs[4] + h6 * w6].reshape(n, cout, h6, w6))
    return outs


# --------------------------------------------------------------------------
# parameters + pure-JAX reference (for a numerical self-check)
# --------------------------------------------------------------------------

def init_fpn_params(key, expansion=1, inp_ch=(16, 32, 64, 128), out_ch=32):
    params = {}
    names = ("P2", "P3", "P4", "P5")
    keys = jax.random.split(key, len(names))
    for name, ic, k in zip(names, inp_ch, keys):
        cin = ic * expansion
        k1, k2, k3, k4 = jax.random.split(k, 4)
        params[name] = {
            "w1": 0.02 * jax.random.normal(k1, (out_ch, cin, 1, 1), jnp.float32),
            "b1": 0.02 * jax.random.normal(k2, (out_ch,), jnp.float32),
            "w2": 0.02 * jax.random.normal(k3, (out_ch, out_ch, 3, 3), jnp.float32),
            "b2": 0.02 * jax.random.normal(k4, (out_ch,), jnp.float32),
        }
    return params


def _ref_conv(x, w, b, pad):
    y = lax.conv_general_dilated(
        x, w, window_strides=(1, 1), padding=[(pad, pad), (pad, pad)],
        dimension_numbers=("NCHW", "OIHW", "NCHW"),
        precision=lax.Precision.HIGHEST)
    return y + b[None, :, None, None]


def _ref_up2(x):
    _, _, h, w = x.shape
    uy = jnp.asarray(_up_matrix_1d(2 * h, h))
    ux = jnp.asarray(_up_matrix_1d(2 * w, w))
    return jnp.einsum("ih,nchw,jw->ncij", uy, x, ux,
                      precision=lax.Precision.HIGHEST)


def fpn_reference(params, C2, C3, C4, C5):
    def block(p, cur, higher):
        x = _ref_conv(cur, p["w1"], p["b1"], 0)
        if higher is not None:
            x = x + _ref_up2(higher)
        return x, _ref_conv(x, p["w2"], p["b2"], 1)

    x, o5 = block(params["P5"], C5, None)
    x, o4 = block(params["P4"], C4, x)
    x, o3 = block(params["P3"], C3, x)
    x, o2 = block(params["P2"], C2, x)
    o6 = o5[:, :, ::2, ::2]
    return [o2, o3, o4, o5, o6]


# --------------------------------------------------------------------------
# main
# --------------------------------------------------------------------------

if __name__ == "__main__":
    key = jax.random.PRNGKey(0)
    kp, k2, k3, k4, k5 = jax.random.split(key, 5)

    expansion = 1
    inp_ch = (16, 32, 64, 128)
    out_ch = 32
    B = 2

    params = init_fpn_params(kp, expansion, inp_ch, out_ch)

    # Bottom-up feature maps (NCHW), spatial halving per level.
    C2 = jax.random.normal(k2, (B, inp_ch[0] * expansion, 16, 16), jnp.float32)
    C3 = jax.random.normal(k3, (B, inp_ch[1] * expansion, 8, 8), jnp.float32)
    C4 = jax.random.normal(k4, (B, inp_ch[2] * expansion, 4, 4), jnp.float32)
    C5 = jax.random.normal(k5, (B, inp_ch[3] * expansion, 2, 2), jnp.float32)

    outs = jax.jit(functools.partial(fpn_forward, params))(C2, C3, C4, C5)
    outs = [jax.block_until_ready(o) for o in outs]

    expected = [
        (B, out_ch, 16, 16),
        (B, out_ch, 8, 8),
        (B, out_ch, 4, 4),
        (B, out_ch, 2, 2),
        (B, out_ch, 1, 1),
    ]
    assert [tuple(o.shape) for o in outs] == expected, [o.shape for o in outs]

    # Numerical self-check against a plain-JAX reference of the PyTorch module.
    refs = fpn_reference(params, C2, C3, C4, C5)
    for o, r in zip(outs, refs):
        np.testing.assert_allclose(np.asarray(o), np.asarray(r),
                                   rtol=2e-3, atol=2e-3)

    print("KERNEL_OK")
</pallas_src>

<mosaic_0001>
module attributes {stable_mosaic.version = 11 : i64} {
  func.func @_fpn_kernel(%arg0: i32, %arg1: memref<1x16x256xf32, #tpu.memory_space<vmem>>, %arg2: memref<1x32x64xf32, #tpu.memory_space<vmem>>, %arg3: memref<1x64x16xf32, #tpu.memory_space<vmem>>, %arg4: memref<1x128x4xf32, #tpu.memory_space<vmem>>, %arg5: memref<4x32x128xf32, #tpu.memory_space<vmem>>, %arg6: memref<4x32x2xf32, #tpu.memory_space<vmem>>, %arg7: memref<4x32x288xf32, #tpu.memory_space<vmem>>, %arg8: memref<9x340xf32, #tpu.memory_space<vmem>>, %arg9: memref<64x256xf32, #tpu.memory_space<vmem>>, %arg10: memref<16x64xf32, #tpu.memory_space<vmem>>, %arg11: memref<4x16xf32, #tpu.memory_space<vmem>>, %arg12: memref<1x32x384xf32, #tpu.memory_space<vmem>>) attributes {dimension_semantics = [#tpu.dimension_semantics<parallel>], iteration_bounds = array<i64: 2>, scalar_prefetch = 0 : i64, scratch_operands = 0 : i64, tpu.core_type = #tpu.core_type<tc>, window_params = [{transform_indices = @transform_0, window_bounds = array<i64: 1, 16, 256>}, {transform_indices = @transform_1, window_bounds = array<i64: 1, 32, 64>}, {transform_indices = @transform_2, window_bounds = array<i64: 1, 64, 16>}, {transform_indices = @transform_3, window_bounds = array<i64: 1, 128, 4>}, {pipeline_mode = #tpu.pipeline_mode<synchronous>, transform_indices = @transform_4, window_bounds = array<i64: 4, 32, 128>}, {pipeline_mode = #tpu.pipeline_mode<synchronous>, transform_indices = @transform_5, window_bounds = array<i64: 4, 32, 2>}, {pipeline_mode = #tpu.pipeline_mode<synchronous>, transform_indices = @transform_6, window_bounds = array<i64: 4, 32, 288>}, {pipeline_mode = #tpu.pipeline_mode<synchronous>, transform_indices = @transform_7, window_bounds = array<i64: 9, 340>}, {pipeline_mode = #tpu.pipeline_mode<synchronous>, transform_indices = @transform_8, window_bounds = array<i64: 64, 256>}, {pipeline_mode = #tpu.pipeline_mode<synchronous>, transform_indices = @transform_9, window_bounds = array<i64: 16, 64>}, {pipeline_mode = #tpu.pipeline_mode<synchronous>, transform_indices = @transform_10, window_bounds = array<i64: 4, 16>}, {transform_indices = @transform_11, window_bounds = array<i64: 1, 32, 384>}]} {
    %c0 = arith.constant 0 : index
    %c0_0 = arith.constant 0 : index
    %0 = vector.load %arg8[%c0, %c0_0] : memref<9x340xf32, #tpu.memory_space<vmem>>, vector<9x340xf32>
    %c0_1 = arith.constant 0 : index
    %c0_2 = arith.constant 0 : index
    %c0_3 = arith.constant 0 : index
    %1 = vector.load %arg6[%c0_1, %c0_2, %c0_3] : memref<4x32x2xf32, #tpu.memory_space<vmem>>, vector<4x32x2xf32>
    %c3 = arith.constant 3 : index
    %c0_4 = arith.constant 0 : index
    %c0_5 = arith.constant 0 : index
    %2 = vector.load %arg5[%c3, %c0_4, %c0_5] : memref<4x32x128xf32, #tpu.memory_space<vmem>>, vector<1x32x128xf32>
    %3 = vector.shape_cast %2 : vector<1x32x128xf32> to vector<32x128xf32>
    %c0_6 = arith.constant 0 : index
    %c0_7 = arith.constant 0 : index
    %c0_8 = arith.constant 0 : index
    %4 = vector.load %arg4[%c0_6, %c0_7, %c0_8] : memref<1x128x4xf32, #tpu.memory_space<vmem>>, vector<1x128x4xf32>
    %5 = vector.shape_cast %4 : vector<1x128x4xf32> to vector<128x4xf32>
    %cst = arith.constant dense<0.000000e+00> : vector<32x4xf32>
    %6 = tpu.matmul %3, %5, %cst {dimension_numbers = #tpu.dot_dimension_numbers<[1], [0], [0], [1], [0, 0, 1, 1], [], []>} : vector<32x128xf32>, vector<128x4xf32>, vector<32x4xf32> -> vector<32x4xf32>
    %7 = vector.extract_strided_slice %1 {offsets = [3, 0, 0], sizes = [1, 32, 1], strides = [1, 1, 1]} : vector<4x32x2xf32> to vector<1x32x1xf32>
    %8 = vector.shape_cast %7 : vector<1x32x1xf32> to vector<32x1xf32>
    %9 = vector.broadcast %8 : vector<32x1xf32> to vector<32x4xf32>
    %10 = arith.addf %6, %9 : vector<32x4xf32>
    %cst_9 = arith.constant 0.000000e+00 : f32
    %11 = vector.broadcast %cst_9 : f32 to vector<32x3xf32>
    %12 = tpu.concatenate %11, %10, %11 in 1 : vector<32x3xf32>, vector<32x4xf32>, vector<32x3xf32> -> vector<32x10xf32>
    %13 = vector.extract_strided_slice %12 {offsets = [0, 0], sizes = [32, 4], strides = [1, 1]} : vector<32x10xf32> to vector<32x4xf32>
    %14 = vector.extract_strided_slice %0 {offsets = [0, 336], sizes = [1, 4], strides = [1, 1]} : vector<9x340xf32> to vector<1x4xf32>
    %15 = vector.broadcast %14 : vector<1x4xf32> to vector<32x4xf32>
    %16 = arith.mulf %13, %15 : vector<32x4xf32>
    %17 = vector.extract_strided_slice %12 {offsets = [0, 1], sizes = [32, 4], strides = [1, 1]} : vector<32x10xf32> to vector<32x4xf32>
    %18 = vector.extract_strided_slice %0 {offsets = [1, 336], sizes = [1, 4], strides = [1, 1]} : vector<9x340xf32> to vector<1x4xf32>
    %19 = vector.broadcast %18 : vector<1x4xf32> to vector<32x4xf32>
    %20 = arith.mulf %17, %19 : vector<32x4xf32>
    %21 = vector.extract_strided_slice %12 {offsets = [0, 2], sizes = [32, 4], strides = [1, 1]} : vector<32x10xf32> to vector<32x4xf32>
    %22 = vector.extract_strided_slice %0 {offsets = [2, 336], sizes = [1, 4], strides = [1, 1]} : vector<9x340xf32> to vector<1x4xf32>
    %23 = vector.broadcast %22 : vector<1x4xf32> to vector<32x4xf32>
    %24 = arith.mulf %21, %23 : vector<32x4xf32>
    %25 = vector.extract_strided_slice %12 {offsets = [0, 2], sizes = [32, 4], strides = [1, 1]} : vector<32x10xf32> to vector<32x4xf32>
    %26 = vector.extract_strided_slice %0 {offsets = [3, 336], sizes = [1, 4], strides = [1, 1]} : vector<9x340xf32> to vector<1x4xf32>
    %27 = vector.broadcast %26 : vector<1x4xf32> to vector<32x4xf32>
    %28 = arith.mulf %25, %27 : vector<32x4xf32>
    %29 = vector.extract_strided_slice %12 {offsets = [0, 3], sizes = [32, 4], strides = [1, 1]} : vector<32x10xf32> to vector<32x4xf32>
    %30 = vector.extract_strided_slice %0 {offsets = [4, 336], sizes = [1, 4], strides = [1, 1]} : vector<9x340xf32> to vector<1x4xf32>
    %31 = vector.broadcast %30 : vector<1x4xf32> to vector<32x4xf32>
    %32 = arith.mulf %29, %31 : vector<32x4xf32>
    %33 = vector.extract_strided_slice %12 {offsets = [0, 4], sizes = [32, 4], strides = [1, 1]} : vector<32x10xf32> to vector<32x4xf32>
    %34 = vector.extract_strided_slice %0 {offsets = [5, 336], sizes = [1, 4], strides = [1, 1]} : vector<9x340xf32> to vector<1x4xf32>
    %35 = vector.broadcast %34 : vector<1x4xf32> to vector<32x4xf32>
    %36 = arith.mulf %33, %35 : vector<32x4xf32>
    %37 = vector.extract_strided_slice %12 {offsets = [0, 4], sizes = [32, 4], strides = [1, 1]} : vector<32x10xf32> to vector<32x4xf32>
    %38 = vector.extract_strided_slice %0 {offsets = [6, 336], sizes = [1, 4], strides = [1, 1]} : vector<9x340xf32> to vector<1x4xf32>
    %39 = vector.broadcast %38 : vector<1x4xf32> to vector<32x4xf32>
    %40 = arith.mulf %37, %39 : vector<32x4xf32>
    %41 = vector.extract_strided_slice %12 {offsets = [0, 5], sizes = [32, 4], strides = [1, 1]} : vector<32x10xf32> to vector<32x4xf32>
    %42 = vector.extract_strided_slice %0 {offsets = [7, 336], sizes = [1, 4], strides = [1, 1]} : vector<9x340xf32> to vector<1x4xf32>
    %43 = vector.broadcast %42 : vector<1x4xf32> to vector<32x4xf32>
    %44 = arith.mulf %41, %43 : vector<32x4xf32>
    %45 = vector.extract_strided_slice %12 {offsets = [0, 6], sizes = [32, 4], strides = [1, 1]} : vector<32x10xf32> to vector<32x4xf32>
    %46 = vector.extract_strided_slice %0 {offsets = [8, 336], sizes = [1, 4], strides = [1, 1]} : vector<9x340xf32> to vector<1x4xf32>
    %47 = vector.broadcast %46 : vector<1x4xf32> to vector<32x4xf32>
    %48 = arith.mulf %45, %47 : vector<32x4xf32>
    %49 = tpu.concatenate %16, %20, %24, %28, %32, %36, %40, %44, %48 in 0 : vector<32x4xf32>, vector<32x4xf32>, vector<32x4xf32>, vector<32x4xf32>, vector<32x4xf32>, vector<32x4xf32>, vector<32x4xf32>, vector<32x4xf32>, vector<32x4xf32> -> vector<288x4xf32>
    %c3_10 = arith.constant 3 : index
    %c0_11 = arith.constant 0 : index
    %c0_12 = arith.constant 0 : index
    %50 = vector.load %arg7[%c3_10, %c0_11, %c0_12] : memref<4x32x288xf32, #tpu.memory_space<vmem>>, vector<1x32x288xf32>
    %51 = vector.shape_cast %50 : vector<1x32x288xf32> to vector<32x288xf32>
    %cst_13 = arith.constant dense<0.000000e+00> : vector<32x4xf32>
    %52 = tpu.matmul %51, %49, %cst_13 {dimension_numbers = #tpu.dot_dimension_numbers<[1], [0], [0], [1], [0, 0, 1, 1], [], []>} : vector<32x288xf32>, vector<288x4xf32>, vector<32x4xf32> -> vector<32x4xf32>
    %53 = vector.extract_strided_slice %1 {offsets = [3, 0, 1], sizes = [1, 32, 1], strides = [1, 1, 1]} : vector<4x32x2xf32> to vector<1x32x1xf32>
    %54 = vector.shape_cast %53 : vector<1x32x1xf32> to vector<32x1xf32>
    %55 = vector.broadcast %54 : vector<32x1xf32> to vector<32x4xf32>
    %56 = arith.addf %52, %55 : vector<32x4xf32>
    %c0_14 = arith.constant 0 : index
    %c0_15 = arith.constant 0 : index
    %c336 = arith.constant 336 : index
    %57 = vector.load %arg12[%c0_14, %c0_15, %c336] : memref<1x32x384xf32, #tpu.memory_space<vmem>>, vector<1x32x4xf32>
    %58 = vector.shape_cast %57 : vector<1x32x4xf32> to vector<32x4xf32>
    %59 = vector.shape_cast %56 : vector<32x4xf32> to vector<1x32x4xf32>
    tpu.vector_store %arg12[%c0_14, %c0_15, %c336], %59 {strides = array<i32>} : memref<1x32x384xf32, #tpu.memory_space<vmem>>, vector<1x32x4xf32>,
    %60 = vector.extract_strided_slice %56 {offsets = [0, 0], sizes = [32, 1], strides = [1, 1]} : vector<32x4xf32> to vector<32x1xf32>
    %c0_16 = arith.constant 0 : index
    %c0_17 = arith.constant 0 : index
    %c340 = arith.constant 340 : index
    %61 = vector.load %arg12[%c0_16, %c0_17, %c340] : memref<1x32x384xf32, #tpu.memory_space<vmem>>, vector<1x32x1xf32>
    %62 = vector.shape_cast %61 : vector<1x32x1xf32> to vector<32x1xf32>
    %63 = vector.shape_cast %60 : vector<32x1xf32> to vector<1x32x1xf32>
    tpu.vector_store %arg12[%c0_16, %c0_17, %c340], %63 {strides = array<i32>} : memref<1x32x384xf32, #tpu.memory_space<vmem>>, vector<1x32x1xf32>,
    %c0_18 = arith.constant 0 : index
    %c0_19 = arith.constant 0 : index
    %64 = vector.load %arg11[%c0_18, %c0_19] : memref<4x16xf32, #tpu.memory_space<vmem>>, vector<4x16xf32>
    %cst_20 = arith.constant dense<0.000000e+00> : vector<32x16xf32>
    %65 = tpu.matmul %10, %64, %cst_20 {dimension_numbers = #tpu.dot_dimension_numbers<[1], [0], [0], [1], [0, 0, 1, 1], [], []>} : vector<32x4xf32>, vector<4x16xf32>, vector<32x16xf32> -> vector<32x16xf32>
    %c2 = arith.constant 2 : index
    %c0_21 = arith.constant 0 : index
    %c0_22 = arith.constant 0 : index
    %66 = vector.load %arg5[%c2, %c0_21, %c0_22] : memref<4x32x128xf32, #tpu.memory_space<vmem>>, vector<1x32x64xf32>
    %67 = vector.shape_cast %66 : vector<1x32x64xf32> to vector<32x64xf32>
    %c0_23 = arith.constant 0 : index
    %c0_24 = arith.constant 0 : index
    %c0_25 = arith.constant 0 : index
    %68 = vector.load %arg3[%c0_23, %c0_24, %c0_25] : memref<1x64x16xf32, #tpu.memory_space<vmem>>, vector<1x64x16xf32>
    %69 = vector.shape_cast %68 : vector<1x64x16xf32> to vector<64x16xf32>
    %cst_26 = arith.constant dense<0.000000e+00> : vector<32x16xf32>
    %70 = tpu.matmul %67, %69, %cst_26 {dimension_numbers = #tpu.dot_dimension_numbers<[1], [0], [0], [1], [0, 0, 1, 1], [], []>} : vector<32x64xf32>, vector<64x16xf32>, vector<32x16xf32> -> vector<32x16xf32>
    %71 = vector.extract_strided_slice %1 {offsets = [2, 0, 0], sizes = [1, 32, 1], strides = [1, 1, 1]} : vector<4x32x2xf32> to vector<1x32x1xf32>
    %72 = vector.shape_cast %71 : vector<1x32x1xf32> to vector<32x1xf32>
    %73 = vector.broadcast %72 : vector<32x1xf32> to vector<32x16xf32>
    %74 = arith.addf %70, %73 : vector<32x16xf32>
    %75 = arith.addf %74, %65 : vector<32x16xf32>
    %cst_27 = arith.constant 0.000000e+00 : f32
    %76 = vector.broadcast %cst_27 : f32 to vector<32x5xf32>
    %77 = tpu.concatenate %76, %75, %76 in 1 : vector<32x5xf32>, vector<32x16xf32>, vector<32x5xf32> -> vector<32x26xf32>
    %78 = vector.extract_strided_slice %77 {offsets = [0, 0], sizes = [32, 16], strides = [1, 1]} : vector<32x26xf32> to vector<32x16xf32>
    %79 = vector.extract_strided_slice %0 {offsets = [0, 320], sizes = [1, 16], strides = [1, 1]} : vector<9x340xf32> to vector<1x16xf32>
    %80 = vector.broadcast %79 : vector<1x16xf32> to vector<32x16xf32>
    %81 = arith.mulf %78, %80 : vector<32x16xf32>
    %82 = vector.extract_strided_slice %77 {offsets = [0, 1], sizes = [32, 16], strides = [1, 1]} : vector<32x26xf32> to vector<32x16xf32>
    %83 = vector.extract_strided_slice %0 {offsets = [1, 320], sizes = [1, 16], strides = [1, 1]} : vector<9x340xf32> to vector<1x16xf32>
    %84 = vector.broadcast %83 : vector<1x16xf32> to vector<32x16xf32>
    %85 = arith.mulf %82, %84 : vector<32x16xf32>
    %86 = vector.extract_strided_slice %77 {offsets = [0, 2], sizes = [32, 16], strides = [1, 1]} : vector<32x26xf32> to vector<32x16xf32>
    %87 = vector.extract_strided_slice %0 {offsets = [2, 320], sizes = [1, 16], strides = [1, 1]} : vector<9x340xf32> to vector<1x16xf32>
    %88 = vector.broadcast %87 : vector<1x16xf32> to vector<32x16xf32>
    %89 = arith.mulf %86, %88 : vector<32x16xf32>
    %90 = vector.extract_strided_slice %77 {offsets = [0, 4], sizes = [32, 16], strides = [1, 1]} : vector<32x26xf32> to vector<32x16xf32>
    %91 = vector.extract_strided_slice %0 {offsets = [3, 320], sizes = [1, 16], strides = [1, 1]} : vector<9x340xf32> to vector<1x16xf32>
    %92 = vector.broadcast %91 : vector<1x16xf32> to vector<32x16xf32>
    %93 = arith.mulf %90, %92 : vector<32x16xf32>
    %94 = vector.extract_strided_slice %77 {offsets = [0, 5], sizes = [32, 16], strides = [1, 1]} : vector<32x26xf32> to vector<32x16xf32>
    %95 = vector.extract_strided_slice %0 {offsets = [4, 320], sizes = [1, 16], strides = [1, 1]} : vector<9x340xf32> to vector<1x16xf32>
    %96 = vector.broadcast %95 : vector<1x16xf32> to vector<32x16xf32>
    %97 = arith.mulf %94, %96 : vector<32x16xf32>
    %98 = vector.extract_strided_slice %77 {offsets = [0, 6], sizes = [32, 16], strides = [1, 1]} : vector<32x26xf32> to vector<32x16xf32>
    %99 = vector.extract_strided_slice %0 {offsets = [5, 320], sizes = [1, 16], strides = [1, 1]} : vector<9x340xf32> to vector<1x16xf32>
    %100 = vector.broadcast %99 : vector<1x16xf32> to vector<32x16xf32>
    %101 = arith.mulf %98, %100 : vector<32x16xf32>
    %102 = vector.extract_strided_slice %77 {offsets = [0, 8], sizes = [32, 16], strides = [1, 1]} : vector<32x26xf32> to vector<32x16xf32>
    %103 = vector.extract_strided_slice %0 {offsets = [6, 320], sizes = [1, 16], strides = [1, 1]} : vector<9x340xf32> to vector<1x16xf32>
    %104 = vector.broadcast %103 : vector<1x16xf32> to vector<32x16xf32>
    %105 = arith.mulf %102, %104 : vector<32x16xf32>
    %106 = vector.extract_strided_slice %77 {offsets = [0, 9], sizes = [32, 16], strides = [1, 1]} : vector<32x26xf32> to vector<32x16xf32>
    %107 = vector.extract_strided_slice %0 {offsets = [7, 320], sizes = [1, 16], strides = [1, 1]} : vector<9x340xf32> to vector<1x16xf32>
    %108 = vector.broadcast %107 : vector<1x16xf32> to vector<32x16xf32>
    %109 = arith.mulf %106, %108 : vector<32x16xf32>
    %110 = vector.extract_strided_slice %77 {offsets = [0, 10], sizes = [32, 16], strides = [1, 1]} : vector<32x26xf32> to vector<32x16xf32>
    %111 = vector.extract_strided_slice %0 {offsets = [8, 320], sizes = [1, 16], strides = [1, 1]} : vector<9x340xf32> to vector<1x16xf32>
    %112 = vector.broadcast %111 : vector<1x16xf32> to vector<32x16xf32>
    %113 = arith.mulf %110, %112 : vector<32x16xf32>
    %114 = tpu.concatenate %81, %85, %89, %93, %97, %101, %105, %109, %113 in 0 : vector<32x16xf32>, vector<32x16xf32>, vector<32x16xf32>, vector<32x16xf32>, vector<32x16xf32>, vector<32x16xf32>, vector<32x16xf32>, vector<32x16xf32>, vector<32x16xf32> -> vector<288x16xf32>
    %c2_28 = arith.constant 2 : index
    %c0_29 = arith.constant 0 : index
    %c0_30 = arith.constant 0 : index
    %115 = vector.load %arg7[%c2_28, %c0_29, %c0_30] : memref<4x32x288xf32, #tpu.memory_space<vmem>>, vector<1x32x288xf32>
    %116 = vector.shape_cast %115 : vector<1x32x288xf32> to vector<32x288xf32>
    %cst_31 = arith.constant dense<0.000000e+00> : vector<32x16xf32>
    %117 = tpu.matmul %116, %114, %cst_31 {dimension_numbers = #tpu.dot_dimension_numbers<[1], [0], [0], [1], [0, 0, 1, 1], [], []>} : vector<32x288xf32>, vector<288x16xf32>, vector<32x16xf32> -> vector<32x16xf32>
    %118 = vector.extract_strided_slice %1 {offsets = [2, 0, 1], sizes = [1, 32, 1], strides = [1, 1, 1]} : vector<4x32x2xf32> to vector<1x32x1xf32>
    %119 = vector.shape_cast %118 : vector<1x32x1xf32> to vector<32x1xf32>
    %120 = vector.broadcast %119 : vector<32x1xf32> to vector<32x16xf32>
    %121 = arith.addf %117, %120 : vector<32x16xf32>
    %c0_32 = arith.constant 0 : index
    %c0_33 = arith.constant 0 : index
    %c320 = arith.constant 320 : index
    %122 = vector.load %arg12[%c0_32, %c0_33, %c320] : memref<1x32x384xf32, #tpu.memory_space<vmem>>, vector<1x32x16xf32>
    %123 = vector.shape_cast %122 : vector<1x32x16xf32> to vector<32x16xf32>
    %124 = vector.shape_cast %121 : vector<32x16xf32> to vector<1x32x16xf32>
    tpu.vector_store %arg12[%c0_32, %c0_33, %c320], %124 {strides = array<i32>} : memref<1x32x384xf32, #tpu.memory_space<vmem>>, vector<1x32x16xf32>,
    %c0_34 = arith.constant 0 : index
    %c0_35 = arith.constant 0 : index
    %125 = vector.load %arg10[%c0_34, %c0_35] : memref<16x64xf32, #tpu.memory_space<vmem>>, vector<16x64xf32>
    %cst_36 = arith.constant dense<0.000000e+00> : vector<32x64xf32>
    %126 = tpu.matmul %75, %125, %cst_36 {dimension_numbers = #tpu.dot_dimension_numbers<[1], [0], [0], [1], [0, 0, 1, 1], [], []>} : vector<32x16xf32>, vector<16x64xf32>, vector<32x64xf32> -> vector<32x64xf32>
    %c1 = arith.constant 1 : index
    %c0_37 = arith.constant 0 : index
    %c0_38 = arith.constant 0 : index
    %127 = vector.load %arg5[%c1, %c0_37, %c0_38] : memref<4x32x128xf32, #tpu.memory_space<vmem>>, vector<1x32x32xf32>
    %128 = vector.shape_cast %127 : vector<1x32x32xf32> to vector<32x32xf32>
    %c0_39 = arith.constant 0 : index
    %c0_40 = arith.constant 0 : index
    %c0_41 = arith.constant 0 : index
    %129 = vector.load %arg2[%c0_39, %c0_40, %c0_41] : memref<1x32x64xf32, #tpu.memory_space<vmem>>, vector<1x32x64xf32>
    %130 = vector.shape_cast %129 : vector<1x32x64xf32> to vector<32x64xf32>
    %cst_42 = arith.constant dense<0.000000e+00> : vector<32x64xf32>
    %131 = tpu.matmul %128, %130, %cst_42 {dimension_numbers = #tpu.dot_dimension_numbers<[1], [0], [0], [1], [0, 0, 1, 1], [], []>} : vector<32x32xf32>, vector<32x64xf32>, vector<32x64xf32> -> vector<32x64xf32>
    %132 = vector.extract_strided_slice %1 {offsets = [1, 0, 0], sizes = [1, 32, 1], strides = [1, 1, 1]} : vector<4x32x2xf32> to vector<1x32x1xf32>
    %133 = vector.shape_cast %132 : vector<1x32x1xf32> to vector<32x1xf32>
    %134 = vector.broadcast %133 : vector<32x1xf32> to vector<32x64xf32>
    %135 = arith.addf %131, %134 : vector<32x64xf32>
    %136 = arith.addf %135, %126 : vector<32x64xf32>
    %cst_43 = arith.constant 0.000000e+00 : f32
    %137 = vector.broadcast %cst_43 : f32 to vector<32x9xf32>
    %138 = tpu.concatenate %137, %136, %137 in 1 : vector<32x9xf32>, vector<32x64xf32>, vector<32x9xf32> -> vector<32x82xf32>
    %139 = vector.extract_strided_slice %138 {offsets = [0, 0], sizes = [32, 64], strides = [1, 1]} : vector<32x82xf32> to vector<32x64xf32>
    %140 = vector.extract_strided_slice %0 {offsets = [0, 256], sizes = [1, 64], strides = [1, 1]} : vector<9x340xf32> to vector<1x64xf32>
    %141 = vector.broadcast %140 : vector<1x64xf32> to vector<32x64xf32>
    %142 = arith.mulf %139, %141 : vector<32x64xf32>
    %143 = vector.extract_strided_slice %138 {offsets = [0, 1], sizes = [32, 64], strides = [1, 1]} : vector<32x82xf32> to vector<32x64xf32>
    %144 = vector.extract_strided_slice %0 {offsets = [1, 256], sizes = [1, 64], strides = [1, 1]} : vector<9x340xf32> to vector<1x64xf32>
    %145 = vector.broadcast %144 : vector<1x64xf32> to vector<32x64xf32>
    %146 = arith.mulf %143, %145 : vector<32x64xf32>
    %147 = vector.extract_strided_slice %138 {offsets = [0, 2], sizes = [32, 64], strides = [1, 1]} : vector<32x82xf32> to vector<32x64xf32>
    %148 = vector.extract_strided_slice %0 {offsets = [2, 256], sizes = [1, 64], strides = [1, 1]} : vector<9x340xf32> to vector<1x64xf32>
    %149 = vector.broadcast %148 : vector<1x64xf32> to vector<32x64xf32>
    %150 = arith.mulf %147, %149 : vector<32x64xf32>
    %151 = vector.extract_strided_slice %138 {offsets = [0, 8], sizes = [32, 64], strides = [1, 1]} : vector<32x82xf32> to vector<32x64xf32>
    %152 = vector.extract_strided_slice %0 {offsets = [3, 256], sizes = [1, 64], strides = [1, 1]} : vector<9x340xf32> to vector<1x64xf32>
    %153 = vector.broadcast %152 : vector<1x64xf32> to vector<32x64xf32>
    %154 = arith.mulf %151, %153 : vector<32x64xf32>
    %155 = vector.extract_strided_slice %138 {offsets = [0, 9], sizes = [32, 64], strides = [1, 1]} : vector<32x82xf32> to vector<32x64xf32>
    %156 = vector.extract_strided_slice %0 {offsets = [4, 256], sizes = [1, 64], strides = [1, 1]} : vector<9x340xf32> to vector<1x64xf32>
    %157 = vector.broadcast %156 : vector<1x64xf32> to vector<32x64xf32>
    %158 = arith.mulf %155, %157 : vector<32x64xf32>
    %159 = vector.extract_strided_slice %138 {offsets = [0, 10], sizes = [32, 64], strides = [1, 1]} : vector<32x82xf32> to vector<32x64xf32>
    %160 = vector.extract_strided_slice %0 {offsets = [5, 256], sizes = [1, 64], strides = [1, 1]} : vector<9x340xf32> to vector<1x64xf32>
    %161 = vector.broadcast %160 : vector<1x64xf32> to vector<32x64xf32>
    %162 = arith.mulf %159, %161 : vector<32x64xf32>
    %163 = vector.extract_strided_slice %138 {offsets = [0, 16], sizes = [32, 64], strides = [1, 1]} : vector<32x82xf32> to vector<32x64xf32>
    %164 = vector.extract_strided_slice %0 {offsets = [6, 256], sizes = [1, 64], strides = [1, 1]} : vector<9x340xf32> to vector<1x64xf32>
    %165 = vector.broadcast %164 : vector<1x64xf32> to vector<32x64xf32>
    %166 = arith.mulf %163, %165 : vector<32x64xf32>
    %167 = vector.extract_strided_slice %138 {offsets = [0, 17], sizes = [32, 64], strides = [1, 1]} : vector<32x82xf32> to vector<32x64xf32>
    %168 = vector.extract_strided_slice %0 {offsets = [7, 256], sizes = [1, 64], strides = [1, 1]} : vector<9x340xf32> to vector<1x64xf32>
    %169 = vector.broadcast %168 : vector<1x64xf32> to vector<32x64xf32>
    %170 = arith.mulf %167, %169 : vector<32x64xf32>
    %171 = vector.extract_strided_slice %138 {offsets = [0, 18], sizes = [32, 64], strides = [1, 1]} : vector<32x82xf32> to vector<32x64xf32>
    %172 = vector.extract_strided_slice %0 {offsets = [8, 256], sizes = [1, 64], strides = [1, 1]} : vector<9x340xf32> to vector<1x64xf32>
    %173 = vector.broadcast %172 : vector<1x64xf32> to vector<32x64xf32>
    %174 = arith.mulf %171, %173 : vector<32x64xf32>
    %175 = tpu.concatenate %142, %146, %150, %154, %158, %162, %166, %170, %174 in 0 : vector<32x64xf32>, vector<32x64xf32>, vector<32x64xf32>, vector<32x64xf32>, vector<32x64xf32>, vector<32x64xf32>, vector<32x64xf32>, vector<32x64xf32>, vector<32x64xf32> -> vector<288x64xf32>
    %c1_44 = arith.constant 1 : index
    %c0_45 = arith.constant 0 : index
    %c0_46 = arith.constant 0 : index
    %176 = vector.load %arg7[%c1_44, %c0_45, %c0_46] : memref<4x32x288xf32, #tpu.memory_space<vmem>>, vector<1x32x288xf32>
    %177 = vector.shape_cast %176 : vector<1x32x288xf32> to vector<32x288xf32>
    %cst_47 = arith.constant dense<0.000000e+00> : vector<32x64xf32>
    %178 = tpu.matmul %177, %175, %cst_47 {dimension_numbers = #tpu.dot_dimension_numbers<[1], [0], [0], [1], [0, 0, 1, 1], [], []>} : vector<32x288xf32>, vector<288x64xf32>, vector<32x64xf32> -> vector<32x64xf32>
    %179 = vector.extract_strided_slice %1 {offsets = [1, 0, 1], sizes = [1, 32, 1], strides = [1, 1, 1]} : vector<4x32x2xf32> to vector<1x32x1xf32>
    %180 = vector.shape_cast %179 : vector<1x32x1xf32> to vector<32x1xf32>
    %181 = vector.broadcast %180 : vector<32x1xf32> to vector<32x64xf32>
    %182 = arith.addf %178, %181 : vector<32x64xf32>
    %c0_48 = arith.constant 0 : index
    %c0_49 = arith.constant 0 : index
    %c256 = arith.constant 256 : index
    %183 = vector.load %arg12[%c0_48, %c0_49, %c256] : memref<1x32x384xf32, #tpu.memory_space<vmem>>, vector<1x32x64xf32>
    %184 = vector.shape_cast %183 : vector<1x32x64xf32> to vector<32x64xf32>
    %185 = vector.shape_cast %182 : vector<32x64xf32> to vector<1x32x64xf32>
    tpu.vector_store %arg12[%c0_48, %c0_49, %c256], %185 {strides = array<i32>} : memref<1x32x384xf32, #tpu.memory_space<vmem>>, vector<1x32x64xf32>,
    %c0_50 = arith.constant 0 : index
    %c0_51 = arith.constant 0 : index
    %186 = vector.load %arg9[%c0_50, %c0_51] : memref<64x256xf32, #tpu.memory_space<vmem>>, vector<64x256xf32>
    %cst_52 = arith.constant dense<0.000000e+00> : vector<32x256xf32>
    %187 = tpu.matmul %136, %186, %cst_52 {dimension_numbers = #tpu.dot_dimension_numbers<[1], [0], [0], [1], [0, 0, 1, 1], [], []>} : vector<32x64xf32>, vector<64x256xf32>, vector<32x256xf32> -> vector<32x256xf32>
    %c0_53 = arith.constant 0 : index
    %c0_54 = arith.constant 0 : index
    %c0_55 = arith.constant 0 : index
    %188 = vector.load %arg5[%c0_53, %c0_54, %c0_55] : memref<4x32x128xf32, #tpu.memory_space<vmem>>, vector<1x32x16xf32>
    %189 = vector.shape_cast %188 : vector<1x32x16xf32> to vector<32x16xf32>
    %c0_56 = arith.constant 0 : index
    %c0_57 = arith.constant 0 : index
    %c0_58 = arith.constant 0 : index
    %190 = vector.load %arg1[%c0_56, %c0_57, %c0_58] : memref<1x16x256xf32, #tpu.memory_space<vmem>>, vector<1x16x256xf32>
    %191 = vector.shape_cast %190 : vector<1x16x256xf32> to vector<16x256xf32>
    %cst_59 = arith.constant dense<0.000000e+00> : vector<32x256xf32>
    %192 = tpu.matmul %189, %191, %cst_59 {dimension_numbers = #tpu.dot_dimension_numbers<[1], [0], [0], [1], [0, 0, 1, 1], [], []>} : vector<32x16xf32>, vector<16x256xf32>, vector<32x256xf32> -> vector<32x256xf32>
    %193 = vector.extract_strided_slice %1 {offsets = [0, 0, 0], sizes = [1, 32, 1], strides = [1, 1, 1]} : vector<4x32x2xf32> to vector<1x32x1xf32>
    %194 = vector.shape_cast %193 : vector<1x32x1xf32> to vector<32x1xf32>
    %195 = vector.broadcast %194 : vector<32x1xf32> to vector<32x256xf32>
    %196 = arith.addf %192, %195 : vector<32x256xf32>
    %197 = arith.addf %196, %187 : vector<32x256xf32>
    %cst_60 = arith.constant 0.000000e+00 : f32
    %198 = vector.broadcast %cst_60 : f32 to vector<32x17xf32>
    %199 = tpu.concatenate %198, %197, %198 in 1 : vector<32x17xf32>, vector<32x256xf32>, vector<32x17xf32> -> vector<32x290xf32>
    %200 = vector.extract_strided_slice %199 {offsets = [0, 0], sizes = [32, 256], strides = [1, 1]} : vector<32x290xf32> to vector<32x256xf32>
    %201 = vector.extract_strided_slice %0 {offsets = [0, 0], sizes = [1, 256], strides = [1, 1]} : vector<9x340xf32> to vector<1x256xf32>
    %202 = vector.broadcast %201 : vector<1x256xf32> to vector<32x256xf32>
    %203 = arith.mulf %200, %202 : vector<32x256xf32>
    %204 = vector.extract_strided_slice %199 {offsets = [0, 1], sizes = [32, 256], strides = [1, 1]} : vector<32x290xf32> to vector<32x256xf32>
    %205 = vector.extract_strided_slice %0 {offsets = [1, 0], sizes = [1, 256], strides = [1, 1]} : vector<9x340xf32> to vector<1x256xf32>
    %206 = vector.broadcast %205 : vector<1x256xf32> to vector<32x256xf32>
    %207 = arith.mulf %204, %206 : vector<32x256xf32>
    %208 = vector.extract_strided_slice %199 {offsets = [0, 2], sizes = [32, 256], strides = [1, 1]} : vector<32x290xf32> to vector<32x256xf32>
    %209 = vector.extract_strided_slice %0 {offsets = [2, 0], sizes = [1, 256], strides = [1, 1]} : vector<9x340xf32> to vector<1x256xf32>
    %210 = vector.broadcast %209 : vector<1x256xf32> to vector<32x256xf32>
    %211 = arith.mulf %208, %210 : vector<32x256xf32>
    %212 = vector.extract_strided_slice %199 {offsets = [0, 16], sizes = [32, 256], strides = [1, 1]} : vector<32x290xf32> to vector<32x256xf32>
    %213 = vector.extract_strided_slice %0 {offsets = [3, 0], sizes = [1, 256], strides = [1, 1]} : vector<9x340xf32> to vector<1x256xf32>
    %214 = vector.broadcast %213 : vector<1x256xf32> to vector<32x256xf32>
    %215 = arith.mulf %212, %214 : vector<32x256xf32>
    %216 = vector.extract_strided_slice %199 {offsets = [0, 17], sizes = [32, 256], strides = [1, 1]} : vector<32x290xf32> to vector<32x256xf32>
    %217 = vector.extract_strided_slice %0 {offsets = [4, 0], sizes = [1, 256], strides = [1, 1]} : vector<9x340xf32> to vector<1x256xf32>
    %218 = vector.broadcast %217 : vector<1x256xf32> to vector<32x256xf32>
    %219 = arith.mulf %216, %218 : vector<32x256xf32>
    %220 = vector.extract_strided_slice %199 {offsets = [0, 18], sizes = [32, 256], strides = [1, 1]} : vector<32x290xf32> to vector<32x256xf32>
    %221 = vector.extract_strided_slice %0 {offsets = [5, 0], sizes = [1, 256], strides = [1, 1]} : vector<9x340xf32> to vector<1x256xf32>
    %222 = vector.broadcast %221 : vector<1x256xf32> to vector<32x256xf32>
    %223 = arith.mulf %220, %222 : vector<32x256xf32>
    %224 = vector.extract_strided_slice %199 {offsets = [0, 32], sizes = [32, 256], strides = [1, 1]} : vector<32x290xf32> to vector<32x256xf32>
    %225 = vector.extract_strided_slice %0 {offsets = [6, 0], sizes = [1, 256], strides = [1, 1]} : vector<9x340xf32> to vector<1x256xf32>
    %226 = vector.broadcast %225 : vector<1x256xf32> to vector<32x256xf32>
    %227 = arith.mulf %224, %226 : vector<32x256xf32>
    %228 = vector.extract_strided_slice %199 {offsets = [0, 33], sizes = [32, 256], strides = [1, 1]} : vector<32x290xf32> to vector<32x256xf32>
    %229 = vector.extract_strided_slice %0 {offsets = [7, 0], sizes = [1, 256], strides = [1, 1]} : vector<9x340xf32> to vector<1x256xf32>
    %230 = vector.broadcast %229 : vector<1x256xf32> to vector<32x256xf32>
    %231 = arith.mulf %228, %230 : vector<32x256xf32>
    %232 = vector.extract_strided_slice %199 {offsets = [0, 34], sizes = [32, 256], strides = [1, 1]} : vector<32x290xf32> to vector<32x256xf32>
    %233 = vector.extract_strided_slice %0 {offsets = [8, 0], sizes = [1, 256], strides = [1, 1]} : vector<9x340xf32> to vector<1x256xf32>
    %234 = vector.broadcast %233 : vector<1x256xf32> to vector<32x256xf32>
    %235 = arith.mulf %232, %234 : vector<32x256xf32>
    %236 = tpu.concatenate %203, %207, %211, %215, %219, %223, %227, %231, %235 in 0 : vector<32x256xf32>, vector<32x256xf32>, vector<32x256xf32>, vector<32x256xf32>, vector<32x256xf32>, vector<32x256xf32>, vector<32x256xf32>, vector<32x256xf32>, vector<32x256xf32> -> vector<288x256xf32>
    %c0_61 = arith.constant 0 : index
    %c0_62 = arith.constant 0 : index
    %c0_63 = arith.constant 0 : index
    %237 = vector.load %arg7[%c0_61, %c0_62, %c0_63] : memref<4x32x288xf32, #tpu.memory_space<vmem>>, vector<1x32x288xf32>
    %238 = vector.shape_cast %237 : vector<1x32x288xf32> to vector<32x288xf32>
    %cst_64 = arith.constant dense<0.000000e+00> : vector<32x256xf32>
    %239 = tpu.matmul %238, %236, %cst_64 {dimension_numbers = #tpu.dot_dimension_numbers<[1], [0], [0], [1], [0, 0, 1, 1], [], []>} : vector<32x288xf32>, vector<288x256xf32>, vector<32x256xf32> -> vector<32x256xf32>
    %240 = vector.extract_strided_slice %1 {offsets = [0, 0, 1], sizes = [1, 32, 1], strides = [1, 1, 1]} : vector<4x32x2xf32> to vector<1x32x1xf32>
    %241 = vector.shape_cast %240 : vector<1x32x1xf32> to vector<32x1xf32>
    %242 = vector.broadcast %241 : vector<32x1xf32> to vector<32x256xf32>
    %243 = arith.addf %239, %242 : vector<32x256xf32>
    %c0_65 = arith.constant 0 : index
    %c0_66 = arith.constant 0 : index
    %c0_67 = arith.constant 0 : index
    %244 = vector.load %arg12[%c0_65, %c0_66, %c0_67] : memref<1x32x384xf32, #tpu.memory_space<vmem>>, vector<1x32x256xf32>
    %245 = vector.shape_cast %244 : vector<1x32x256xf32> to vector<32x256xf32>
    %246 = vector.shape_cast %243 : vector<32x256xf32> to vector<1x32x256xf32>
    tpu.vector_store %arg12[%c0_65, %c0_66, %c0_67], %246 {strides = array<i32>} : memref<1x32x384xf32, #tpu.memory_space<vmem>>, vector<1x32x256xf32>,
    return
  }
  func.func @transform_0(%arg0: i32) -> (i32, i32, i32) {
    %c0_i32 = arith.constant 0 : i32
    %c0_i32_0 = arith.constant 0 : i32
    %c0_i32_1 = arith.constant 0 : i32
    return %arg0, %c0_i32, %c0_i32_0 : i32, i32, i32
  }
  func.func @transform_1(%arg0: i32) -> (i32, i32, i32) {
    %c0_i32 = arith.constant 0 : i32
    %c0_i32_0 = arith.constant 0 : i32
    %c0_i32_1 = arith.constant 0 : i32
    return %arg0, %c0_i32, %c0_i32_0 : i32, i32, i32
  }
  func.func @transform_2(%arg0: i32) -> (i32, i32, i32) {
    %c0_i32 = arith.constant 0 : i32
    %c0_i32_0 = arith.constant 0 : i32
    %c0_i32_1 = arith.constant 0 : i32
    return %arg0, %c0_i32, %c0_i32_0 : i32, i32, i32
  }
  func.func @transform_3(%arg0: i32) -> (i32, i32, i32) {
    %c0_i32 = arith.constant 0 : i32
    %c0_i32_0 = arith.constant 0 : i32
    %c0_i32_1 = arith.constant 0 : i32
    return %arg0, %c0_i32, %c0_i32_0 : i32, i32, i32
  }
  func.func @transform_4(%arg0: i32) -> (i32, i32, i32) {
    %c0_i32 = arith.constant 0 : i32
    %c0_i32_0 = arith.constant 0 : i32
    %c0_i32_1 = arith.constant 0 : i32
    %c0_i32_2 = arith.constant 0 : i32
    return %c0_i32, %c0_i32_0, %c0_i32_1 : i32, i32, i32
  }
  func.func @transform_5(%arg0: i32) -> (i32, i32, i32) {
    %c0_i32 = arith.constant 0 : i32
    %c0_i32_0 = arith.constant 0 : i32
    %c0_i32_1 = arith.constant 0 : i32
    %c0_i32_2 = arith.constant 0 : i32
    return %c0_i32, %c0_i32_0, %c0_i32_1 : i32, i32, i32
  }
  func.func @transform_6(%arg0: i32) -> (i32, i32, i32) {
    %c0_i32 = arith.constant 0 : i32
    %c0_i32_0 = arith.constant 0 : i32
    %c0_i32_1 = arith.constant 0 : i32
    %c0_i32_2 = arith.constant 0 : i32
    return %c0_i32, %c0_i32_0, %c0_i32_1 : i32, i32, i32
  }
  func.func @transform_7(%arg0: i32) -> (i32, i32) {
    %c0_i32 = arith.constant 0 : i32
    %c0_i32_0 = arith.constant 0 : i32
    %c0_i32_1 = arith.constant 0 : i32
    return %c0_i32, %c0_i32_0 : i32, i32
  }
  func.func @transform_8(%arg0: i32) -> (i32, i32) {
    %c0_i32 = arith.constant 0 : i32
    %c0_i32_0 = arith.constant 0 : i32
    %c0_i32_1 = arith.constant 0 : i32
    return %c0_i32, %c0_i32_0 : i32, i32
  }
  func.func @transform_9(%arg0: i32) -> (i32, i32) {
    %c0_i32 = arith.constant 0 : i32
    %c0_i32_0 = arith.constant 0 : i32
    %c0_i32_1 = arith.constant 0 : i32
    return %c0_i32, %c0_i32_0 : i32, i32
  }
  func.func @transform_10(%arg0: i32) -> (i32, i32) {
    %c0_i32 = arith.constant 0 : i32
    %c0_i32_0 = arith.constant 0 : i32
    %c0_i32_1 = arith.constant 0 : i32
    return %c0_i32, %c0_i32_0 : i32, i32
  }
  func.func @transform_11(%arg0: i32) -> (i32, i32, i32) {
    %c0_i32 = arith.constant 0 : i32
    %c0_i32_0 = arith.constant 0 : i32
    %c0_i32_1 = arith.constant 0 : i32
    return %arg0, %c0_i32, %c0_i32_0 : i32, i32, i32
  }
}

</mosaic_0001>

<llo_original>
// kernel: fpn_forward.1
$region0: #{fpn_forward.1}
  #allocation0 [shape = 'u32[]', space=smem, size = 0x4, offset = 0x4, fixed_abs, tag = 'smem constant byte address 0x4 - core index']
  #allocation1 [shape = 'u32[144,128]{1,0:T(1,128)}', space=vmem, size = 0x12000, scoped, tag = 'internal scratch']
  %s0 = inlined_call_operand.vmem [shape: f32[2,16,256], index: 0, kind: input, shape index: {}]
  %s1 = inlined_call_operand.vmem [shape: f32[2,32,64], index: 1, kind: input, shape index: {}]
  %s2 = inlined_call_operand.vmem [shape: f32[2,64,16], index: 2, kind: input, shape index: {}]
  %s3 = inlined_call_operand.vmem [shape: f32[2,128,4], index: 3, kind: input, shape index: {}]
  %s4 = inlined_call_operand.vmem [shape: f32[4,32,128], index: 4, kind: input, shape index: {}]
  %s5 = inlined_call_operand.vmem [shape: f32[4,32,2], index: 5, kind: input, shape index: {}]
  %s6 = inlined_call_operand.vmem [shape: f32[4,32,288], index: 6, kind: input, shape index: {}]
  %s7 = inlined_call_operand.vmem [shape: f32[9,340], index: 7, kind: input, shape index: {}]
  %s8 = inlined_call_operand.vmem [shape: f32[64,256], index: 8, kind: input, shape index: {}]
  %s9 = inlined_call_operand.vmem [shape: f32[16,64], index: 9, kind: input, shape index: {}]
  %s10 = inlined_call_operand.vmem [shape: f32[4,16], index: 10, kind: input, shape index: {}]
  %s11 = inlined_call_operand.vmem [shape: f32[2,32,384], index: 11, kind: output, shape index: {}]
  %s12 = sld [smem:[#allocation0]]
  $region77: #{fpn_forward.1} parent=0
    _
  %s14 = ssub.s32 1, %s12
  %s15 = scalar_select 0, %s14, %s12
  loop: start=0, step=1, limit=4
  $region2: #{fpn_forward.1} parent=0 // loop_pre_header
    _
  $region3: #{fpn_forward.1} parent=0 // loop_header
    %s17 = sphi 0, %s21
    %p18 = scmp.ge.s32.totalorder %s17, 4
    %s27 = sphi 0, %s29
    %s30 = sphi 0, %s27
    %s31 = sphi 0, %s30
    %s47 = sphi 0, %s31
    %s53 = sphi 0, %s55
    %s56 = sphi 0, %s53
    %s57 = sphi 0, %s56
    %s73 = sphi 0, %s57
    %s79 = sphi 0, %s81
    %s82 = sphi 0, %s79
    %s83 = sphi 0, %s82
    %s99 = sphi 0, %s83
    %s105 = sphi 0, %s107
    %s108 = sphi 0, %s105
    %s109 = sphi 0, %s108
    %s125 = sphi 0, %s109
    %s129 = sphi 0, %s129
    %s131 = sphi 0, %s129
    %s132 = sphi 0, %s131
    %s146 = sphi 0, %s132
    %s150 = sphi 0, %s150
    %s152 = sphi 0, %s150
    %s153 = sphi 0, %s152
    %s167 = sphi 0, %s153
    %s171 = sphi 0, %s171
    %s173 = sphi 0, %s171
    %s174 = sphi 0, %s173
    %s188 = sphi 0, %s174
    %s192 = sphi 0, %s192
    %s194 = sphi 0, %s192
    %s195 = sphi 0, %s194
    %s209 = sphi 0, %s195
    %s213 = sphi 0, %s213
    %s215 = sphi 0, %s213
    %s216 = sphi 0, %s215
    %s230 = sphi 0, %s216
    %s234 = sphi 0, %s234
    %s236 = sphi 0, %s234
    %s237 = sphi 0, %s236
    %s251 = sphi 0, %s237
    %s255 = sphi 0, %s255
    %s257 = sphi 0, %s255
    %s258 = sphi 0, %s257
    %s272 = sphi 0, %s258
    %s278 = sphi 0, %s280
    %s281 = sphi 0, %s278
    %s282 = sphi 0, %s281
    %s298 = sphi 0, %s282
  $region4: #{fpn_forward.1} parent=0 // loop_header_branch
    %20 = sbr.rel (%p18) target = $region8
  $region5: #{fpn_forward.1} parent=0 // loop_body
    %s22 = ssub.s32 %s17, 1
    %s23 = ssub.s32 %s17, 2
    %s24 = sadd.s32 %s17, 1
    %s25 = ssub.s32 %s17, %s24
    %p26 = scmp.eq.s32.totalorder %s25, 0
    %s28 = sadd.s32 %s27, 1
    %s29 = scalar_select %p26, %s27, %s28
    %p32 = pneg %p26
    %p33 = scmp.eq.s32.totalorder %s17, 1
    %p34 = por %p32, %p33
    %p35 = scmp.ne.s32.totalorder %s27, %s30
    %p36 = scmp.eq.s32.totalorder %s17, 0
    %p37 = por %p35, %p36
    %p38 = scmp.ne.s32.totalorder %s27, %s30
    %p39 = scmp.eq.s32.totalorder %s22, 1
    %p40 = por %p38, %p39
    %p41 = scmp.ne.s32.totalorder %s30, %s31
    %p42 = scmp.eq.s32.totalorder %s22, 0
    %p43 = por %p41, %p42
    %p44 = scmp.ne.s32.totalorder %s30, %s31
    %p45 = scmp.eq.s32.totalorder %s23, 1
    %p46 = por %p44, %p45
    %p48 = scmp.ne.s32.totalorder %s31, %s47
    %p49 = scmp.eq.s32.totalorder %s23, 0
    %p50 = por %p48, %p49
    %s51 = ssub.s32 %s17, %s24
    %p52 = scmp.eq.s32.totalorder %s51, 0
    %s54 = sadd.s32 %s53, 1
    %s55 = scalar_select %p52, %s53, %s54
    %p58 = pneg %p52
    %p59 = scmp.eq.s32.totalorder %s17, 1
    %p60 = por %p58, %p59
    %p61 = scmp.ne.s32.totalorder %s53, %s56
    %p62 = scmp.eq.s32.totalorder %s17, 0
    %p63 = por %p61, %p62
    %p64 = scmp.ne.s32.totalorder %s53, %s56
    %p65 = scmp.eq.s32.totalorder %s22, 1
    %p66 = por %p64, %p65
    %p67 = scmp.ne.s32.totalorder %s56, %s57
    %p68 = scmp.eq.s32.totalorder %s22, 0
    %p69 = por %p67, %p68
    %p70 = scmp.ne.s32.totalorder %s56, %s57
    %p71 = scmp.eq.s32.totalorder %s23, 1
    %p72 = por %p70, %p71
    %p74 = scmp.ne.s32.totalorder %s57, %s73
    %p75 = scmp.eq.s32.totalorder %s23, 0
    %p76 = por %p74, %p75
    %s77 = ssub.s32 %s17, %s24
    %p78 = scmp.eq.s32.totalorder %s77, 0
    %s80 = sadd.s32 %s79, 1
    %s81 = scalar_select %p78, %s79, %s80
    %p84 = pneg %p78
    %p85 = scmp.eq.s32.totalorder %s17, 1
    %p86 = por %p84, %p85
    %p87 = scmp.ne.s32.totalorder %s79, %s82
    %p88 = scmp.eq.s32.totalorder %s17, 0
    %p89 = por %p87, %p88
    %p90 = scmp.ne.s32.totalorder %s79, %s82
    %p91 = scmp.eq.s32.totalorder %s22, 1
    %p92 = por %p90, %p91
    %p93 = scmp.ne.s32.totalorder %s82, %s83
    %p94 = scmp.eq.s32.totalorder %s22, 0
    %p95 = por %p93, %p94
    %p96 = scmp.ne.s32.totalorder %s82, %s83
    %p97 = scmp.eq.s32.totalorder %s23, 1
    %p98 = por %p96, %p97
    %p100 = scmp.ne.s32.totalorder %s83, %s99
    %p101 = scmp.eq.s32.totalorder %s23, 0
    %p102 = por %p100, %p101
    %s103 = ssub.s32 %s17, %s24
    %p104 = scmp.eq.s32.totalorder %s103, 0
    %s106 = sadd.s32 %s105, 1
    %s107 = scalar_select %p104, %s105, %s106
    %p110 = pneg %p104
    %p111 = scmp.eq.s32.totalorder %s17, 1
    %p112 = por %p110, %p111
    %p113 = scmp.ne.s32.totalorder %s105, %s108
    %p114 = scmp.eq.s32.totalorder %s17, 0
    %p115 = por %p113, %p114
    %p116 = scmp.ne.s32.totalorder %s105, %s108
    %p117 = scmp.eq.s32.totalorder %s22, 1
    %p118 = por %p116, %p117
    %p119 = scmp.ne.s32.totalorder %s108, %s109
    %p120 = scmp.eq.s32.totalorder %s22, 0
    %p121 = por %p119, %p120
    %p122 = scmp.ne.s32.totalorder %s108, %s109
    %p123 = scmp.eq.s32.totalorder %s23, 1
    %p124 = por %p122, %p123
    %p126 = scmp.ne.s32.totalorder %s109, %s125
    %p127 = scmp.eq.s32.totalorder %s23, 0
    %p128 = por %p126, %p127
    %s130 = sadd.s32 %s129, 1
    %p133 = scmp.eq.s32.totalorder %s17, 1
    %p134 = scmp.ne.s32.totalorder %s129, %s131
    %p135 = scmp.eq.s32.totalorder %s17, 0
    %p136 = por %p134, %p135
    %p137 = scmp.ne.s32.totalorder %s129, %s131
    %p138 = scmp.eq.s32.totalorder %s22, 1
    %p139 = por %p137, %p138
    %p140 = scmp.ne.s32.totalorder %s131, %s132
    %p141 = scmp.eq.s32.totalorder %s22, 0
    %p142 = por %p140, %p141
    %p143 = scmp.ne.s32.totalorder %s131, %s132
    %p144 = scmp.eq.s32.totalorder %s23, 1
    %p145 = por %p143, %p144
    %p147 = scmp.ne.s32.totalorder %s132, %s146
    %p148 = scmp.eq.s32.totalorder %s23, 0
    %p149 = por %p147, %p148
    %s151 = sadd.s32 %s150, 1
    %p154 = scmp.eq.s32.totalorder %s17, 1
    %p155 = scmp.ne.s32.totalorder %s150, %s152
    %p156 = scmp.eq.s32.totalorder %s17, 0
    %p157 = por %p155, %p156
    %p158 = scmp.ne.s32.totalorder %s150, %s152
    %p159 = scmp.eq.s32.totalorder %s22, 1
    %p160 = por %p158, %p159
    %p161 = scmp.ne.s32.totalorder %s152, %s153
    %p162 = scmp.eq.s32.totalorder %s22, 0
    %p163 = por %p161, %p162
    %p164 = scmp.ne.s32.totalorder %s152, %s153
    %p165 = scmp.eq.s32.totalorder %s23, 1
    %p166 = por %p164, %p165
    %p168 = scmp.ne.s32.totalorder %s153, %s167
    %p169 = scmp.eq.s32.totalorder %s23, 0
    %p170 = por %p168, %p169
    %s172 = sadd.s32 %s171, 1
    %p175 = scmp.eq.s32.totalorder %s17, 1
    %p176 = scmp.ne.s32.totalorder %s171, %s173
    %p177 = scmp.eq.s32.totalorder %s17, 0
    %p178 = por %p176, %p177
    %p179 = scmp.ne.s32.totalorder %s171, %s173
    %p180 = scmp.eq.s32.totalorder %s22, 1
    %p181 = por %p179, %p180
    %p182 = scmp.ne.s32.totalorder %s173, %s174
    %p183 = scmp.eq.s32.totalorder %s22, 0
    %p184 = por %p182, %p183
    %p185 = scmp.ne.s32.totalorder %s173, %s174
    %p186 = scmp.eq.s32.totalorder %s23, 1
    %p187 = por %p185, %p186
    %p189 = scmp.ne.s32.totalorder %s174, %s188
    %p190 = scmp.eq.s32.totalorder %s23, 0
    %p191 = por %p189, %p190
    %s193 = sadd.s32 %s192, 1
    %p196 = scmp.eq.s32.totalorder %s17, 1
    %p197 = scmp.ne.s32.totalorder %s192, %s194
    %p198 = scmp.eq.s32.totalorder %s17, 0
    %p199 = por %p197, %p198
    %p200 = scmp.ne.s32.totalorder %s192, %s194
    %p201 = scmp.eq.s32.totalorder %s22, 1
    %p202 = por %p200, %p201
    %p203 = scmp.ne.s32.totalorder %s194, %s195
    %p204 = scmp.eq.s32.totalorder %s22, 0
    %p205 = por %p203, %p204
    %p206 = scmp.ne.s32.totalorder %s194, %s195
    %p207 = scmp.eq.s32.totalorder %s23, 1
    %p208 = por %p206, %p207
    %p210 = scmp.ne.s32.totalorder %s195, %s209
    %p211 = scmp.eq.s32.totalorder %s23, 0
    %p212 = por %p210, %p211
    %s214 = sadd.s32 %s213, 1
    %p217 = scmp.eq.s32.totalorder %s17, 1
    %p218 = scmp.ne.s32.totalorder %s213, %s215
    %p219 = scmp.eq.s32.totalorder %s17, 0
    %p220 = por %p218, %p219
    %p221 = scmp.ne.s32.totalorder %s213, %s215
    %p222 = scmp.eq.s32.totalorder %s22, 1
    %p223 = por %p221, %p222
    %p224 = scmp.ne.s32.totalorder %s215, %s216
    %p225 = scmp.eq.s32.totalorder %s22, 0
    %p226 = por %p224, %p225
    %p227 = scmp.ne.s32.totalorder %s215, %s216
    %p228 = scmp.eq.s32.totalorder %s23, 1
    %p229 = por %p227, %p228
    %p231 = scmp.ne.s32.totalorder %s216, %s230
    %p232 = scmp.eq.s32.totalorder %s23, 0
    %p233 = por %p231, %p232
    %s235 = sadd.s32 %s234, 1
    %p238 = scmp.eq.s32.totalorder %s17, 1
    %p239 = scmp.ne.s32.totalorder %s234, %s236
    %p240 = scmp.eq.s32.totalorder %s17, 0
    %p241 = por %p239, %p240
    %p242 = scmp.ne.s32.totalorder %s234, %s236
    %p243 = scmp.eq.s32.totalorder %s22, 1
    %p244 = por %p242, %p243
    %p245 = scmp.ne.s32.totalorder %s236, %s237
    %p246 = scmp.eq.s32.totalorder %s22, 0
    %p247 = por %p245, %p246
    %p248 = scmp.ne.s32.totalorder %s236, %s237
    %p249 = scmp.eq.s32.totalorder %s23, 1
    %p250 = por %p248, %p249
    %p252 = scmp.ne.s32.totalorder %s237, %s251
    %p253 = scmp.eq.s32.totalorder %s23, 0
    %p254 = por %p252, %p253
    %s256 = sadd.s32 %s255, 1
    %p259 = scmp.eq.s32.totalorder %s17, 1
    %p260 = scmp.ne.s32.totalorder %s255, %s257
    %p261 = scmp.eq.s32.totalorder %s17, 0
    %p262 = por %p260, %p261
    %p263 = scmp.ne.s32.totalorder %s255, %s257
    %p264 = scmp.eq.s32.totalorder %s22, 1
    %p265 = por %p263, %p264
    %p266 = scmp.ne.s32.totalorder %s257, %s258
    %p267 = scmp.eq.s32.totalorder %s22, 0
    %p268 = por %p266, %p267
    %p269 = scmp.ne.s32.totalorder %s257, %s258
    %p270 = scmp.eq.s32.totalorder %s23, 1
    %p271 = por %p269, %p270
    %p273 = scmp.ne.s32.totalorder %s258, %s272
    %p274 = scmp.eq.s32.totalorder %s23, 0
    %p275 = por %p273, %p274
    %s276 = ssub.s32 %s17, %s24
    %p277 = scmp.eq.s32.totalorder %s276, 0
    %s279 = sadd.s32 %s278, 1
    %s280 = scalar_select %p277, %s278, %s279
    %p283 = pneg %p277
    %p284 = scmp.eq.s32.totalorder %s17, 1
    %p285 = por %p283, %p284
    %p286 = scmp.ne.s32.totalorder %s278, %s281
    %p287 = scmp.eq.s32.totalorder %s17, 0
    %p288 = por %p286, %p287
    %p289 = scmp.ne.s32.totalorder %s278, %s281
    %p290 = scmp.eq.s32.totalorder %s22, 1
    %p291 = por %p289, %p290
    %p292 = scmp.ne.s32.totalorder %s281, %s282
    %p293 = scmp.eq.s32.totalorder %s22, 0
    %p294 = por %p292, %p293
    %p295 = scmp.ne.s32.totalorder %s281, %s282
    %p296 = scmp.eq.s32.totalorder %s23, 1
    %p297 = por %p295, %p296
    %p299 = scmp.ne.s32.totalorder %s282, %s298
    %p300 = scmp.eq.s32.totalorder %s23, 0
    %p301 = por %p299, %p300
    %p302 = scmp.le.s32.totalorder 1, %s17
    %p303 = scmp.lt.s32.totalorder %s17, 3
    %p304 = pnand %p302, %p303
    %p305 = pneg %p304
    // Predicated region
    $region9: #{fpn_forward.1} parent=5 // pred_check
      _
    $region10: #{fpn_forward.1} parent=5 // pred_check_branch
      %307 = sbr.rel (%p304) target = $region12
    $region11: #{fpn_forward.1} parent=5 // pred_region
      %s308 = ssub.s32 %s17, 1
      // Predicated region
      $region13: #{fpn_forward.1} parent=11 // pred_check
        %p309 = pneg %p142
      $region14: #{fpn_forward.1} parent=11 // pred_check_branch
        %311 = sbr.rel (%p309) target = $region16
      $region15: #{fpn_forward.1} parent=11 // pred_region
        _
      $region16: #{fpn_forward.1} parent=11 // pred_fallthru
        _
      // Predicated region
      $region17: #{fpn_forward.1} parent=11 // pred_check
        %p312 = pneg %p163
      $region18: #{fpn_forward.1} parent=11 // pred_check_branch
        %314 = sbr.rel (%p312) target = $region20
      $region19: #{fpn_forward.1} parent=11 // pred_region
        _
      $region20: #{fpn_forward.1} parent=11 // pred_fallthru
        _
      // Predicated region
      $region21: #{fpn_forward.1} parent=11 // pred_check
        %p315 = pneg %p184
      $region22: #{fpn_forward.1} parent=11 // pred_check_branch
        %317 = sbr.rel (%p315) target = $region24
      $region23: #{fpn_forward.1} parent=11 // pred_region
        _
      $region24: #{fpn_forward.1} parent=11 // pred_fallthru
        _
      // Predicated region
      $region25: #{fpn_forward.1} parent=11 // pred_check
        %p318 = pneg %p205
      $region26: #{fpn_forward.1} parent=11 // pred_check_branch
        %320 = sbr.rel (%p318) target = $region28
      $region27: #{fpn_forward.1} parent=11 // pred_region
        _
      $region28: #{fpn_forward.1} parent=11 // pred_fallthru
        _
      // Predicated region
      $region29: #{fpn_forward.1} parent=11 // pred_check
        %p321 = pneg %p226
      $region30: #{fpn_forward.1} parent=11 // pred_check_branch
        %323 = sbr.rel (%p321) target = $region32
      $region31: #{fpn_forward.1} parent=11 // pred_region
        _
      $region32: #{fpn_forward.1} parent=11 // pred_fallthru
        _
      // Predicated region
      $region33: #{fpn_forward.1} parent=11 // pred_check
        %p324 = pneg %p247
      $region34: #{fpn_forward.1} parent=11 // pred_check_branch
        %326 = sbr.rel (%p324) target = $region36
      $region35: #{fpn_forward.1} parent=11 // pred_region
        _
      $region36: #{fpn_forward.1} parent=11 // pred_fallthru
        _
      // Predicated region
      $region37: #{fpn_forward.1} parent=11 // pred_check
        %p327 = pneg %p268
      $region38: #{fpn_forward.1} parent=11 // pred_check_branch
        %329 = sbr.rel (%p327) target = $region40
      $region39: #{fpn_forward.1} parent=11 // pred_region
        _
      $region40: #{fpn_forward.1} parent=11 // pred_fallthru
        _
    $region12: #{fpn_forward.1} parent=5 // pred_fallthru
      _
    %p330 = scmp.lt.s32.totalorder %s17, 2
    // Predicated region
    $region41: #{fpn_forward.1} parent=5 // pred_check
      %p331 = pneg %p330
    $region42: #{fpn_forward.1} parent=5 // pred_check_branch
      %333 = sbr.rel (%p331) target = $region44
    $region43: #{fpn_forward.1} parent=5 // pred_region
      // Predicated region
      $region45: #{fpn_forward.1} parent=43 // pred_check
        %p334 = pneg %p37
      $region46: #{fpn_forward.1} parent=43 // pred_check_branch
        %336 = sbr.rel (%p334) target = $region48
      $region47: #{fpn_forward.1} parent=43 // pred_region
        %p337 = scmp.lt.s32.totalorder %s17, 1
        %s338 = scalar_select %p337, %s17, 1
        %s339 = smul.addr %s338, 4
        %s340 = smul.addr %s339, 8
        %s341 = scalar_lea.vmem %s0, %s340
      $region48: #{fpn_forward.1} parent=43 // pred_fallthru
        _
      // Predicated region
      $region49: #{fpn_forward.1} parent=43 // pred_check
        %p342 = pneg %p63
      $region50: #{fpn_forward.1} parent=43 // pred_check_branch
        %344 = sbr.rel (%p342) target = $region52
      $region51: #{fpn_forward.1} parent=43 // pred_region
        %p345 = scmp.lt.s32.totalorder %s17, 1
        %s346 = scalar_select %p345, %s17, 1
        %s347 = smul.addr %s346, 4
        %s348 = smul.addr %s347, 8
        %s349 = scalar_lea.vmem %s1, %s348
      $region52: #{fpn_forward.1} parent=43 // pred_fallthru
        _
      // Predicated region
      $region53: #{fpn_forward.1} parent=43 // pred_check
        %p350 = pneg %p89
      $region54: #{fpn_forward.1} parent=43 // pred_check_branch
        %352 = sbr.rel (%p350) target = $region56
      $region55: #{fpn_forward.1} parent=43 // pred_region
        %p353 = scmp.lt.s32.totalorder %s17, 1
        %s354 = scalar_select %p353, %s17, 1
        %s355 = smul.addr %s354, 8
        %s356 = smul.addr %s355, 8
        %s357 = scalar_lea.vmem %s2, %s356
      $region56: #{fpn_forward.1} parent=43 // pred_fallthru
        _
      // Predicated region
      $region57: #{fpn_forward.1} parent=43 // pred_check
        %p358 = pneg %p115
      $region58: #{fpn_forward.1} parent=43 // pred_check_branch
        %360 = sbr.rel (%p358) target = $region60
      $region59: #{fpn_forward.1} parent=43 // pred_region
        %p361 = scmp.lt.s32.totalorder %s17, 1
        %s362 = scalar_select %p361, %s17, 1
        %s363 = smul.addr %s362, 16
        %s364 = smul.addr %s363, 8
        %s365 = scalar_lea.vmem %s3, %s364
      $region60: #{fpn_forward.1} parent=43 // pred_fallthru
        _
    $region44: #{fpn_forward.1} parent=5 // pred_fallthru
      _
    %p366 = scmp.le.s32.totalorder 1, %s17
    %p367 = scmp.lt.s32.totalorder %s17, 3
    %p368 = pnand %p366, %p367
    %p369 = pneg %p368
    // Predicated region
    $region61: #{fpn_forward.1} parent=5 // pred_check
      _
    $region62: #{fpn_forward.1} parent=5 // pred_check_branch
      %371 = sbr.rel (%p368) target = $region64
    $region63: #{fpn_forward.1} parent=5 // pred_region
      %s372 = ssub.s32 %s17, 1
      %p373 = scmp.lt.s32.totalorder %s22, 1
      %s374 = scalar_select %p373, %s22, 1
      %s375 = smul.addr %s374, 4
      %s376 = smul.addr %s375, 8
      %s377 = scalar_lea.vmem %s0, %s376
      %p378 = pneg %p43
      %p379 = pneg %p40
      %p380 = scmp.lt.s32.totalorder %s22, 1
      %s381 = scalar_select %p380, %s22, 1
      %s382 = smul.addr %s381, 4
      %s383 = smul.addr %s382, 8
      %s384 = scalar_lea.vmem %s1, %s383
      %p385 = pneg %p69
      %p386 = pneg %p66
      %p387 = scmp.lt.s32.totalorder %s22, 1
      %s388 = scalar_select %p387, %s22, 1
      %s389 = smul.addr %s388, 8
      %s390 = smul.addr %s389, 8
      %s391 = scalar_lea.vmem %s2, %s390
      %p392 = pneg %p95
      %p393 = pneg %p92
      %p394 = scmp.lt.s32.totalorder %s22, 1
      %s395 = scalar_select %p394, %s22, 1
      %s396 = smul.addr %s395, 16
      %s397 = smul.addr %s396, 8
      %s398 = scalar_lea.vmem %s3, %s397
      %p399 = pneg %p121
      %p400 = pneg %p118
      %p401 = pneg %p142
      %p402 = pneg %p139
      %p403 = pneg %p163
      %p404 = pneg %p160
      %p405 = pneg %p184
      %p406 = pneg %p181
      %p407 = pneg %p205
      %p408 = pneg %p202
      %p409 = pneg %p226
      %p410 = pneg %p223
      %p411 = pneg %p247
      %p412 = pneg %p244
      %p413 = pneg %p268
      %p414 = pneg %p265
      %p415 = pneg %p294
      %p416 = pneg %p291
      %p417 = scmp.lt.s32.totalorder %s22, 1
      %s418 = scalar_select %p417, %s22, 1
      %s419 = smul.addr %s418, 12
      %s420 = smul.addr %s419, 8
      %s421 = scalar_lea.vmem %s11, %s420
      %p422 = scmp.lt.s32.totalorder %s22, 1
      %s423 = scalar_select %p422, %s22, 1
      %s424 = smul.addr %s423, 4
      %s425 = smul.addr %s424, 8
      %s426 = scalar_lea.vmem %s0, %s425
      %p427 = scmp.lt.s32.totalorder %s22, 1
      %s428 = scalar_select %p427, %s22, 1
      %s429 = smul.addr %s428, 4
      %s430 = smul.addr %s429, 8
      %s431 = scalar_lea.vmem %s1, %s430
      %p432 = scmp.lt.s32.totalorder %s22, 1
      %s433 = scalar_select %p432, %s22, 1
      %s434 = smul.addr %s433, 8
      %s435 = smul.addr %s434, 8
      %s436 = scalar_lea.vmem %s2, %s435
      %p437 = scmp.lt.s32.totalorder %s22, 1
      %s438 = scalar_select %p437, %s22, 1
      %s439 = smul.addr %s438, 16
      %s440 = smul.addr %s439, 8
      %s441 = scalar_lea.vmem %s3, %s440
      %p442 = scmp.lt.s32.totalorder %s22, 1
      %s443 = scalar_select %p442, %s22, 1
      %s444 = smul.addr %s443, 12
      %s445 = smul.addr %s444, 8
      %s446 = scalar_lea.vmem %s11, %s445
      %v447 = vld [vmem:[%s7] sm:$0xff]
      %v448 = vld [vmem:[%s7 + $0x8] sm:$0xff]
      %v449 = vld [vmem:[%s7 + $0x10] sm:$0xff]
      %v450 = vld [vmem:[%s7 + $0x18] sm:$0x1]
      %v451 = vld [vmem:[%s7 + $0x20] sm:$0x1]
      %v452 = vld [vmem:[%s7 + $0x28] sm:$0x1]
      %v453 = vld [vmem:[%s5] sm:$0xff]
      %v454 = vld [vmem:[%s5 + $0x8] sm:$0xff]
      %v455 = vld [vmem:[%s5 + $0x10] sm:$0xff]
      %v456 = vld [vmem:[%s5 + $0x18] sm:$0xff]
      %v457 = vld [vmem:[%s5 + $0x20] sm:$0xff]
      %v458 = vld [vmem:[%s5 + $0x28] sm:$0xff]
      %v459 = vld [vmem:[%s5 + $0x30] sm:$0xff]
      %v460 = vld [vmem:[%s5 + $0x38] sm:$0xff]
      %v461 = vld [vmem:[%s5 + $0x40] sm:$0xff]
      %v462 = vld [vmem:[%s5 + $0x48] sm:$0xff]
      %v463 = vld [vmem:[%s5 + $0x50] sm:$0xff]
      %v464 = vld [vmem:[%s5 + $0x58] sm:$0xff]
      %v465 = vld [vmem:[%s5 + $0x60] sm:$0xff]
      %v466 = vld [vmem:[%s5 + $0x68] sm:$0xff]
      %v467 = vld [vmem:[%s5 + $0x70] sm:$0xff]
      %v468 = vld [vmem:[%s5 + $0x78] sm:$0xff]
      %s469 = scalar_lea.vmem %s4, 96
      %v470 = vld [vmem:[%s469] sm:$0xff]
      %v471 = vld [vmem:[%s469 + $0x8] sm:$0xff]
      %v472 = vld [vmem:[%s469 + $0x10] sm:$0xff]
      %v473 = vld [vmem:[%s469 + $0x18] sm:$0xff]
      %v474 = vld [vmem:[%s441] sm:$0xff]
      %v475 = vld [vmem:[%s441 + $0x8] sm:$0xff]
      %v476 = vld [vmem:[%s441 + $0x10] sm:$0xff]
      %v477 = vld [vmem:[%s441 + $0x18] sm:$0xff]
      %v478 = vld [vmem:[%s441 + $0x20] sm:$0xff]
      %v479 = vld [vmem:[%s441 + $0x28] sm:$0xff]
      %v480 = vld [vmem:[%s441 + $0x30] sm:$0xff]
      %v481 = vld [vmem:[%s441 + $0x38] sm:$0xff]
      %v482 = vld [vmem:[%s441 + $0x40] sm:$0xff]
      %v483 = vld [vmem:[%s441 + $0x48] sm:$0xff]
      %v484 = vld [vmem:[%s441 + $0x50] sm:$0xff]
      %v485 = vld [vmem:[%s441 + $0x58] sm:$0xff]
      %v486 = vld [vmem:[%s441 + $0x60] sm:$0xff]
      %v487 = vld [vmem:[%s441 + $0x68] sm:$0xff]
      %v488 = vld [vmem:[%s441 + $0x70] sm:$0xff]
      %v489 = vld [vmem:[%s441 + $0x78] sm:$0xff]
      %491 = vset.pattern.permute.xlu0 0
      %492 = vperm.xlu0 %491, %v465
      %v493 = vpop.permute.xlu0 %492
      %496 = vset.pattern.permute.xlu0 0
      %497 = vperm.xlu0 %496, %v466
      %v498 = vpop.permute.xlu0 %497
      %501 = vset.pattern.permute.xlu0 0
      %502 = vperm.xlu0 %501, %v467
      %v503 = vpop.permute.xlu0 %502
      %506 = vset.pattern.permute.xlu0 0
      %507 = vperm.xlu0 %506, %v468
      %v508 = vpop.permute.xlu0 %507
      %510 = vmatprep.subr.mxu0 0.0
      %511 = vmatpush1.msra.mxu0 %v489
      %512 = vmatprep.subr.mxu0 0.0
      %513 = vmatpush1.msra.mxu0 %v488
      %514 = vmatprep.subr.mxu0 0.0
      %515 = vmatpush1.msra.mxu0 %v487
      %516 = vmatprep.subr.mxu0 0.0
      %517 = vmatpush1.msra.mxu0 %v486
      %518 = vmatprep.subr.mxu0 0.0
      %519 = vmatpush1.msra.mxu0 %v485
      %520 = vmatprep.subr.mxu0 0.0
      %521 = vmatpush1.msra.mxu0 %v484
      %522 = vmatprep.subr.mxu0 0.0
      %523 = vmatpush1.msra.mxu0 %v483
      %524 = vmatprep.subr.mxu0 0.0
      %525 = vmatpush1.msra.mxu0 %v482
      %526 = vmatprep.subr.mxu0 0.0
      %527 = vmatpush1.msra.mxu0 %v481
      %528 = vmatprep.subr.mxu0 0.0
      %529 = vmatpush1.msra.mxu0 %v480
      %530 = vmatprep.subr.mxu0 0.0
      %531 = vmatpush1.msra.mxu0 %v479
      %532 = vmatprep.subr.mxu0 0.0
      %533 = vmatpush1.msra.mxu0 %v478
      %534 = vmatprep.subr.mxu0 0.0
      %535 = vmatpush1.msra.mxu0 %v477
      %536 = vmatprep.subr.mxu0 0.0
      %537 = vmatpush1.msra.mxu0 %v476
      %538 = vmatprep.subr.mxu0 0.0
      %539 = vmatpush1.msra.mxu0 %v475
      %540 = vmatprep.subr.mxu0 0.0
      %541 = vmatpush1.msra.mxu0 %v474
      %542 = vmatprep.subr.mxu0 0.0
      %543 = vmatpush2.msra.mxu0 0.0
      %544 = vmatprep.subr.mxu0 0.0
      %545 = vmatpush2.msra.mxu0 0.0
      %546 = vmatprep.subr.mxu0 0.0
      %547 = vmatpush2.msra.mxu0 0.0
      %548 = vmatprep.subr.mxu0 0.0
      %549 = vmatpush2.msra.mxu0 0.0
      %550 = vmatprep.subr.mxu0 0.0
      %551 = vmatpush2.msra.mxu0 0.0
      %552 = vmatprep.subr.mxu0 0.0
      %553 = vmatpush2.msra.mxu0 0.0
      %554 = vmatprep.subr.mxu0 0.0
      %555 = vmatpush2.msra.mxu0 0.0
      %556 = vmatprep.subr.mxu0 0.0
      %557 = vmatpush2.msra.mxu0 0.0
      %558 = vmatprep.subr.mxu0 0.0
      %559 = vmatpush2.msra.mxu0 0.0
      %560 = vmatprep.subr.mxu0 0.0
      %561 = vmatpush2.msra.mxu0 0.0
      %562 = vmatprep.subr.mxu0 0.0
      %563 = vmatpush2.msra.mxu0 0.0
      %564 = vmatprep.subr.mxu0 0.0
      %565 = vmatpush2.msra.mxu0 0.0
      %566 = vmatprep.subr.mxu0 0.0
      %567 = vmatpush2.msra.mxu0 0.0
      %568 = vmatprep.subr.mxu0 0.0
      %569 = vmatpush2.msra.mxu0 0.0
      %570 = vmatprep.subr.mxu0 0.0
      %571 = vmatpush2.msra.mxu0 0.0
      %572 = vmatprep.subr.mxu0 0.0
      %573 = vmatpush2.msra.mxu0 0.0
      %574 = vmatprep.mubr.f32.mxu0 0.0
      %575 = vmatmul.mubr.f32.gmra.mxu0 %v470
      %v576 = vpop.f32.mrf.mxu0
      %v577 = vadd.f32 %v493, %v576
      %v578 = vpop.f32.mrf.mxu0
      %579 = vmatprep.mubr.f32.mxu0 0.0
      %580 = vmatmul.mubr.f32.gmra.mxu0 %v471
      %v581 = vpop.f32.mrf.mxu0
      %v582 = vadd.f32 %v498, %v581
      %v583 = vpop.f32.mrf.mxu0
      %584 = vmatprep.mubr.f32.mxu0 0.0
      %585 = vmatmul.mubr.f32.gmra.mxu0 %v472
      %v586 = vpop.f32.mrf.mxu0
      %v587 = vadd.f32 %v503, %v586
      %v588 = vpop.f32.mrf.mxu0
      %589 = vmatprep.mubr.f32.mxu0 0.0
      %590 = vmatmul.mubr.f32.gmra.mxu0 %v473
      %v591 = vpop.f32.mrf.mxu0
      %v592 = vadd.f32 %v508, %v591
      %v593 = vpop.f32.mrf.mxu0
      %594 = vdwg.mxu0
      %599 = vrot.lane.b32.xlu0 %v577, 3
      %v600 = vpop.permute.xlu0 %599
      %601 = vrot.lane.b32.xlu0 %v582, 3
      %v602 = vpop.permute.xlu0 %601
      %603 = vrot.lane.b32.xlu0 %v587, 3
      %v604 = vpop.permute.xlu0 %603
      %605 = vrot.lane.b32.xlu0 %v592, 3
      %v606 = vpop.permute.xlu0 %605
      %vm611 = vcmask 23552
      %v612 = vsel %vm611, 0.0, %v600
      %v613 = vsel %vm611, 0.0, %v602
      %v614 = vsel %vm611, 0.0, %v604
      %v615 = vsel %vm611, 0.0, %v606
      %vm616 = vcmask 56320
      %v617 = vsel %vm616, %v612, 0.0
      %v618 = vsel %vm616, %v613, 0.0
      %v619 = vsel %vm616, %v614, 0.0
      %v620 = vsel %vm616, %v615, 0.0
      %v621 = vlaneseq
      %v622 = vshrl.u32 %v621, 7
      %v623 = vsub.s32 0, %v622
      %v624 = vrot.slane %v449, %v623
      %626 = vrot.lane.b32.xlu0 %v624, 48
      %v627 = vpop.permute.xlu0 %626
      %v629 = vmul.f32 %v617, %v627
      %v630 = vmul.f32 %v618, %v627
      %v631 = vmul.f32 %v619, %v627
      %v632 = vmul.f32 %v620, %v627
      %v633 = vlaneseq
      %v634 = vshrl.u32 %v633, 7
      %v635 = vsub.s32 1, %v634
      %v636 = vrot.slane %v449, %v635
      %638 = vrot.lane.b32.xlu0 %v636, 49
      %v639 = vpop.permute.xlu0 %638
      %v641 = vmul.f32 %v617, %v639
      %v642 = vmul.f32 %v618, %v639
      %v643 = vmul.f32 %v619, %v639
      %v644 = vmul.f32 %v620, %v639
      %v645 = vlaneseq
      %v646 = vshrl.u32 %v645, 7
      %v647 = vsub.s32 2, %v646
      %v648 = vrot.slane %v449, %v647
      %650 = vrot.lane.b32.xlu0 %v648, 50
      %v651 = vpop.permute.xlu0 %650
      %v653 = vmul.f32 %v617, %v651
      %v654 = vmul.f32 %v618, %v651
      %v655 = vmul.f32 %v619, %v651
      %v656 = vmul.f32 %v620, %v651
      %v657 = vlaneseq
      %v658 = vshrl.u32 %v657, 7
      %v659 = vsub.s32 3, %v658
      %v660 = vrot.slane %v449, %v659
      %662 = vrot.lane.b32.xlu0 %v660, 50
      %v663 = vpop.permute.xlu0 %662
      %v665 = vmul.f32 %v617, %v663
      %v666 = vmul.f32 %v618, %v663
      %v667 = vmul.f32 %v619, %v663
      %v668 = vmul.f32 %v620, %v663
      %v669 = vlaneseq
      %v670 = vshrl.u32 %v669, 7
      %v671 = vsub.s32 4, %v670
      %v672 = vrot.slane %v449, %v671
      %674 = vrot.lane.b32.xlu0 %v672, 51
      %v675 = vpop.permute.xlu0 %674
      %v677 = vmul.f32 %v617, %v675
      %v678 = vmul.f32 %v618, %v675
      %v679 = vmul.f32 %v619, %v675
      %v680 = vmul.f32 %v620, %v675
      %v681 = vlaneseq
      %v682 = vshrl.u32 %v681, 7
      %v683 = vsub.s32 5, %v682
      %v684 = vrot.slane %v449, %v683
      %686 = vrot.lane.b32.xlu0 %v684, 52
      %v687 = vpop.permute.xlu0 %686
      %v689 = vmul.f32 %v617, %v687
      %v690 = vmul.f32 %v618, %v687
      %v691 = vmul.f32 %v619, %v687
      %v692 = vmul.f32 %v620, %v687
      %v693 = vlaneseq
      %v694 = vshrl.u32 %v693, 7
      %v695 = vsub.s32 6, %v694
      %v696 = vrot.slane %v449, %v695
      %698 = vrot.lane.b32.xlu0 %v696, 52
      %v699 = vpop.permute.xlu0 %698
      %v701 = vmul.f32 %v617, %v699
      %v702 = vmul.f32 %v618, %v699
      %v703 = vmul.f32 %v619, %v699
      %v704 = vmul.f32 %v620, %v699
      %v705 = vlaneseq
      %v706 = vshrl.u32 %v705, 7
      %v707 = vsub.s32 7, %v706
      %v708 = vrot.slane %v449, %v707
      %710 = vrot.lane.b32.xlu0 %v708, 53
      %v711 = vpop.permute.xlu0 %710
      %v713 = vmul.f32 %v617, %v711
      %v714 = vmul.f32 %v618, %v711
      %v715 = vmul.f32 %v619, %v711
      %v716 = vmul.f32 %v620, %v711
      %v717 = vlaneseq
      %v718 = vshrl.u32 %v717, 7
      %v719 = vsub.s32 0, %v718
      %v720 = vrot.slane %v452, %v719
      %722 = vrot.lane.b32.xlu0 %v720, 54
      %v723 = vpop.permute.xlu0 %722
      %v725 = vmul.f32 %v617, %v723
      %v726 = vmul.f32 %v618, %v723
      %v727 = vmul.f32 %v619, %v723
      %v728 = vmul.f32 %v620, %v723
      %733 = vrot.lane.b32.xlu0 %v641, 127
      %v734 = vpop.permute.xlu0 %733
      %735 = vrot.lane.b32.xlu0 %v642, 127
      %v736 = vpop.permute.xlu0 %735
      %737 = vrot.lane.b32.xlu0 %v643, 127
      %v738 = vpop.permute.xlu0 %737
      %739 = vrot.lane.b32.xlu0 %v644, 127
      %v740 = vpop.permute.xlu0 %739
      %749 = vrot.lane.b32.xlu0 %v653, 126
      %v750 = vpop.permute.xlu0 %749
      %751 = vrot.lane.b32.xlu0 %v654, 126
      %v752 = vpop.permute.xlu0 %751
      %753 = vrot.lane.b32.xlu0 %v655, 126
      %v754 = vpop.permute.xlu0 %753
      %755 = vrot.lane.b32.xlu0 %v656, 126
      %v756 = vpop.permute.xlu0 %755
      %765 = vrot.lane.b32.xlu0 %v665, 126
      %v766 = vpop.permute.xlu0 %765
      %767 = vrot.lane.b32.xlu0 %v666, 126
      %v768 = vpop.permute.xlu0 %767
      %769 = vrot.lane.b32.xlu0 %v667, 126
      %v770 = vpop.permute.xlu0 %769
      %771 = vrot.lane.b32.xlu0 %v668, 126
      %v772 = vpop.permute.xlu0 %771
      %781 = vrot.lane.b32.xlu0 %v677, 125
      %v782 = vpop.permute.xlu0 %781
      %783 = vrot.lane.b32.xlu0 %v678, 125
      %v784 = vpop.permute.xlu0 %783
      %785 = vrot.lane.b32.xlu0 %v679, 125
      %v786 = vpop.permute.xlu0 %785
      %787 = vrot.lane.b32.xlu0 %v680, 125
      %v788 = vpop.permute.xlu0 %787
      %797 = vrot.lane.b32.xlu0 %v689, 124
      %v798 = vpop.permute.xlu0 %797
      %799 = vrot.lane.b32.xlu0 %v690, 124
      %v800 = vpop.permute.xlu0 %799
      %801 = vrot.lane.b32.xlu0 %v691, 124
      %v802 = vpop.permute.xlu0 %801
      %803 = vrot.lane.b32.xlu0 %v692, 124
      %v804 = vpop.permute.xlu0 %803
      %813 = vrot.lane.b32.xlu0 %v701, 124
      %v814 = vpop.permute.xlu0 %813
      %815 = vrot.lane.b32.xlu0 %v702, 124
      %v816 = vpop.permute.xlu0 %815
      %817 = vrot.lane.b32.xlu0 %v703, 124
      %v818 = vpop.permute.xlu0 %817
      %819 = vrot.lane.b32.xlu0 %v704, 124
      %v820 = vpop.permute.xlu0 %819
      %829 = vrot.lane.b32.xlu0 %v713, 123
      %v830 = vpop.permute.xlu0 %829
      %831 = vrot.lane.b32.xlu0 %v714, 123
      %v832 = vpop.permute.xlu0 %831
      %833 = vrot.lane.b32.xlu0 %v715, 123
      %v834 = vpop.permute.xlu0 %833
      %835 = vrot.lane.b32.xlu0 %v716, 123
      %v836 = vpop.permute.xlu0 %835
      %845 = vrot.lane.b32.xlu0 %v725, 122
      %v846 = vpop.permute.xlu0 %845
      %847 = vrot.lane.b32.xlu0 %v726, 122
      %v848 = vpop.permute.xlu0 %847
      %849 = vrot.lane.b32.xlu0 %v727, 122
      %v850 = vpop.permute.xlu0 %849
      %851 = vrot.lane.b32.xlu0 %v728, 122
      %v852 = vpop.permute.xlu0 %851
      %s857 = scalar_lea.vmem %s6, 288
      %v858 = vld [vmem:[%s857] sm:$0xff]
      %v859 = vld [vmem:[%s857 + $0x8] sm:$0xff]
      %v860 = vld [vmem:[%s857 + $0x10] sm:$0xff]
      %v861 = vld [vmem:[%s857 + $0x18] sm:$0xff]
      %v862 = vld [vmem:[%s857 + $0x20] sm:$0xff]
      %v863 = vld [vmem:[%s857 + $0x28] sm:$0xff]
      %v864 = vld [vmem:[%s857 + $0x30] sm:$0xff]
      %v865 = vld [vmem:[%s857 + $0x38] sm:$0xff]
      %v866 = vld [vmem:[%s857 + $0x40] sm:$0xff]
      %v867 = vld [vmem:[%s857 + $0x48] sm:$0xff]
      %v868 = vld [vmem:[%s857 + $0x50] sm:$0xff]
      %v869 = vld [vmem:[%s857 + $0x58] sm:$0xff]
      %870 = vset.pattern.permute.xlu0 1
      %871 = vperm.xlu0 %870, %v465
      %v872 = vpop.permute.xlu0 %871
      %874 = vset.pattern.permute.xlu0 1
      %875 = vperm.xlu0 %874, %v466
      %v876 = vpop.permute.xlu0 %875
      %878 = vset.pattern.permute.xlu0 1
      %879 = vperm.xlu0 %878, %v467
      %v880 = vpop.permute.xlu0 %879
      %882 = vset.pattern.permute.xlu0 1
      %883 = vperm.xlu0 %882, %v468
      %v884 = vpop.permute.xlu0 %883
      %vm886 = vcmask 261120
      %v888 = vsel %vm886, %v860, 0
      %v891 = vsel %vm886, %v863, 0
      %v894 = vsel %vm886, %v866, 0
      %v897 = vsel %vm886, %v869, 0
      %899 = vmatprep.subr.mxu0 0.0
      %900 = vmatpush1.msra.mxu0 %v772
      %901 = vmatprep.subr.mxu0 0.0
      %902 = vmatpush1.msra.mxu0 %v770
      %903 = vmatprep.subr.mxu0 0.0
      %904 = vmatpush1.msra.mxu0 %v768
      %905 = vmatprep.subr.mxu0 0.0
      %906 = vmatpush1.msra.mxu0 %v766
      %907 = vmatprep.subr.mxu0 0.0
      %908 = vmatpush1.msra.mxu0 %v756
      %909 = vmatprep.subr.mxu0 0.0
      %910 = vmatpush1.msra.mxu0 %v754
      %911 = vmatprep.subr.mxu0 0.0
      %912 = vmatpush1.msra.mxu0 %v752
      %913 = vmatprep.subr.mxu0 0.0
      %914 = vmatpush1.msra.mxu0 %v750
      %915 = vmatprep.subr.mxu0 0.0
      %916 = vmatpush1.msra.mxu0 %v740
      %917 = vmatprep.subr.mxu0 0.0
      %918 = vmatpush1.msra.mxu0 %v738
      %919 = vmatprep.subr.mxu0 0.0
      %920 = vmatpush1.msra.mxu0 %v736
      %921 = vmatprep.subr.mxu0 0.0
      %922 = vmatpush1.msra.mxu0 %v734
      %923 = vmatprep.subr.mxu0 0.0
      %924 = vmatpush1.msra.mxu0 %v632
      %925 = vmatprep.subr.mxu0 0.0
      %926 = vmatpush1.msra.mxu0 %v631
      %927 = vmatprep.subr.mxu0 0.0
      %928 = vmatpush1.msra.mxu0 %v630
      %929 = vmatprep.subr.mxu0 0.0
      %930 = vmatpush1.msra.mxu0 %v629
      %931 = vmatprep.subr.mxu0 0.0
      %932 = vmatpush2.msra.mxu0 %v836
      %933 = vmatprep.subr.mxu0 0.0
      %934 = vmatpush2.msra.mxu0 %v834
      %935 = vmatprep.subr.mxu0 0.0
      %936 = vmatpush2.msra.mxu0 %v832
      %937 = vmatprep.subr.mxu0 0.0
      %938 = vmatpush2.msra.mxu0 %v830
      %939 = vmatprep.subr.mxu0 0.0
      %940 = vmatpush2.msra.mxu0 %v820
      %941 = vmatprep.subr.mxu0 0.0
      %942 = vmatpush2.msra.mxu0 %v818
      %943 = vmatprep.subr.mxu0 0.0
      %944 = vmatpush2.msra.mxu0 %v816
      %945 = vmatprep.subr.mxu0 0.0
      %946 = vmatpush2.msra.mxu0 %v814
      %947 = vmatprep.subr.mxu0 0.0
      %948 = vmatpush2.msra.mxu0 %v804
      %949 = vmatprep.subr.mxu0 0.0
      %950 = vmatpush2.msra.mxu0 %v802
      %951 = vmatprep.subr.mxu0 0.0
      %952 = vmatpush2.msra.mxu0 %v800
      %953 = vmatprep.subr.mxu0 0.0
      %954 = vmatpush2.msra.mxu0 %v798
      %955 = vmatprep.subr.mxu0 0.0
      %956 = vmatpush2.msra.mxu0 %v788
      %957 = vmatprep.subr.mxu0 0.0
      %958 = vmatpush2.msra.mxu0 %v786
      %959 = vmatprep.subr.mxu0 0.0
      %960 = vmatpush2.msra.mxu0 %v784
      %961 = vmatprep.subr.mxu0 0.0
      %962 = vmatpush2.msra.mxu0 %v782
      %963 = vmatprep.mubr.f32.mxu0 %v859
      %964 = vmatmul.mubr.f32.gmra.mxu0 %v858
      %v965 = vpop.f32.mrf.mxu0
      %v966 = vadd.f32 %v872, %v965
      %v967 = vpop.f32.mrf.mxu0
      %968 = vmatprep.mubr.f32.mxu0 %v862
      %969 = vmatmul.mubr.f32.gmra.mxu0 %v861
      %v970 = vpop.f32.mrf.mxu0
      %v971 = vadd.f32 %v876, %v970
      %v972 = vpop.f32.mrf.mxu0
      %973 = vmatprep.mubr.f32.mxu0 %v865
      %974 = vmatmul.mubr.f32.gmra.mxu0 %v864
      %v975 = vpop.f32.mrf.mxu0
      %v976 = vadd.f32 %v880, %v975
      %v977 = vpop.f32.mrf.mxu0
      %978 = vmatprep.mubr.f32.mxu0 %v868
      %979 = vmatmul.mubr.f32.gmra.mxu0 %v867
      %v980 = vpop.f32.mrf.mxu0
      %v981 = vadd.f32 %v884, %v980
      %v982 = vpop.f32.mrf.mxu0
      %983 = vdwg.mxu0
      %984 = vmatprep.subr.mxu0 0.0
      %985 = vmatpush1.msra.mxu0 0.0
      %986 = vmatprep.subr.mxu0 0.0
      %987 = vmatpush1.msra.mxu0 0.0
      %988 = vmatprep.subr.mxu0 0.0
      %989 = vmatpush1.msra.mxu0 0.0
      %990 = vmatprep.subr.mxu0 0.0
      %991 = vmatpush1.msra.mxu0 0.0
      %992 = vmatprep.subr.mxu0 0.0
      %993 = vmatpush1.msra.mxu0 0.0
      %994 = vmatprep.subr.mxu0 0.0
      %995 = vmatpush1.msra.mxu0 0.0
      %996 = vmatprep.subr.mxu0 0.0
      %997 = vmatpush1.msra.mxu0 0.0
      %998 = vmatprep.subr.mxu0 0.0
      %999 = vmatpush1.msra.mxu0 0.0
      %1000 = vmatprep.subr.mxu0 0.0
      %1001 = vmatpush1.msra.mxu0 0.0
      %1002 = vmatprep.subr.mxu0 0.0
      %1003 = vmatpush1.msra.mxu0 0.0
      %1004 = vmatprep.subr.mxu0 0.0
      %1005 = vmatpush1.msra.mxu0 0.0
      %1006 = vmatprep.subr.mxu0 0.0
      %1007 = vmatpush1.msra.mxu0 0.0
      %1008 = vmatprep.subr.mxu0 0.0
      %1009 = vmatpush1.msra.mxu0 %v852
      %1010 = vmatprep.subr.mxu0 0.0
      %1011 = vmatpush1.msra.mxu0 %v850
      %1012 = vmatprep.subr.mxu0 0.0
      %1013 = vmatpush1.msra.mxu0 %v848
      %1014 = vmatprep.subr.mxu0 0.0
      %1015 = vmatpush1.msra.mxu0 %v846
      %1016 = vmatprep.subr.mxu0 0.0
      %1017 = vmatpush2.msra.mxu0 0.0
      %1018 = vmatprep.subr.mxu0 0.0
      %1019 = vmatpush2.msra.mxu0 0.0
      %1020 = vmatprep.subr.mxu0 0.0
      %1021 = vmatpush2.msra.mxu0 0.0
      %1022 = vmatprep.subr.mxu0 0.0
      %1023 = vmatpush2.msra.mxu0 0.0
      %1024 = vmatprep.subr.mxu0 0.0
      %1025 = vmatpush2.msra.mxu0 0.0
      %1026 = vmatprep.subr.mxu0 0.0
      %1027 = vmatpush2.msra.mxu0 0.0
      %1028 = vmatprep.subr.mxu0 0.0
      %1029 = vmatpush2.msra.mxu0 0.0
      %1030 = vmatprep.subr.mxu0 0.0
      %1031 = vmatpush2.msra.mxu0 0.0
      %1032 = vmatprep.subr.mxu0 0.0
      %1033 = vmatpush2.msra.mxu0 0.0
      %1034 = vmatprep.subr.mxu0 0.0
      %1035 = vmatpush2.msra.mxu0 0.0
      %1036 = vmatprep.subr.mxu0 0.0
      %1037 = vmatpush2.msra.mxu0 0.0
      %1038 = vmatprep.subr.mxu0 0.0
      %1039 = vmatpush2.msra.mxu0 0.0
      %1040 = vmatprep.subr.mxu0 0.0
      %1041 = vmatpush2.msra.mxu0 0.0
      %1042 = vmatprep.subr.mxu0 0.0
      %1043 = vmatpush2.msra.mxu0 0.0
      %1044 = vmatprep.subr.mxu0 0.0
      %1045 = vmatpush2.msra.mxu0 0.0
      %1046 = vmatprep.subr.mxu0 0.0
      %1047 = vmatpush2.msra.mxu0 0.0
      %1048 = vmatprep.mubr.f32.mxu0 0.0
      %1049 = vmatmul.mubr.f32.gmra.mxu0 %v888
      %v1050 = vpop.f32.mrf.mxu0
      %v1051 = vadd.f32 %v966, %v1050
      %v1052 = vpop.f32.mrf.mxu0
      %1053 = vmatprep.mubr.f32.mxu0 0.0
      %1054 = vmatmul.mubr.f32.gmra.mxu0 %v891
      %v1055 = vpop.f32.mrf.mxu0
      %v1056 = vadd.f32 %v971, %v1055
      %v1057 = vpop.f32.mrf.mxu0
      %1058 = vmatprep.mubr.f32.mxu0 0.0
      %1059 = vmatmul.mubr.f32.gmra.mxu0 %v894
      %v1060 = vpop.f32.mrf.mxu0
      %v1061 = vadd.f32 %v976, %v1060
      %v1062 = vpop.f32.mrf.mxu0
      %1063 = vmatprep.mubr.f32.mxu0 0.0
      %1064 = vmatmul.mubr.f32.gmra.mxu0 %v897
      %v1065 = vpop.f32.mrf.mxu0
      %v1066 = vadd.f32 %v981, %v1065
      %v1067 = vpop.f32.mrf.mxu0
      %1068 = vdwg.mxu0
      %1073 = vrot.lane.b32.xlu0 %v1051, 80
      %v1074 = vpop.permute.xlu0 %1073
      %1075 = vrot.lane.b32.xlu0 %v1056, 80
      %v1076 = vpop.permute.xlu0 %1075
      %1077 = vrot.lane.b32.xlu0 %v1061, 80
      %v1078 = vpop.permute.xlu0 %1077
      %1079 = vrot.lane.b32.xlu0 %v1066, 80
      %v1080 = vpop.permute.xlu0 %1079
      %vm1085 = vcmask 687744
      %1086 = vst.msk [vmem:[%s446 + $0x10] sm:$0xff] %vm1085, %v1074
      %1087 = vst.msk [vmem:[%s446 + $0x28] sm:$0xff] %vm1085, %v1076
      %1088 = vst.msk [vmem:[%s446 + $0x40] sm:$0xff] %vm1085, %v1078
      %1089 = vst.msk [vmem:[%s446 + $0x58] sm:$0xff] %vm1085, %v1080
      %1090 = vrot.lane.b32.xlu0 %v1051, 84
      %v1091 = vpop.permute.xlu0 %1090
      %1092 = vrot.lane.b32.xlu0 %v1056, 84
      %v1093 = vpop.permute.xlu0 %1092
      %1094 = vrot.lane.b32.xlu0 %v1061, 84
      %v1095 = vpop.permute.xlu0 %1094
      %1096 = vrot.lane.b32.xlu0 %v1066, 84
      %v1097 = vpop.permute.xlu0 %1096
      %vm1102 = vcmask 695968
      %1103 = vst.msk [vmem:[%s446 + $0x10] sm:$0xff] %vm1102, %v1091
      %1104 = vst.msk [vmem:[%s446 + $0x28] sm:$0xff] %vm1102, %v1093
      %1105 = vst.msk [vmem:[%s446 + $0x40] sm:$0xff] %vm1102, %v1095
      %1106 = vst.msk [vmem:[%s446 + $0x58] sm:$0xff] %vm1102, %v1097
      %v1107 = vld [vmem:[%s10] sm:$0xf]
      %vm1108 = vcmask 31744
      %v1109 = vsel %vm1108, %v577, 0
      %v1111 = vsel %vm1108, %v582, 0
      %v1113 = vsel %vm1108, %v587, 0
      %v1115 = vsel %vm1108, %v592, 0
      %vm1117 = vcmask 1043456
      %v1119 = vsel %vm1117, %v1107, 0
      %1121 = vmatprep.subr.mxu0 0.0
      %1122 = vmatpush1.msra.mxu0 0.0
      %1123 = vmatprep.subr.mxu0 0.0
      %1124 = vmatpush1.msra.mxu0 0.0
      %1125 = vmatprep.subr.mxu0 0.0
      %1126 = vmatpush1.msra.mxu0 0.0
      %1127 = vmatprep.subr.mxu0 0.0
      %1128 = vmatpush1.msra.mxu0 0.0
      %1129 = vmatprep.subr.mxu0 0.0
      %1130 = vmatpush1.msra.mxu0 0.0
      %1131 = vmatprep.subr.mxu0 0.0
      %1132 = vmatpush1.msra.mxu0 0.0
      %1133 = vmatprep.subr.mxu0 0.0
      %1134 = vmatpush1.msra.mxu0 0.0
      %1135 = vmatprep.subr.mxu0 0.0
      %1136 = vmatpush1.msra.mxu0 0.0
      %1137 = vmatprep.subr.mxu0 0.0
      %1138 = vmatpush1.msra.mxu0 0.0
      %1139 = vmatprep.subr.mxu0 0.0
      %1140 = vmatpush1.msra.mxu0 0.0
      %1141 = vmatprep.subr.mxu0 0.0
      %1142 = vmatpush1.msra.mxu0 0.0
      %1143 = vmatprep.subr.mxu0 0.0
      %1144 = vmatpush1.msra.mxu0 0.0
      %1145 = vmatprep.subr.mxu0 0.0
      %1146 = vmatpush1.msra.mxu0 0.0
      %1147 = vmatprep.subr.mxu0 0.0
      %1148 = vmatpush1.msra.mxu0 0.0
      %1149 = vmatprep.subr.mxu0 0.0
      %1150 = vmatpush1.msra.mxu0 0.0
      %1151 = vmatprep.subr.mxu0 0.0
      %1152 = vmatpush1.msra.mxu0 %v1119
      %1153 = vmatprep.subr.mxu0 0.0
      %1154 = vmatpush2.msra.mxu0 0.0
      %1155 = vmatprep.subr.mxu0 0.0
      %1156 = vmatpush2.msra.mxu0 0.0
      %1157 = vmatprep.subr.mxu0 0.0
      %1158 = vmatpush2.msra.mxu0 0.0
      %1159 = vmatprep.subr.mxu0 0.0
      %1160 = vmatpush2.msra.mxu0 0.0
      %1161 = vmatprep.subr.mxu0 0.0
      %1162 = vmatpush2.msra.mxu0 0.0
      %1163 = vmatprep.subr.mxu0 0.0
      %1164 = vmatpush2.msra.mxu0 0.0
      %1165 = vmatprep.subr.mxu0 0.0
      %1166 = vmatpush2.msra.mxu0 0.0
      %1167 = vmatprep.subr.mxu0 0.0
      %1168 = vmatpush2.msra.mxu0 0.0
      %1169 = vmatprep.subr.mxu0 0.0
      %1170 = vmatpush2.msra.mxu0 0.0
      %1171 = vmatprep.subr.mxu0 0.0
      %1172 = vmatpush2.msra.mxu0 0.0
      %1173 = vmatprep.subr.mxu0 0.0
      %1174 = vmatpush2.msra.mxu0 0.0
      %1175 = vmatprep.subr.mxu0 0.0
      %1176 = vmatpush2.msra.mxu0 0.0
      %1177 = vmatprep.subr.mxu0 0.0
      %1178 = vmatpush2.msra.mxu0 0.0
      %1179 = vmatprep.subr.mxu0 0.0
      %1180 = vmatpush2.msra.mxu0 0.0
      %1181 = vmatprep.subr.mxu0 0.0
      %1182 = vmatpush2.msra.mxu0 0.0
      %1183 = vmatprep.subr.mxu0 0.0
      %1184 = vmatpush2.msra.mxu0 0.0
      %1185 = vmatprep.mubr.f32.mxu0 0.0
      %1186 = vmatmul.mubr.f32.gmra.mxu0 %v1109
      %v1187 = vpop.f32.mrf.mxu0
      %v1188 = vadd.f32 0.0, %v1187
      %v1189 = vpop.f32.mrf.mxu0
      %1190 = vmatprep.mubr.f32.mxu0 0.0
      %1191 = vmatmul.mubr.f32.gmra.mxu0 %v1111
      %v1192 = vpop.f32.mrf.mxu0
      %v1193 = vadd.f32 0.0, %v1192
      %v1194 = vpop.f32.mrf.mxu0
      %1195 = vmatprep.mubr.f32.mxu0 0.0
      %1196 = vmatmul.mubr.f32.gmra.mxu0 %v1113
      %v1197 = vpop.f32.mrf.mxu0
      %v1198 = vadd.f32 0.0, %v1197
      %v1199 = vpop.f32.mrf.mxu0
      %1200 = vmatprep.mubr.f32.mxu0 0.0
      %1201 = vmatmul.mubr.f32.gmra.mxu0 %v1115
      %v1202 = vpop.f32.mrf.mxu0
      %v1203 = vadd.f32 0.0, %v1202
      %v1204 = vpop.f32.mrf.mxu0
      %1205 = vdwg.mxu0
      %s1206 = scalar_lea.vmem %s4, 64
      %v1207 = vld [vmem:[%s1206] sm:$0xff]
      %v1208 = vld [vmem:[%s1206 + $0x8] sm:$0xff]
      %v1209 = vld [vmem:[%s1206 + $0x10] sm:$0xff]
      %v1210 = vld [vmem:[%s1206 + $0x18] sm:$0xff]
      %v1211 = vld [vmem:[%s436] sm:$0xff]
      %v1212 = vld [vmem:[%s436 + $0x8] sm:$0xff]
      %v1213 = vld [vmem:[%s436 + $0x10] sm:$0xff]
      %v1214 = vld [vmem:[%s436 + $0x18] sm:$0xff]
      %v1215 = vld [vmem:[%s436 + $0x20] sm:$0xff]
      %v1216 = vld [vmem:[%s436 + $0x28] sm:$0xff]
      %v1217 = vld [vmem:[%s436 + $0x30] sm:$0xff]
      %v1218 = vld [vmem:[%s436 + $0x38] sm:$0xff]
      %1220 = vset.pattern.permute.xlu0 0
      %1221 = vperm.xlu0 %1220, %v461
      %v1222 = vpop.permute.xlu0 %1221
      %1225 = vset.pattern.permute.xlu0 0
      %1226 = vperm.xlu0 %1225, %v462
      %v1227 = vpop.permute.xlu0 %1226
      %1230 = vset.pattern.permute.xlu0 0
      %1231 = vperm.xlu0 %1230, %v463
      %v1232 = vpop.permute.xlu0 %1231
      %1235 = vset.pattern.permute.xlu0 0
      %1236 = vperm.xlu0 %1235, %v464
      %v1237 = vpop.permute.xlu0 %1236
      %vm1239 = vcmask 523264
      %v1241 = vsel %vm1239, %v1207, 0
      %v1244 = vsel %vm1239, %v1208, 0
      %v1247 = vsel %vm1239, %v1209, 0
      %v1250 = vsel %vm1239, %v1210, 0
      %1252 = vmatprep.subr.mxu0 0.0
      %1253 = vmatpush1.msra.mxu0 0.0
      %1254 = vmatprep.subr.mxu0 0.0
      %1255 = vmatpush1.msra.mxu0 0.0
      %1256 = vmatprep.subr.mxu0 0.0
      %1257 = vmatpush1.msra.mxu0 0.0
      %1258 = vmatprep.subr.mxu0 0.0
      %1259 = vmatpush1.msra.mxu0 0.0
      %1260 = vmatprep.subr.mxu0 0.0
      %1261 = vmatpush1.msra.mxu0 0.0
      %1262 = vmatprep.subr.mxu0 0.0
      %1263 = vmatpush1.msra.mxu0 0.0
      %1264 = vmatprep.subr.mxu0 0.0
      %1265 = vmatpush1.msra.mxu0 0.0
      %1266 = vmatprep.subr.mxu0 0.0
      %1267 = vmatpush1.msra.mxu0 0.0
      %1268 = vmatprep.subr.mxu0 0.0
      %1269 = vmatpush1.msra.mxu0 %v1218
      %1270 = vmatprep.subr.mxu0 0.0
      %1271 = vmatpush1.msra.mxu0 %v1217
      %1272 = vmatprep.subr.mxu0 0.0
      %1273 = vmatpush1.msra.mxu0 %v1216
      %1274 = vmatprep.subr.mxu0 0.0
      %1275 = vmatpush1.msra.mxu0 %v1215
      %1276 = vmatprep.subr.mxu0 0.0
      %1277 = vmatpush1.msra.mxu0 %v1214
      %1278 = vmatprep.subr.mxu0 0.0
      %1279 = vmatpush1.msra.mxu0 %v1213
      %1280 = vmatprep.subr.mxu0 0.0
      %1281 = vmatpush1.msra.mxu0 %v1212
      %1282 = vmatprep.subr.mxu0 0.0
      %1283 = vmatpush1.msra.mxu0 %v1211
      %1284 = vmatprep.subr.mxu0 0.0
      %1285 = vmatpush2.msra.mxu0 0.0
      %1286 = vmatprep.subr.mxu0 0.0
      %1287 = vmatpush2.msra.mxu0 0.0
      %1288 = vmatprep.subr.mxu0 0.0
      %1289 = vmatpush2.msra.mxu0 0.0
      %1290 = vmatprep.subr.mxu0 0.0
      %1291 = vmatpush2.msra.mxu0 0.0
      %1292 = vmatprep.subr.mxu0 0.0
      %1293 = vmatpush2.msra.mxu0 0.0
      %1294 = vmatprep.subr.mxu0 0.0
      %1295 = vmatpush2.msra.mxu0 0.0
      %1296 = vmatprep.subr.mxu0 0.0
      %1297 = vmatpush2.msra.mxu0 0.0
      %1298 = vmatprep.subr.mxu0 0.0
      %1299 = vmatpush2.msra.mxu0 0.0
      %1300 = vmatprep.subr.mxu0 0.0
      %1301 = vmatpush2.msra.mxu0 0.0
      %1302 = vmatprep.subr.mxu0 0.0
      %1303 = vmatpush2.msra.mxu0 0.0
      %1304 = vmatprep.subr.mxu0 0.0
      %1305 = vmatpush2.msra.mxu0 0.0
      %1306 = vmatprep.subr.mxu0 0.0
      %1307 = vmatpush2.msra.mxu0 0.0
      %1308 = vmatprep.subr.mxu0 0.0
      %1309 = vmatpush2.msra.mxu0 0.0
      %1310 = vmatprep.subr.mxu0 0.0
      %1311 = vmatpush2.msra.mxu0 0.0
      %1312 = vmatprep.subr.mxu0 0.0
      %1313 = vmatpush2.msra.mxu0 0.0
      %1314 = vmatprep.subr.mxu0 0.0
      %1315 = vmatpush2.msra.mxu0 0.0
      %1316 = vmatprep.mubr.f32.mxu0 0.0
      %1317 = vmatmul.mubr.f32.gmra.mxu0 %v1241
      %v1318 = vpop.f32.mrf.mxu0
      %v1319 = vadd.f32 %v1222, %v1318
      %v1320 = vpop.f32.mrf.mxu0
      %1321 = vmatprep.mubr.f32.mxu0 0.0
      %1322 = vmatmul.mubr.f32.gmra.mxu0 %v1244
      %v1323 = vpop.f32.mrf.mxu0
      %v1324 = vadd.f32 %v1227, %v1323
      %v1325 = vpop.f32.mrf.mxu0
      %1326 = vmatprep.mubr.f32.mxu0 0.0
      %1327 = vmatmul.mubr.f32.gmra.mxu0 %v1247
      %v1328 = vpop.f32.mrf.mxu0
      %v1329 = vadd.f32 %v1232, %v1328
      %v1330 = vpop.f32.mrf.mxu0
      %1331 = vmatprep.mubr.f32.mxu0 0.0
      %1332 = vmatmul.mubr.f32.gmra.mxu0 %v1250
      %v1333 = vpop.f32.mrf.mxu0
      %v1334 = vadd.f32 %v1237, %v1333
      %v1335 = vpop.f32.mrf.mxu0
      %1336 = vdwg.mxu0
      %v1337 = vadd.f32 %v1319, %v1188
      %v1338 = vadd.f32 %v1324, %v1193
      %v1339 = vadd.f32 %v1329, %v1198
      %v1340 = vadd.f32 %v1334, %v1203
      %1345 = vrot.lane.b32.xlu0 %v1337, 5
      %v1346 = vpop.permute.xlu0 %1345
      %1347 = vrot.lane.b32.xlu0 %v1338, 5
      %v1348 = vpop.permute.xlu0 %1347
      %1349 = vrot.lane.b32.xlu0 %v1339, 5
      %v1350 = vpop.permute.xlu0 %1349
      %1351 = vrot.lane.b32.xlu0 %v1340, 5
      %v1352 = vpop.permute.xlu0 %1351
      %vm1357 = vcmask 39936
      %v1358 = vsel %vm1357, 0.0, %v1346
      %v1359 = vsel %vm1357, 0.0, %v1348
      %v1360 = vsel %vm1357, 0.0, %v1350
      %v1361 = vsel %vm1357, 0.0, %v1352
      %vm1362 = vcmask 171008
      %v1363 = vsel %vm1362, %v1358, 0.0
      %v1364 = vsel %vm1362, %v1359, 0.0
      %v1365 = vsel %vm1362, %v1360, 0.0
      %v1366 = vsel %vm1362, %v1361, 0.0
      %1367 = vrot.lane.b32.xlu0 %v624, 64
      %v1368 = vpop.permute.xlu0 %1367
      %v1370 = vmul.f32 %v1363, %v1368
      %v1371 = vmul.f32 %v1364, %v1368
      %v1372 = vmul.f32 %v1365, %v1368
      %v1373 = vmul.f32 %v1366, %v1368
      %1374 = vrot.lane.b32.xlu0 %v636, 65
      %v1375 = vpop.permute.xlu0 %1374
      %v1377 = vmul.f32 %v1363, %v1375
      %v1378 = vmul.f32 %v1364, %v1375
      %v1379 = vmul.f32 %v1365, %v1375
      %v1380 = vmul.f32 %v1366, %v1375
      %1381 = vrot.lane.b32.xlu0 %v648, 66
      %v1382 = vpop.permute.xlu0 %1381
      %v1384 = vmul.f32 %v1363, %v1382
      %v1385 = vmul.f32 %v1364, %v1382
      %v1386 = vmul.f32 %v1365, %v1382
      %v1387 = vmul.f32 %v1366, %v1382
      %1388 = vrot.lane.b32.xlu0 %v660, 68
      %v1389 = vpop.permute.xlu0 %1388
      %v1391 = vmul.f32 %v1363, %v1389
      %v1392 = vmul.f32 %v1364, %v1389
      %v1393 = vmul.f32 %v1365, %v1389
      %v1394 = vmul.f32 %v1366, %v1389
      %1395 = vrot.lane.b32.xlu0 %v672, 69
      %v1396 = vpop.permute.xlu0 %1395
      %v1398 = vmul.f32 %v1363, %v1396
      %v1399 = vmul.f32 %v1364, %v1396
      %v1400 = vmul.f32 %v1365, %v1396
      %v1401 = vmul.f32 %v1366, %v1396
      %1402 = vrot.lane.b32.xlu0 %v684, 70
      %v1403 = vpop.permute.xlu0 %1402
      %v1405 = vmul.f32 %v1363, %v1403
      %v1406 = vmul.f32 %v1364, %v1403
      %v1407 = vmul.f32 %v1365, %v1403
      %v1408 = vmul.f32 %v1366, %v1403
      %1409 = vrot.lane.b32.xlu0 %v696, 72
      %v1410 = vpop.permute.xlu0 %1409
      %v1412 = vmul.f32 %v1363, %v1410
      %v1413 = vmul.f32 %v1364, %v1410
      %v1414 = vmul.f32 %v1365, %v1410
      %v1415 = vmul.f32 %v1366, %v1410
      %1416 = vrot.lane.b32.xlu0 %v708, 73
      %v1417 = vpop.permute.xlu0 %1416
      %v1419 = vmul.f32 %v1363, %v1417
      %v1420 = vmul.f32 %v1364, %v1417
      %v1421 = vmul.f32 %v1365, %v1417
      %v1422 = vmul.f32 %v1366, %v1417
      %1423 = vrot.lane.b32.xlu0 %v720, 74
      %v1424 = vpop.permute.xlu0 %1423
      %v1426 = vmul.f32 %v1363, %v1424
      %v1427 = vmul.f32 %v1364, %v1424
      %v1428 = vmul.f32 %v1365, %v1424
      %v1429 = vmul.f32 %v1366, %v1424
      %1434 = vrot.lane.b32.xlu0 %v1377, 127
      %v1435 = vpop.permute.xlu0 %1434
      %1436 = vrot.lane.b32.xlu0 %v1378, 127
      %v1437 = vpop.permute.xlu0 %1436
      %1438 = vrot.lane.b32.xlu0 %v1379, 127
      %v1439 = vpop.permute.xlu0 %1438
      %1440 = vrot.lane.b32.xlu0 %v1380, 127
      %v1441 = vpop.permute.xlu0 %1440
      %1450 = vrot.lane.b32.xlu0 %v1384, 126
      %v1451 = vpop.permute.xlu0 %1450
      %1452 = vrot.lane.b32.xlu0 %v1385, 126
      %v1453 = vpop.permute.xlu0 %1452
      %1454 = vrot.lane.b32.xlu0 %v1386, 126
      %v1455 = vpop.permute.xlu0 %1454
      %1456 = vrot.lane.b32.xlu0 %v1387, 126
      %v1457 = vpop.permute.xlu0 %1456
      %1466 = vrot.lane.b32.xlu0 %v1391, 124
      %v1467 = vpop.permute.xlu0 %1466
      %1468 = vrot.lane.b32.xlu0 %v1392, 124
      %v1469 = vpop.permute.xlu0 %1468
      %1470 = vrot.lane.b32.xlu0 %v1393, 124
      %v1471 = vpop.permute.xlu0 %1470
      %1472 = vrot.lane.b32.xlu0 %v1394, 124
      %v1473 = vpop.permute.xlu0 %1472
      %1482 = vrot.lane.b32.xlu0 %v1398, 123
      %v1483 = vpop.permute.xlu0 %1482
      %1484 = vrot.lane.b32.xlu0 %v1399, 123
      %v1485 = vpop.permute.xlu0 %1484
      %1486 = vrot.lane.b32.xlu0 %v1400, 123
      %v1487 = vpop.permute.xlu0 %1486
      %1488 = vrot.lane.b32.xlu0 %v1401, 123
      %v1489 = vpop.permute.xlu0 %1488
      %1498 = vrot.lane.b32.xlu0 %v1405, 122
      %v1499 = vpop.permute.xlu0 %1498
      %1500 = vrot.lane.b32.xlu0 %v1406, 122
      %v1501 = vpop.permute.xlu0 %1500
      %1502 = vrot.lane.b32.xlu0 %v1407, 122
      %v1503 = vpop.permute.xlu0 %1502
      %1504 = vrot.lane.b32.xlu0 %v1408, 122
      %v1505 = vpop.permute.xlu0 %1504
      %1514 = vrot.lane.b32.xlu0 %v1412, 120
      %v1515 = vpop.permute.xlu0 %1514
      %1516 = vrot.lane.b32.xlu0 %v1413, 120
      %v1517 = vpop.permute.xlu0 %1516
      %1518 = vrot.lane.b32.xlu0 %v1414, 120
      %v1519 = vpop.permute.xlu0 %1518
      %1520 = vrot.lane.b32.xlu0 %v1415, 120
      %v1521 = vpop.permute.xlu0 %1520
      %1530 = vrot.lane.b32.xlu0 %v1419, 119
      %v1531 = vpop.permute.xlu0 %1530
      %1532 = vrot.lane.b32.xlu0 %v1420, 119
      %v1533 = vpop.permute.xlu0 %1532
      %1534 = vrot.lane.b32.xlu0 %v1421, 119
      %v1535 = vpop.permute.xlu0 %1534
      %1536 = vrot.lane.b32.xlu0 %v1422, 119
      %v1537 = vpop.permute.xlu0 %1536
      %1546 = vrot.lane.b32.xlu0 %v1426, 118
      %v1547 = vpop.permute.xlu0 %1546
      %1548 = vrot.lane.b32.xlu0 %v1427, 118
      %v1549 = vpop.permute.xlu0 %1548
      %1550 = vrot.lane.b32.xlu0 %v1428, 118
      %v1551 = vpop.permute.xlu0 %1550
      %1552 = vrot.lane.b32.xlu0 %v1429, 118
      %v1553 = vpop.permute.xlu0 %1552
      %s1558 = scalar_lea.vmem %s6, 192
      %v1559 = vld [vmem:[%s1558] sm:$0xff]
      %v1560 = vld [vmem:[%s1558 + $0x8] sm:$0xff]
      %v1561 = vld [vmem:[%s1558 + $0x10] sm:$0xff]
      %v1562 = vld [vmem:[%s1558 + $0x18] sm:$0xff]
      %v1563 = vld [vmem:[%s1558 + $0x20] sm:$0xff]
      %v1564 = vld [vmem:[%s1558 + $0x28] sm:$0xff]
      %v1565 = vld [vmem:[%s1558 + $0x30] sm:$0xff]
      %v1566 = vld [vmem:[%s1558 + $0x38] sm:$0xff]
      %v1567 = vld [vmem:[%s1558 + $0x40] sm:$0xff]
      %v1568 = vld [vmem:[%s1558 + $0x48] sm:$0xff]
      %v1569 = vld [vmem:[%s1558 + $0x50] sm:$0xff]
      %v1570 = vld [vmem:[%s1558 + $0x58] sm:$0xff]
      %1571 = vset.pattern.permute.xlu0 1
      %1572 = vperm.xlu0 %1571, %v461
      %v1573 = vpop.permute.xlu0 %1572
      %1575 = vset.pattern.permute.xlu0 1
      %1576 = vperm.xlu0 %1575, %v462
      %v1577 = vpop.permute.xlu0 %1576
      %1579 = vset.pattern.permute.xlu0 1
      %1580 = vperm.xlu0 %1579, %v463
      %v1581 = vpop.permute.xlu0 %1580
      %1583 = vset.pattern.permute.xlu0 1
      %1584 = vperm.xlu0 %1583, %v464
      %v1585 = vpop.permute.xlu0 %1584
      %v1588 = vsel %vm886, %v1561, 0
      %v1591 = vsel %vm886, %v1564, 0
      %v1594 = vsel %vm886, %v1567, 0
      %v1597 = vsel %vm886, %v1570, 0
      %1599 = vmatprep.subr.mxu0 0.0
      %1600 = vmatpush1.msra.mxu0 %v1473
      %1601 = vmatprep.subr.mxu0 0.0
      %1602 = vmatpush1.msra.mxu0 %v1471
      %1603 = vmatprep.subr.mxu0 0.0
      %1604 = vmatpush1.msra.mxu0 %v1469
      %1605 = vmatprep.subr.mxu0 0.0
      %1606 = vmatpush1.msra.mxu0 %v1467
      %1607 = vmatprep.subr.mxu0 0.0
      %1608 = vmatpush1.msra.mxu0 %v1457
      %1609 = vmatprep.subr.mxu0 0.0
      %1610 = vmatpush1.msra.mxu0 %v1455
      %1611 = vmatprep.subr.mxu0 0.0
      %1612 = vmatpush1.msra.mxu0 %v1453
      %1613 = vmatprep.subr.mxu0 0.0
      %1614 = vmatpush1.msra.mxu0 %v1451
      %1615 = vmatprep.subr.mxu0 0.0
      %1616 = vmatpush1.msra.mxu0 %v1441
      %1617 = vmatprep.subr.mxu0 0.0
      %1618 = vmatpush1.msra.mxu0 %v1439
      %1619 = vmatprep.subr.mxu0 0.0
      %1620 = vmatpush1.msra.mxu0 %v1437
      %1621 = vmatprep.subr.mxu0 0.0
      %1622 = vmatpush1.msra.mxu0 %v1435
      %1623 = vmatprep.subr.mxu0 0.0
      %1624 = vmatpush1.msra.mxu0 %v1373
      %1625 = vmatprep.subr.mxu0 0.0
      %1626 = vmatpush1.msra.mxu0 %v1372
      %1627 = vmatprep.subr.mxu0 0.0
      %1628 = vmatpush1.msra.mxu0 %v1371
      %1629 = vmatprep.subr.mxu0 0.0
      %1630 = vmatpush1.msra.mxu0 %v1370
      %1631 = vmatprep.subr.mxu0 0.0
      %1632 = vmatpush2.msra.mxu0 %v1537
      %1633 = vmatprep.subr.mxu0 0.0
      %1634 = vmatpush2.msra.mxu0 %v1535
      %1635 = vmatprep.subr.mxu0 0.0
      %1636 = vmatpush2.msra.mxu0 %v1533
      %1637 = vmatprep.subr.mxu0 0.0
      %1638 = vmatpush2.msra.mxu0 %v1531
      %1639 = vmatprep.subr.mxu0 0.0
      %1640 = vmatpush2.msra.mxu0 %v1521
      %1641 = vmatprep.subr.mxu0 0.0
      %1642 = vmatpush2.msra.mxu0 %v1519
      %1643 = vmatprep.subr.mxu0 0.0
      %1644 = vmatpush2.msra.mxu0 %v1517
      %1645 = vmatprep.subr.mxu0 0.0
      %1646 = vmatpush2.msra.mxu0 %v1515
      %1647 = vmatprep.subr.mxu0 0.0
      %1648 = vmatpush2.msra.mxu0 %v1505
      %1649 = vmatprep.subr.mxu0 0.0
      %1650 = vmatpush2.msra.mxu0 %v1503
      %1651 = vmatprep.subr.mxu0 0.0
      %1652 = vmatpush2.msra.mxu0 %v1501
      %1653 = vmatprep.subr.mxu0 0.0
      %1654 = vmatpush2.msra.mxu0 %v1499
      %1655 = vmatprep.subr.mxu0 0.0
      %1656 = vmatpush2.msra.mxu0 %v1489
      %1657 = vmatprep.subr.mxu0 0.0
      %1658 = vmatpush2.msra.mxu0 %v1487
      %1659 = vmatprep.subr.mxu0 0.0
      %1660 = vmatpush2.msra.mxu0 %v1485
      %1661 = vmatprep.subr.mxu0 0.0
      %1662 = vmatpush2.msra.mxu0 %v1483
      %1663 = vmatprep.mubr.f32.mxu0 %v1560
      %1664 = vmatmul.mubr.f32.gmra.mxu0 %v1559
      %v1665 = vpop.f32.mrf.mxu0
      %v1666 = vadd.f32 %v1573, %v1665
      %v1667 = vpop.f32.mrf.mxu0
      %1668 = vmatprep.mubr.f32.mxu0 %v1563
      %1669 = vmatmul.mubr.f32.gmra.mxu0 %v1562
      %v1670 = vpop.f32.mrf.mxu0
      %v1671 = vadd.f32 %v1577, %v1670
      %v1672 = vpop.f32.mrf.mxu0
      %1673 = vmatprep.mubr.f32.mxu0 %v1566
      %1674 = vmatmul.mubr.f32.gmra.mxu0 %v1565
      %v1675 = vpop.f32.mrf.mxu0
      %v1676 = vadd.f32 %v1581, %v1675
      %v1677 = vpop.f32.mrf.mxu0
      %1678 = vmatprep.mubr.f32.mxu0 %v1569
      %1679 = vmatmul.mubr.f32.gmra.mxu0 %v1568
      %v1680 = vpop.f32.mrf.mxu0
      %v1681 = vadd.f32 %v1585, %v1680
      %v1682 = vpop.f32.mrf.mxu0
      %1683 = vdwg.mxu0
      %1684 = vmatprep.subr.mxu0 0.0
      %1685 = vmatpush1.msra.mxu0 0.0
      %1686 = vmatprep.subr.mxu0 0.0
      %1687 = vmatpush1.msra.mxu0 0.0
      %1688 = vmatprep.subr.mxu0 0.0
      %1689 = vmatpush1.msra.mxu0 0.0
      %1690 = vmatprep.subr.mxu0 0.0
      %1691 = vmatpush1.msra.mxu0 0.0
      %1692 = vmatprep.subr.mxu0 0.0
      %1693 = vmatpush1.msra.mxu0 0.0
      %1694 = vmatprep.subr.mxu0 0.0
      %1695 = vmatpush1.msra.mxu0 0.0
      %1696 = vmatprep.subr.mxu0 0.0
      %1697 = vmatpush1.msra.mxu0 0.0
      %1698 = vmatprep.subr.mxu0 0.0
      %1699 = vmatpush1.msra.mxu0 0.0
      %1700 = vmatprep.subr.mxu0 0.0
      %1701 = vmatpush1.msra.mxu0 0.0
      %1702 = vmatprep.subr.mxu0 0.0
      %1703 = vmatpush1.msra.mxu0 0.0
      %1704 = vmatprep.subr.mxu0 0.0
      %1705 = vmatpush1.msra.mxu0 0.0
      %1706 = vmatprep.subr.mxu0 0.0
      %1707 = vmatpush1.msra.mxu0 0.0
      %1708 = vmatprep.subr.mxu0 0.0
      %1709 = vmatpush1.msra.mxu0 %v1553
      %1710 = vmatprep.subr.mxu0 0.0
      %1711 = vmatpush1.msra.mxu0 %v1551
      %1712 = vmatprep.subr.mxu0 0.0
      %1713 = vmatpush1.msra.mxu0 %v1549
      %1714 = vmatprep.subr.mxu0 0.0
      %1715 = vmatpush1.msra.mxu0 %v1547
      %1716 = vmatprep.subr.mxu0 0.0
      %1717 = vmatpush2.msra.mxu0 0.0
      %1718 = vmatprep.subr.mxu0 0.0
      %1719 = vmatpush2.msra.mxu0 0.0
      %1720 = vmatprep.subr.mxu0 0.0
      %1721 = vmatpush2.msra.mxu0 0.0
      %1722 = vmatprep.subr.mxu0 0.0
      %1723 = vmatpush2.msra.mxu0 0.0
      %1724 = vmatprep.subr.mxu0 0.0
      %1725 = vmatpush2.msra.mxu0 0.0
      %1726 = vmatprep.subr.mxu0 0.0
      %1727 = vmatpush2.msra.mxu0 0.0
      %1728 = vmatprep.subr.mxu0 0.0
      %1729 = vmatpush2.msra.mxu0 0.0
      %1730 = vmatprep.subr.mxu0 0.0
      %1731 = vmatpush2.msra.mxu0 0.0
      %1732 = vmatprep.subr.mxu0 0.0
      %1733 = vmatpush2.msra.mxu0 0.0
      %1734 = vmatprep.subr.mxu0 0.0
      %1735 = vmatpush2.msra.mxu0 0.0
      %1736 = vmatprep.subr.mxu0 0.0
      %1737 = vmatpush2.msra.mxu0 0.0
      %1738 = vmatprep.subr.mxu0 0.0
      %1739 = vmatpush2.msra.mxu0 0.0
      %1740 = vmatprep.subr.mxu0 0.0
      %1741 = vmatpush2.msra.mxu0 0.0
      %1742 = vmatprep.subr.mxu0 0.0
      %1743 = vmatpush2.msra.mxu0 0.0
      %1744 = vmatprep.subr.mxu0 0.0
      %1745 = vmatpush2.msra.mxu0 0.0
      %1746 = vmatprep.subr.mxu0 0.0
      %1747 = vmatpush2.msra.mxu0 0.0
      %1748 = vmatprep.mubr.f32.mxu0 0.0
      %1749 = vmatmul.mubr.f32.gmra.mxu0 %v1588
      %v1750 = vpop.f32.mrf.mxu0
      %v1751 = vadd.f32 %v1666, %v1750
      %v1752 = vpop.f32.mrf.mxu0
      %1753 = vmatprep.mubr.f32.mxu0 0.0
      %1754 = vmatmul.mubr.f32.gmra.mxu0 %v1591
      %v1755 = vpop.f32.mrf.mxu0
      %v1756 = vadd.f32 %v1671, %v1755
      %v1757 = vpop.f32.mrf.mxu0
      %1758 = vmatprep.mubr.f32.mxu0 0.0
      %1759 = vmatmul.mubr.f32.gmra.mxu0 %v1594
      %v1760 = vpop.f32.mrf.mxu0
      %v1761 = vadd.f32 %v1676, %v1760
      %v1762 = vpop.f32.mrf.mxu0
      %1763 = vmatprep.mubr.f32.mxu0 0.0
      %1764 = vmatmul.mubr.f32.gmra.mxu0 %v1597
      %v1765 = vpop.f32.mrf.mxu0
      %v1766 = vadd.f32 %v1681, %v1765
      %v1767 = vpop.f32.mrf.mxu0
      %1768 = vdwg.mxu0
      %1773 = vrot.lane.b32.xlu0 %v1751, 64
      %v1774 = vpop.permute.xlu0 %1773
      %1775 = vrot.lane.b32.xlu0 %v1756, 64
      %v1776 = vpop.permute.xlu0 %1775
      %1777 = vrot.lane.b32.xlu0 %v1761, 64
      %v1778 = vpop.permute.xlu0 %1777
      %1779 = vrot.lane.b32.xlu0 %v1766, 64
      %v1780 = vpop.permute.xlu0 %1779
      %vm1785 = vcmask 654848
      %1786 = vst.msk [vmem:[%s446 + $0x10] sm:$0xff] %vm1785, %v1774
      %1787 = vst.msk [vmem:[%s446 + $0x28] sm:$0xff] %vm1785, %v1776
      %1788 = vst.msk [vmem:[%s446 + $0x40] sm:$0xff] %vm1785, %v1778
      %1789 = vst.msk [vmem:[%s446 + $0x58] sm:$0xff] %vm1785, %v1780
      %v1790 = vld [vmem:[%s9] sm:$0xff]
      %v1791 = vld [vmem:[%s9 + $0x8] sm:$0xff]
      %vm1792 = vcmask 130048
      %v1793 = vsel %vm1792, %v1337, 0
      %v1795 = vsel %vm1792, %v1338, 0
      %v1797 = vsel %vm1792, %v1339, 0
      %v1799 = vsel %vm1792, %v1340, 0
      %1801 = vmatprep.subr.mxu0 0.0
      %1802 = vmatpush1.msra.mxu0 0.0
      %1803 = vmatprep.subr.mxu0 0.0
      %1804 = vmatpush1.msra.mxu0 0.0
      %1805 = vmatprep.subr.mxu0 0.0
      %1806 = vmatpush1.msra.mxu0 0.0
      %1807 = vmatprep.subr.mxu0 0.0
      %1808 = vmatpush1.msra.mxu0 0.0
      %1809 = vmatprep.subr.mxu0 0.0
      %1810 = vmatpush1.msra.mxu0 0.0
      %1811 = vmatprep.subr.mxu0 0.0
      %1812 = vmatpush1.msra.mxu0 0.0
      %1813 = vmatprep.subr.mxu0 0.0
      %1814 = vmatpush1.msra.mxu0 0.0
      %1815 = vmatprep.subr.mxu0 0.0
      %1816 = vmatpush1.msra.mxu0 0.0
      %1817 = vmatprep.subr.mxu0 0.0
      %1818 = vmatpush1.msra.mxu0 0.0
      %1819 = vmatprep.subr.mxu0 0.0
      %1820 = vmatpush1.msra.mxu0 0.0
      %1821 = vmatprep.subr.mxu0 0.0
      %1822 = vmatpush1.msra.mxu0 0.0
      %1823 = vmatprep.subr.mxu0 0.0
      %1824 = vmatpush1.msra.mxu0 0.0
      %1825 = vmatprep.subr.mxu0 0.0
      %1826 = vmatpush1.msra.mxu0 0.0
      %1827 = vmatprep.subr.mxu0 0.0
      %1828 = vmatpush1.msra.mxu0 0.0
      %1829 = vmatprep.subr.mxu0 0.0
      %1830 = vmatpush1.msra.mxu0 %v1791
      %1831 = vmatprep.subr.mxu0 0.0
      %1832 = vmatpush1.msra.mxu0 %v1790
      %1833 = vmatprep.subr.mxu0 0.0
      %1834 = vmatpush2.msra.mxu0 0.0
      %1835 = vmatprep.subr.mxu0 0.0
      %1836 = vmatpush2.msra.mxu0 0.0
      %1837 = vmatprep.subr.mxu0 0.0
      %1838 = vmatpush2.msra.mxu0 0.0
      %1839 = vmatprep.subr.mxu0 0.0
      %1840 = vmatpush2.msra.mxu0 0.0
      %1841 = vmatprep.subr.mxu0 0.0
      %1842 = vmatpush2.msra.mxu0 0.0
      %1843 = vmatprep.subr.mxu0 0.0
      %1844 = vmatpush2.msra.mxu0 0.0
      %1845 = vmatprep.subr.mxu0 0.0
      %1846 = vmatpush2.msra.mxu0 0.0
      %1847 = vmatprep.subr.mxu0 0.0
      %1848 = vmatpush2.msra.mxu0 0.0
      %1849 = vmatprep.subr.mxu0 0.0
      %1850 = vmatpush2.msra.mxu0 0.0
      %1851 = vmatprep.subr.mxu0 0.0
      %1852 = vmatpush2.msra.mxu0 0.0
      %1853 = vmatprep.subr.mxu0 0.0
      %1854 = vmatpush2.msra.mxu0 0.0
      %1855 = vmatprep.subr.mxu0 0.0
      %1856 = vmatpush2.msra.mxu0 0.0
      %1857 = vmatprep.subr.mxu0 0.0
      %1858 = vmatpush2.msra.mxu0 0.0
      %1859 = vmatprep.subr.mxu0 0.0
      %1860 = vmatpush2.msra.mxu0 0.0
      %1861 = vmatprep.subr.mxu0 0.0
      %1862 = vmatpush2.msra.mxu0 0.0
      %1863 = vmatprep.subr.mxu0 0.0
      %1864 = vmatpush2.msra.mxu0 0.0
      %1865 = vmatprep.mubr.f32.mxu0 0.0
      %1866 = vmatmul.mubr.f32.gmra.mxu0 %v1793
      %v1867 = vpop.f32.mrf.mxu0
      %v1868 = vadd.f32 0.0, %v1867
      %v1869 = vpop.f32.mrf.mxu0
      %1870 = vmatprep.mubr.f32.mxu0 0.0
      %1871 = vmatmul.mubr.f32.gmra.mxu0 %v1795
      %v1872 = vpop.f32.mrf.mxu0
      %v1873 = vadd.f32 0.0, %v1872
      %v1874 = vpop.f32.mrf.mxu0
      %1875 = vmatprep.mubr.f32.mxu0 0.0
      %1876 = vmatmul.mubr.f32.gmra.mxu0 %v1797
      %v1877 = vpop.f32.mrf.mxu0
      %v1878 = vadd.f32 0.0, %v1877
      %v1879 = vpop.f32.mrf.mxu0
      %1880 = vmatprep.mubr.f32.mxu0 0.0
      %1881 = vmatmul.mubr.f32.gmra.mxu0 %v1799
      %v1882 = vpop.f32.mrf.mxu0
      %v1883 = vadd.f32 0.0, %v1882
      %v1884 = vpop.f32.mrf.mxu0
      %1885 = vdwg.mxu0
      %s1886 = scalar_lea.vmem %s4, 32
      %v1887 = vld [vmem:[%s1886] sm:$0xff]
      %v1888 = vld [vmem:[%s1886 + $0x8] sm:$0xff]
      %v1889 = vld [vmem:[%s1886 + $0x10] sm:$0xff]
      %v1890 = vld [vmem:[%s1886 + $0x18] sm:$0xff]
      %v1891 = vld [vmem:[%s431] sm:$0xff]
      %v1892 = vld [vmem:[%s431 + $0x8] sm:$0xff]
      %v1893 = vld [vmem:[%s431 + $0x10] sm:$0xff]
      %v1894 = vld [vmem:[%s431 + $0x18] sm:$0xff]
      %1896 = vset.pattern.permute.xlu0 0
      %1897 = vperm.xlu0 %1896, %v457
      %v1898 = vpop.permute.xlu0 %1897
      %1901 = vset.pattern.permute.xlu0 0
      %1902 = vperm.xlu0 %1901, %v458
      %v1903 = vpop.permute.xlu0 %1902
      %1906 = vset.pattern.permute.xlu0 0
      %1907 = vperm.xlu0 %1906, %v459
      %v1908 = vpop.permute.xlu0 %1907
      %1911 = vset.pattern.permute.xlu0 0
      %1912 = vperm.xlu0 %1911, %v460
      %v1913 = vpop.permute.xlu0 %1912
      %v1916 = vsel %vm886, %v1887, 0
      %v1919 = vsel %vm886, %v1888, 0
      %v1922 = vsel %vm886, %v1889, 0
      %v1925 = vsel %vm886, %v1890, 0
      %1927 = vmatprep.subr.mxu0 0.0
      %1928 = vmatpush1.msra.mxu0 0.0
      %1929 = vmatprep.subr.mxu0 0.0
      %1930 = vmatpush1.msra.mxu0 0.0
      %1931 = vmatprep.subr.mxu0 0.0
      %1932 = vmatpush1.msra.mxu0 0.0
      %1933 = vmatprep.subr.mxu0 0.0
      %1934 = vmatpush1.msra.mxu0 0.0
      %1935 = vmatprep.subr.mxu0 0.0
      %1936 = vmatpush1.msra.mxu0 0.0
      %1937 = vmatprep.subr.mxu0 0.0
      %1938 = vmatpush1.msra.mxu0 0.0
      %1939 = vmatprep.subr.mxu0 0.0
      %1940 = vmatpush1.msra.mxu0 0.0
      %1941 = vmatprep.subr.mxu0 0.0
      %1942 = vmatpush1.msra.mxu0 0.0
      %1943 = vmatprep.subr.mxu0 0.0
      %1944 = vmatpush1.msra.mxu0 0.0
      %1945 = vmatprep.subr.mxu0 0.0
      %1946 = vmatpush1.msra.mxu0 0.0
      %1947 = vmatprep.subr.mxu0 0.0
      %1948 = vmatpush1.msra.mxu0 0.0
      %1949 = vmatprep.subr.mxu0 0.0
      %1950 = vmatpush1.msra.mxu0 0.0
      %1951 = vmatprep.subr.mxu0 0.0
      %1952 = vmatpush1.msra.mxu0 %v1894
      %1953 = vmatprep.subr.mxu0 0.0
      %1954 = vmatpush1.msra.mxu0 %v1893
      %1955 = vmatprep.subr.mxu0 0.0
      %1956 = vmatpush1.msra.mxu0 %v1892
      %1957 = vmatprep.subr.mxu0 0.0
      %1958 = vmatpush1.msra.mxu0 %v1891
      %1959 = vmatprep.subr.mxu0 0.0
      %1960 = vmatpush2.msra.mxu0 0.0
      %1961 = vmatprep.subr.mxu0 0.0
      %1962 = vmatpush2.msra.mxu0 0.0
      %1963 = vmatprep.subr.mxu0 0.0
      %1964 = vmatpush2.msra.mxu0 0.0
      %1965 = vmatprep.subr.mxu0 0.0
      %1966 = vmatpush2.msra.mxu0 0.0
      %1967 = vmatprep.subr.mxu0 0.0
      %1968 = vmatpush2.msra.mxu0 0.0
      %1969 = vmatprep.subr.mxu0 0.0
      %1970 = vmatpush2.msra.mxu0 0.0
      %1971 = vmatprep.subr.mxu0 0.0
      %1972 = vmatpush2.msra.mxu0 0.0
      %1973 = vmatprep.subr.mxu0 0.0
      %1974 = vmatpush2.msra.mxu0 0.0
      %1975 = vmatprep.subr.mxu0 0.0
      %1976 = vmatpush2.msra.mxu0 0.0
      %1977 = vmatprep.subr.mxu0 0.0
      %1978 = vmatpush2.msra.mxu0 0.0
      %1979 = vmatprep.subr.mxu0 0.0
      %1980 = vmatpush2.msra.mxu0 0.0
      %1981 = vmatprep.subr.mxu0 0.0
      %1982 = vmatpush2.msra.mxu0 0.0
      %1983 = vmatprep.subr.mxu0 0.0
      %1984 = vmatpush2.msra.mxu0 0.0
      %1985 = vmatprep.subr.mxu0 0.0
      %1986 = vmatpush2.msra.mxu0 0.0
      %1987 = vmatprep.subr.mxu0 0.0
      %1988 = vmatpush2.msra.mxu0 0.0
      %1989 = vmatprep.subr.mxu0 0.0
      %1990 = vmatpush2.msra.mxu0 0.0
      %1991 = vmatprep.mubr.f32.mxu0 0.0
      %1992 = vmatmul.mubr.f32.gmra.mxu0 %v1916
      %v1993 = vpop.f32.mrf.mxu0
      %v1994 = vadd.f32 %v1898, %v1993
      %v1995 = vpop.f32.mrf.mxu0
      %1996 = vmatprep.mubr.f32.mxu0 0.0
      %1997 = vmatmul.mubr.f32.gmra.mxu0 %v1919
      %v1998 = vpop.f32.mrf.mxu0
      %v1999 = vadd.f32 %v1903, %v1998
      %v2000 = vpop.f32.mrf.mxu0
      %2001 = vmatprep.mubr.f32.mxu0 0.0
      %2002 = vmatmul.mubr.f32.gmra.mxu0 %v1922
      %v2003 = vpop.f32.mrf.mxu0
      %v2004 = vadd.f32 %v1908, %v2003
      %v2005 = vpop.f32.mrf.mxu0
      %2006 = vmatprep.mubr.f32.mxu0 0.0
      %2007 = vmatmul.mubr.f32.gmra.mxu0 %v1925
      %v2008 = vpop.f32.mrf.mxu0
      %v2009 = vadd.f32 %v1913, %v2008
      %v2010 = vpop.f32.mrf.mxu0
      %2011 = vdwg.mxu0
      %v2012 = vadd.f32 %v1994, %v1868
      %v2013 = vadd.f32 %v1999, %v1873
      %v2014 = vadd.f32 %v2004, %v1878
      %v2015 = vadd.f32 %v2009, %v1883
      %2020 = vrot.lane.b32.xlu0 %v2012, 9
      %v2021 = vpop.permute.xlu0 %2020
      %2022 = vrot.lane.b32.xlu0 %v2013, 9
      %v2023 = vpop.permute.xlu0 %2022
      %2024 = vrot.lane.b32.xlu0 %v2014, 9
      %v2025 = vpop.permute.xlu0 %2024
      %2026 = vrot.lane.b32.xlu0 %v2015, 9
      %v2027 = vpop.permute.xlu0 %2026
      %vm2032 = vcmask 72704
      %v2033 = vsel %vm2032, 0.0, %v2021
      %v2034 = vsel %vm2032, 0.0, %v2023
      %v2035 = vsel %vm2032, 0.0, %v2025
      %v2036 = vsel %vm2032, 0.0, %v2027
      %vm2037 = vcmask 596992
      %v2038 = vsel %vm2037, %v2033, 0.0
      %v2039 = vsel %vm2037, %v2034, 0.0
      %v2040 = vsel %vm2037, %v2035, 0.0
      %v2041 = vsel %vm2037, %v2036, 0.0
      %v2042 = vmul.f32 %v2038, %v624
      %v2043 = vmul.f32 %v2039, %v624
      %v2044 = vmul.f32 %v2040, %v624
      %v2045 = vmul.f32 %v2041, %v624
      %2046 = vrot.lane.b32.xlu0 %v636, 1
      %v2047 = vpop.permute.xlu0 %2046
      %v2049 = vmul.f32 %v2038, %v2047
      %v2050 = vmul.f32 %v2039, %v2047
      %v2051 = vmul.f32 %v2040, %v2047
      %v2052 = vmul.f32 %v2041, %v2047
      %2053 = vrot.lane.b32.xlu0 %v648, 2
      %v2054 = vpop.permute.xlu0 %2053
      %v2056 = vmul.f32 %v2038, %v2054
      %v2057 = vmul.f32 %v2039, %v2054
      %v2058 = vmul.f32 %v2040, %v2054
      %v2059 = vmul.f32 %v2041, %v2054
      %2060 = vrot.lane.b32.xlu0 %v660, 8
      %v2061 = vpop.permute.xlu0 %2060
      %v2063 = vmul.f32 %v2038, %v2061
      %v2064 = vmul.f32 %v2039, %v2061
      %v2065 = vmul.f32 %v2040, %v2061
      %v2066 = vmul.f32 %v2041, %v2061
      %2067 = vrot.lane.b32.xlu0 %v672, 9
      %v2068 = vpop.permute.xlu0 %2067
      %v2070 = vmul.f32 %v2038, %v2068
      %v2071 = vmul.f32 %v2039, %v2068
      %v2072 = vmul.f32 %v2040, %v2068
      %v2073 = vmul.f32 %v2041, %v2068
      %2074 = vrot.lane.b32.xlu0 %v684, 10
      %v2075 = vpop.permute.xlu0 %2074
      %v2077 = vmul.f32 %v2038, %v2075
      %v2078 = vmul.f32 %v2039, %v2075
      %v2079 = vmul.f32 %v2040, %v2075
      %v2080 = vmul.f32 %v2041, %v2075
      %2081 = vrot.lane.b32.xlu0 %v696, 16
      %v2082 = vpop.permute.xlu0 %2081
      %v2084 = vmul.f32 %v2038, %v2082
      %v2085 = vmul.f32 %v2039, %v2082
      %v2086 = vmul.f32 %v2040, %v2082
      %v2087 = vmul.f32 %v2041, %v2082
      %2088 = vrot.lane.b32.xlu0 %v708, 17
      %v2089 = vpop.permute.xlu0 %2088
      %v2091 = vmul.f32 %v2038, %v2089
      %v2092 = vmul.f32 %v2039, %v2089
      %v2093 = vmul.f32 %v2040, %v2089
      %v2094 = vmul.f32 %v2041, %v2089
      %2095 = vrot.lane.b32.xlu0 %v720, 18
      %v2096 = vpop.permute.xlu0 %2095
      %v2098 = vmul.f32 %v2038, %v2096
      %v2099 = vmul.f32 %v2039, %v2096
      %v2100 = vmul.f32 %v2040, %v2096
      %v2101 = vmul.f32 %v2041, %v2096
      %2106 = vrot.lane.b32.xlu0 %v2049, 127
      %v2107 = vpop.permute.xlu0 %2106
      %2108 = vrot.lane.b32.xlu0 %v2050, 127
      %v2109 = vpop.permute.xlu0 %2108
      %2110 = vrot.lane.b32.xlu0 %v2051, 127
      %v2111 = vpop.permute.xlu0 %2110
      %2112 = vrot.lane.b32.xlu0 %v2052, 127
      %v2113 = vpop.permute.xlu0 %2112
      %2122 = vrot.lane.b32.xlu0 %v2056, 126
      %v2123 = vpop.permute.xlu0 %2122
      %2124 = vrot.lane.b32.xlu0 %v2057, 126
      %v2125 = vpop.permute.xlu0 %2124
      %2126 = vrot.lane.b32.xlu0 %v2058, 126
      %v2127 = vpop.permute.xlu0 %2126
      %2128 = vrot.lane.b32.xlu0 %v2059, 126
      %v2129 = vpop.permute.xlu0 %2128
      %2138 = vrot.lane.b32.xlu0 %v2063, 120
      %v2139 = vpop.permute.xlu0 %2138
      %2140 = vrot.lane.b32.xlu0 %v2064, 120
      %v2141 = vpop.permute.xlu0 %2140
      %2142 = vrot.lane.b32.xlu0 %v2065, 120
      %v2143 = vpop.permute.xlu0 %2142
      %2144 = vrot.lane.b32.xlu0 %v2066, 120
      %v2145 = vpop.permute.xlu0 %2144
      %2154 = vrot.lane.b32.xlu0 %v2070, 119
      %v2155 = vpop.permute.xlu0 %2154
      %2156 = vrot.lane.b32.xlu0 %v2071, 119
      %v2157 = vpop.permute.xlu0 %2156
      %2158 = vrot.lane.b32.xlu0 %v2072, 119
      %v2159 = vpop.permute.xlu0 %2158
      %2160 = vrot.lane.b32.xlu0 %v2073, 119
      %v2161 = vpop.permute.xlu0 %2160
      %2170 = vrot.lane.b32.xlu0 %v2077, 118
      %v2171 = vpop.permute.xlu0 %2170
      %2172 = vrot.lane.b32.xlu0 %v2078, 118
      %v2173 = vpop.permute.xlu0 %2172
      %2174 = vrot.lane.b32.xlu0 %v2079, 118
      %v2175 = vpop.permute.xlu0 %2174
      %2176 = vrot.lane.b32.xlu0 %v2080, 118
      %v2177 = vpop.permute.xlu0 %2176
      %2186 = vrot.lane.b32.xlu0 %v2084, 112
      %v2187 = vpop.permute.xlu0 %2186
      %2188 = vrot.lane.b32.xlu0 %v2085, 112
      %v2189 = vpop.permute.xlu0 %2188
      %2190 = vrot.lane.b32.xlu0 %v2086, 112
      %v2191 = vpop.permute.xlu0 %2190
      %2192 = vrot.lane.b32.xlu0 %v2087, 112
      %v2193 = vpop.permute.xlu0 %2192
      %2202 = vrot.lane.b32.xlu0 %v2091, 111
      %v2203 = vpop.permute.xlu0 %2202
      %2204 = vrot.lane.b32.xlu0 %v2092, 111
      %v2205 = vpop.permute.xlu0 %2204
      %2206 = vrot.lane.b32.xlu0 %v2093, 111
      %v2207 = vpop.permute.xlu0 %2206
      %2208 = vrot.lane.b32.xlu0 %v2094, 111
      %v2209 = vpop.permute.xlu0 %2208
      %2218 = vrot.lane.b32.xlu0 %v2098, 110
      %v2219 = vpop.permute.xlu0 %2218
      %2220 = vrot.lane.b32.xlu0 %v2099, 110
      %v2221 = vpop.permute.xlu0 %2220
      %2222 = vrot.lane.b32.xlu0 %v2100, 110
      %v2223 = vpop.permute.xlu0 %2222
      %2224 = vrot.lane.b32.xlu0 %v2101, 110
      %v2225 = vpop.permute.xlu0 %2224
      %s2230 = scalar_lea.vmem %s6, 96
      %v2231 = vld [vmem:[%s2230] sm:$0xff]
      %v2232 = vld [vmem:[%s2230 + $0x8] sm:$0xff]
      %v2233 = vld [vmem:[%s2230 + $0x10] sm:$0xff]
      %v2234 = vld [vmem:[%s2230 + $0x18] sm:$0xff]
      %v2235 = vld [vmem:[%s2230 + $0x20] sm:$0xff]
      %v2236 = vld [vmem:[%s2230 + $0x28] sm:$0xff]
      %v2237 = vld [vmem:[%s2230 + $0x30] sm:$0xff]
      %v2238 = vld [vmem:[%s2230 + $0x38] sm:$0xff]
      %v2239 = vld [vmem:[%s2230 + $0x40] sm:$0xff]
      %v2240 = vld [vmem:[%s2230 + $0x48] sm:$0xff]
      %v2241 = vld [vmem:[%s2230 + $0x50] sm:$0xff]
      %v2242 = vld [vmem:[%s2230 + $0x58] sm:$0xff]
      %2243 = vset.pattern.permute.xlu0 1
      %2244 = vperm.xlu0 %2243, %v457
      %v2245 = vpop.permute.xlu0 %2244
      %2247 = vset.pattern.permute.xlu0 1
      %2248 = vperm.xlu0 %2247, %v458
      %v2249 = vpop.permute.xlu0 %2248
      %2251 = vset.pattern.permute.xlu0 1
      %2252 = vperm.xlu0 %2251, %v459
      %v2253 = vpop.permute.xlu0 %2252
      %2255 = vset.pattern.permute.xlu0 1
      %2256 = vperm.xlu0 %2255, %v460
      %v2257 = vpop.permute.xlu0 %2256
      %v2260 = vsel %vm886, %v2233, 0
      %v2263 = vsel %vm886, %v2236, 0
      %v2266 = vsel %vm886, %v2239, 0
      %v2269 = vsel %vm886, %v2242, 0
      %2271 = vmatprep.subr.mxu0 0.0
      %2272 = vmatpush1.msra.mxu0 %v2145
      %2273 = vmatprep.subr.mxu0 0.0
      %2274 = vmatpush1.msra.mxu0 %v2143
      %2275 = vmatprep.subr.mxu0 0.0
      %2276 = vmatpush1.msra.mxu0 %v2141
      %2277 = vmatprep.subr.mxu0 0.0
      %2278 = vmatpush1.msra.mxu0 %v2139
      %2279 = vmatprep.subr.mxu0 0.0
      %2280 = vmatpush1.msra.mxu0 %v2129
      %2281 = vmatprep.subr.mxu0 0.0
      %2282 = vmatpush1.msra.mxu0 %v2127
      %2283 = vmatprep.subr.mxu0 0.0
      %2284 = vmatpush1.msra.mxu0 %v2125
      %2285 = vmatprep.subr.mxu0 0.0
      %2286 = vmatpush1.msra.mxu0 %v2123
      %2287 = vmatprep.subr.mxu0 0.0
      %2288 = vmatpush1.msra.mxu0 %v2113
      %2289 = vmatprep.subr.mxu0 0.0
      %2290 = vmatpush1.msra.mxu0 %v2111
      %2291 = vmatprep.subr.mxu0 0.0
      %2292 = vmatpush1.msra.mxu0 %v2109
      %2293 = vmatprep.subr.mxu0 0.0
      %2294 = vmatpush1.msra.mxu0 %v2107
      %2295 = vmatprep.subr.mxu0 0.0
      %2296 = vmatpush1.msra.mxu0 %v2045
      %2297 = vmatprep.subr.mxu0 0.0
      %2298 = vmatpush1.msra.mxu0 %v2044
      %2299 = vmatprep.subr.mxu0 0.0
      %2300 = vmatpush1.msra.mxu0 %v2043
      %2301 = vmatprep.subr.mxu0 0.0
      %2302 = vmatpush1.msra.mxu0 %v2042
      %2303 = vmatprep.subr.mxu0 0.0
      %2304 = vmatpush2.msra.mxu0 %v2209
      %2305 = vmatprep.subr.mxu0 0.0
      %2306 = vmatpush2.msra.mxu0 %v2207
      %2307 = vmatprep.subr.mxu0 0.0
      %2308 = vmatpush2.msra.mxu0 %v2205
      %2309 = vmatprep.subr.mxu0 0.0
      %2310 = vmatpush2.msra.mxu0 %v2203
      %2311 = vmatprep.subr.mxu0 0.0
      %2312 = vmatpush2.msra.mxu0 %v2193
      %2313 = vmatprep.subr.mxu0 0.0
      %2314 = vmatpush2.msra.mxu0 %v2191
      %2315 = vmatprep.subr.mxu0 0.0
      %2316 = vmatpush2.msra.mxu0 %v2189
      %2317 = vmatprep.subr.mxu0 0.0
      %2318 = vmatpush2.msra.mxu0 %v2187
      %2319 = vmatprep.subr.mxu0 0.0
      %2320 = vmatpush2.msra.mxu0 %v2177
      %2321 = vmatprep.subr.mxu0 0.0
      %2322 = vmatpush2.msra.mxu0 %v2175
      %2323 = vmatprep.subr.mxu0 0.0
      %2324 = vmatpush2.msra.mxu0 %v2173
      %2325 = vmatprep.subr.mxu0 0.0
      %2326 = vmatpush2.msra.mxu0 %v2171
      %2327 = vmatprep.subr.mxu0 0.0
      %2328 = vmatpush2.msra.mxu0 %v2161
      %2329 = vmatprep.subr.mxu0 0.0
      %2330 = vmatpush2.msra.mxu0 %v2159
      %2331 = vmatprep.subr.mxu0 0.0
      %2332 = vmatpush2.msra.mxu0 %v2157
      %2333 = vmatprep.subr.mxu0 0.0
      %2334 = vmatpush2.msra.mxu0 %v2155
      %2335 = vmatprep.mubr.f32.mxu0 %v2232
      %2336 = vmatmul.mubr.f32.gmra.mxu0 %v2231
      %v2337 = vpop.f32.mrf.mxu0
      %v2338 = vadd.f32 %v2245, %v2337
      %v2339 = vpop.f32.mrf.mxu0
      %2340 = vmatprep.mubr.f32.mxu0 %v2235
      %2341 = vmatmul.mubr.f32.gmra.mxu0 %v2234
      %v2342 = vpop.f32.mrf.mxu0
      %v2343 = vadd.f32 %v2249, %v2342
      %v2344 = vpop.f32.mrf.mxu0
      %2345 = vmatprep.mubr.f32.mxu0 %v2238
      %2346 = vmatmul.mubr.f32.gmra.mxu0 %v2237
      %v2347 = vpop.f32.mrf.mxu0
      %v2348 = vadd.f32 %v2253, %v2347
      %v2349 = vpop.f32.mrf.mxu0
      %2350 = vmatprep.mubr.f32.mxu0 %v2241
      %2351 = vmatmul.mubr.f32.gmra.mxu0 %v2240
      %v2352 = vpop.f32.mrf.mxu0
      %v2353 = vadd.f32 %v2257, %v2352
      %v2354 = vpop.f32.mrf.mxu0
      %2355 = vdwg.mxu0
      %2356 = vmatprep.subr.mxu0 0.0
      %2357 = vmatpush1.msra.mxu0 0.0
      %2358 = vmatprep.subr.mxu0 0.0
      %2359 = vmatpush1.msra.mxu0 0.0
      %2360 = vmatprep.subr.mxu0 0.0
      %2361 = vmatpush1.msra.mxu0 0.0
      %2362 = vmatprep.subr.mxu0 0.0
      %2363 = vmatpush1.msra.mxu0 0.0
      %2364 = vmatprep.subr.mxu0 0.0
      %2365 = vmatpush1.msra.mxu0 0.0
      %2366 = vmatprep.subr.mxu0 0.0
      %2367 = vmatpush1.msra.mxu0 0.0
      %2368 = vmatprep.subr.mxu0 0.0
      %2369 = vmatpush1.msra.mxu0 0.0
      %2370 = vmatprep.subr.mxu0 0.0
      %2371 = vmatpush1.msra.mxu0 0.0
      %2372 = vmatprep.subr.mxu0 0.0
      %2373 = vmatpush1.msra.mxu0 0.0
      %2374 = vmatprep.subr.mxu0 0.0
      %2375 = vmatpush1.msra.mxu0 0.0
      %2376 = vmatprep.subr.mxu0 0.0
      %2377 = vmatpush1.msra.mxu0 0.0
      %2378 = vmatprep.subr.mxu0 0.0
      %2379 = vmatpush1.msra.mxu0 0.0
      %2380 = vmatprep.subr.mxu0 0.0
      %2381 = vmatpush1.msra.mxu0 %v2225
      %2382 = vmatprep.subr.mxu0 0.0
      %2383 = vmatpush1.msra.mxu0 %v2223
      %2384 = vmatprep.subr.mxu0 0.0
      %2385 = vmatpush1.msra.mxu0 %v2221
      %2386 = vmatprep.subr.mxu0 0.0
      %2387 = vmatpush1.msra.mxu0 %v2219
      %2388 = vmatprep.subr.mxu0 0.0
      %2389 = vmatpush2.msra.mxu0 0.0
      %2390 = vmatprep.subr.mxu0 0.0
      %2391 = vmatpush2.msra.mxu0 0.0
      %2392 = vmatprep.subr.mxu0 0.0
      %2393 = vmatpush2.msra.mxu0 0.0
      %2394 = vmatprep.subr.mxu0 0.0
      %2395 = vmatpush2.msra.mxu0 0.0
      %2396 = vmatprep.subr.mxu0 0.0
      %2397 = vmatpush2.msra.mxu0 0.0
      %2398 = vmatprep.subr.mxu0 0.0
      %2399 = vmatpush2.msra.mxu0 0.0
      %2400 = vmatprep.subr.mxu0 0.0
      %2401 = vmatpush2.msra.mxu0 0.0
      %2402 = vmatprep.subr.mxu0 0.0
      %2403 = vmatpush2.msra.mxu0 0.0
      %2404 = vmatprep.subr.mxu0 0.0
      %2405 = vmatpush2.msra.mxu0 0.0
      %2406 = vmatprep.subr.mxu0 0.0
      %2407 = vmatpush2.msra.mxu0 0.0
      %2408 = vmatprep.subr.mxu0 0.0
      %2409 = vmatpush2.msra.mxu0 0.0
      %2410 = vmatprep.subr.mxu0 0.0
      %2411 = vmatpush2.msra.mxu0 0.0
      %2412 = vmatprep.subr.mxu0 0.0
      %2413 = vmatpush2.msra.mxu0 0.0
      %2414 = vmatprep.subr.mxu0 0.0
      %2415 = vmatpush2.msra.mxu0 0.0
      %2416 = vmatprep.subr.mxu0 0.0
      %2417 = vmatpush2.msra.mxu0 0.0
      %2418 = vmatprep.subr.mxu0 0.0
      %2419 = vmatpush2.msra.mxu0 0.0
      %2420 = vmatprep.mubr.f32.mxu0 0.0
      %2421 = vmatmul.mubr.f32.gmra.mxu0 %v2260
      %v2422 = vpop.f32.mrf.mxu0
      %v2423 = vadd.f32 %v2338, %v2422
      %v2424 = vpop.f32.mrf.mxu0
      %2425 = vmatprep.mubr.f32.mxu0 0.0
      %2426 = vmatmul.mubr.f32.gmra.mxu0 %v2263
      %v2427 = vpop.f32.mrf.mxu0
      %v2428 = vadd.f32 %v2343, %v2427
      %v2429 = vpop.f32.mrf.mxu0
      %2430 = vmatprep.mubr.f32.mxu0 0.0
      %2431 = vmatmul.mubr.f32.gmra.mxu0 %v2266
      %v2432 = vpop.f32.mrf.mxu0
      %v2433 = vadd.f32 %v2348, %v2432
      %v2434 = vpop.f32.mrf.mxu0
      %2435 = vmatprep.mubr.f32.mxu0 0.0
      %2436 = vmatmul.mubr.f32.gmra.mxu0 %v2269
      %v2437 = vpop.f32.mrf.mxu0
      %v2438 = vadd.f32 %v2353, %v2437
      %v2439 = vpop.f32.mrf.mxu0
      %2440 = vdwg.mxu0
      %2441 = vst.msk [vmem:[%s446 + $0x10] sm:$0xff] %vm1239, %v2423
      %2442 = vst.msk [vmem:[%s446 + $0x28] sm:$0xff] %vm1239, %v2428
      %2443 = vst.msk [vmem:[%s446 + $0x40] sm:$0xff] %vm1239, %v2433
      %2444 = vst.msk [vmem:[%s446 + $0x58] sm:$0xff] %vm1239, %v2438
      %v2445 = vld [vmem:[%s8] sm:$0xff]
      %v2446 = vld [vmem:[%s8 + $0x8] sm:$0xff]
      %v2447 = vld [vmem:[%s8 + $0x10] sm:$0xff]
      %v2448 = vld [vmem:[%s8 + $0x18] sm:$0xff]
      %v2449 = vld [vmem:[%s8 + $0x20] sm:$0xff]
      %v2450 = vld [vmem:[%s8 + $0x28] sm:$0xff]
      %v2451 = vld [vmem:[%s8 + $0x30] sm:$0xff]
      %v2452 = vld [vmem:[%s8 + $0x38] sm:$0xff]
      %v2453 = vld [vmem:[%s8 + $0x40] sm:$0xff]
      %v2454 = vld [vmem:[%s8 + $0x48] sm:$0xff]
      %v2455 = vld [vmem:[%s8 + $0x50] sm:$0xff]
      %v2456 = vld [vmem:[%s8 + $0x58] sm:$0xff]
      %v2457 = vld [vmem:[%s8 + $0x60] sm:$0xff]
      %v2458 = vld [vmem:[%s8 + $0x68] sm:$0xff]
      %v2459 = vld [vmem:[%s8 + $0x70] sm:$0xff]
      %v2460 = vld [vmem:[%s8 + $0x78] sm:$0xff]
      %v2461 = vsel %vm1239, %v2012, 0
      %v2463 = vsel %vm1239, %v2013, 0
      %v2465 = vsel %vm1239, %v2014, 0
      %v2467 = vsel %vm1239, %v2015, 0
      %2469 = vmatprep.subr.mxu0 0.0
      %2470 = vmatpush1.msra.mxu0 0.0
      %2471 = vmatprep.subr.mxu0 0.0
      %2472 = vmatpush1.msra.mxu0 0.0
      %2473 = vmatprep.subr.mxu0 0.0
      %2474 = vmatpush1.msra.mxu0 0.0
      %2475 = vmatprep.subr.mxu0 0.0
      %2476 = vmatpush1.msra.mxu0 0.0
      %2477 = vmatprep.subr.mxu0 0.0
      %2478 = vmatpush1.msra.mxu0 0.0
      %2479 = vmatprep.subr.mxu0 0.0
      %2480 = vmatpush1.msra.mxu0 0.0
      %2481 = vmatprep.subr.mxu0 0.0
      %2482 = vmatpush1.msra.mxu0 0.0
      %2483 = vmatprep.subr.mxu0 0.0
      %2484 = vmatpush1.msra.mxu0 0.0
      %2485 = vmatprep.subr.mxu0 %v2460
      %2486 = vmatpush1.msra.mxu0 %v2459
      %2487 = vmatprep.subr.mxu0 %v2458
      %2488 = vmatpush1.msra.mxu0 %v2457
      %2489 = vmatprep.subr.mxu0 %v2456
      %2490 = vmatpush1.msra.mxu0 %v2455
      %2491 = vmatprep.subr.mxu0 %v2454
      %2492 = vmatpush1.msra.mxu0 %v2453
      %2493 = vmatprep.subr.mxu0 %v2452
      %2494 = vmatpush1.msra.mxu0 %v2451
      %2495 = vmatprep.subr.mxu0 %v2450
      %2496 = vmatpush1.msra.mxu0 %v2449
      %2497 = vmatprep.subr.mxu0 %v2448
      %2498 = vmatpush1.msra.mxu0 %v2447
      %2499 = vmatprep.subr.mxu0 %v2446
      %2500 = vmatpush1.msra.mxu0 %v2445
      %2501 = vmatprep.subr.mxu0 0.0
      %2502 = vmatpush2.msra.mxu0 0.0
      %2503 = vmatprep.subr.mxu0 0.0
      %2504 = vmatpush2.msra.mxu0 0.0
      %2505 = vmatprep.subr.mxu0 0.0
      %2506 = vmatpush2.msra.mxu0 0.0
      %2507 = vmatprep.subr.mxu0 0.0
      %2508 = vmatpush2.msra.mxu0 0.0
      %2509 = vmatprep.subr.mxu0 0.0
      %2510 = vmatpush2.msra.mxu0 0.0
      %2511 = vmatprep.subr.mxu0 0.0
      %2512 = vmatpush2.msra.mxu0 0.0
      %2513 = vmatprep.subr.mxu0 0.0
      %2514 = vmatpush2.msra.mxu0 0.0
      %2515 = vmatprep.subr.mxu0 0.0
      %2516 = vmatpush2.msra.mxu0 0.0
      %2517 = vmatprep.subr.mxu0 0.0
      %2518 = vmatpush2.msra.mxu0 0.0
      %2519 = vmatprep.subr.mxu0 0.0
      %2520 = vmatpush2.msra.mxu0 0.0
      %2521 = vmatprep.subr.mxu0 0.0
      %2522 = vmatpush2.msra.mxu0 0.0
      %2523 = vmatprep.subr.mxu0 0.0
      %2524 = vmatpush2.msra.mxu0 0.0
      %2525 = vmatprep.subr.mxu0 0.0
      %2526 = vmatpush2.msra.mxu0 0.0
      %2527 = vmatprep.subr.mxu0 0.0
      %2528 = vmatpush2.msra.mxu0 0.0
      %2529 = vmatprep.subr.mxu0 0.0
      %2530 = vmatpush2.msra.mxu0 0.0
      %2531 = vmatprep.subr.mxu0 0.0
      %2532 = vmatpush2.msra.mxu0 0.0
      %2533 = vmatprep.mubr.f32.mxu0 0.0
      %2534 = vmatmul.mubr.f32.gmra.mxu0 %v2461
      %v2535 = vpop.f32.mrf.mxu0
      %v2536 = vadd.f32 0.0, %v2535
      %v2537 = vpop.f32.mrf.mxu0
      %v2538 = vadd.f32 0.0, %v2537
      %2539 = vmatprep.mubr.f32.mxu0 0.0
      %2540 = vmatmul.mubr.f32.gmra.mxu0 %v2463
      %v2541 = vpop.f32.mrf.mxu0
      %v2542 = vadd.f32 0.0, %v2541
      %v2543 = vpop.f32.mrf.mxu0
      %v2544 = vadd.f32 0.0, %v2543
      %2545 = vmatprep.mubr.f32.mxu0 0.0
      %2546 = vmatmul.mubr.f32.gmra.mxu0 %v2465
      %v2547 = vpop.f32.mrf.mxu0
      %v2548 = vadd.f32 0.0, %v2547
      %v2549 = vpop.f32.mrf.mxu0
      %v2550 = vadd.f32 0.0, %v2549
      %2551 = vmatprep.mubr.f32.mxu0 0.0
      %2552 = vmatmul.mubr.f32.gmra.mxu0 %v2467
      %v2553 = vpop.f32.mrf.mxu0
      %v2554 = vadd.f32 0.0, %v2553
      %v2555 = vpop.f32.mrf.mxu0
      %v2556 = vadd.f32 0.0, %v2555
      %2557 = vdwg.mxu0
      %v2558 = vld [vmem:[%s4] sm:$0xff]
      %v2559 = vld [vmem:[%s4 + $0x8] sm:$0xff]
      %v2560 = vld [vmem:[%s4 + $0x10] sm:$0xff]
      %v2561 = vld [vmem:[%s4 + $0x18] sm:$0xff]
      %v2562 = vld [vmem:[%s426] sm:$0xff]
      %v2563 = vld [vmem:[%s426 + $0x8] sm:$0xff]
      %v2564 = vld [vmem:[%s426 + $0x10] sm:$0xff]
      %v2565 = vld [vmem:[%s426 + $0x18] sm:$0xff]
      %2567 = vset.pattern.permute.xlu0 0
      %2568 = vperm.xlu0 %2567, %v453
      %v2569 = vpop.permute.xlu0 %2568
      %2572 = vset.pattern.permute.xlu0 0
      %2573 = vperm.xlu0 %2572, %v454
      %v2574 = vpop.permute.xlu0 %2573
      %2577 = vset.pattern.permute.xlu0 0
      %2578 = vperm.xlu0 %2577, %v455
      %v2579 = vpop.permute.xlu0 %2578
      %2582 = vset.pattern.permute.xlu0 0
      %2583 = vperm.xlu0 %2582, %v456
      %v2584 = vpop.permute.xlu0 %2583
      %v2587 = vsel %vm1792, %v2558, 0
      %v2590 = vsel %vm1792, %v2559, 0
      %v2593 = vsel %vm1792, %v2560, 0
      %v2596 = vsel %vm1792, %v2561, 0
      %2598 = vmatprep.subr.mxu0 0.0
      %2599 = vmatpush1.msra.mxu0 0.0
      %2600 = vmatprep.subr.mxu0 0.0
      %2601 = vmatpush1.msra.mxu0 0.0
      %2602 = vmatprep.subr.mxu0 0.0
      %2603 = vmatpush1.msra.mxu0 0.0
      %2604 = vmatprep.subr.mxu0 0.0
      %2605 = vmatpush1.msra.mxu0 0.0
      %2606 = vmatprep.subr.mxu0 0.0
      %2607 = vmatpush1.msra.mxu0 0.0
      %2608 = vmatprep.subr.mxu0 0.0
      %2609 = vmatpush1.msra.mxu0 0.0
      %2610 = vmatprep.subr.mxu0 0.0
      %2611 = vmatpush1.msra.mxu0 0.0
      %2612 = vmatprep.subr.mxu0 0.0
      %2613 = vmatpush1.msra.mxu0 0.0
      %2614 = vmatprep.subr.mxu0 0.0
      %2615 = vmatpush1.msra.mxu0 0.0
      %2616 = vmatprep.subr.mxu0 0.0
      %2617 = vmatpush1.msra.mxu0 0.0
      %2618 = vmatprep.subr.mxu0 0.0
      %2619 = vmatpush1.msra.mxu0 0.0
      %2620 = vmatprep.subr.mxu0 0.0
      %2621 = vmatpush1.msra.mxu0 0.0
      %2622 = vmatprep.subr.mxu0 0.0
      %2623 = vmatpush1.msra.mxu0 0.0
      %2624 = vmatprep.subr.mxu0 0.0
      %2625 = vmatpush1.msra.mxu0 0.0
      %2626 = vmatprep.subr.mxu0 %v2565
      %2627 = vmatpush1.msra.mxu0 %v2564
      %2628 = vmatprep.subr.mxu0 %v2563
      %2629 = vmatpush1.msra.mxu0 %v2562
      %2630 = vmatprep.subr.mxu0 0.0
      %2631 = vmatpush2.msra.mxu0 0.0
      %2632 = vmatprep.subr.mxu0 0.0
      %2633 = vmatpush2.msra.mxu0 0.0
      %2634 = vmatprep.subr.mxu0 0.0
      %2635 = vmatpush2.msra.mxu0 0.0
      %2636 = vmatprep.subr.mxu0 0.0
      %2637 = vmatpush2.msra.mxu0 0.0
      %2638 = vmatprep.subr.mxu0 0.0
      %2639 = vmatpush2.msra.mxu0 0.0
      %2640 = vmatprep.subr.mxu0 0.0
      %2641 = vmatpush2.msra.mxu0 0.0
      %2642 = vmatprep.subr.mxu0 0.0
      %2643 = vmatpush2.msra.mxu0 0.0
      %2644 = vmatprep.subr.mxu0 0.0
      %2645 = vmatpush2.msra.mxu0 0.0
      %2646 = vmatprep.subr.mxu0 0.0
      %2647 = vmatpush2.msra.mxu0 0.0
      %2648 = vmatprep.subr.mxu0 0.0
      %2649 = vmatpush2.msra.mxu0 0.0
      %2650 = vmatprep.subr.mxu0 0.0
      %2651 = vmatpush2.msra.mxu0 0.0
      %2652 = vmatprep.subr.mxu0 0.0
      %2653 = vmatpush2.msra.mxu0 0.0
      %2654 = vmatprep.subr.mxu0 0.0
      %2655 = vmatpush2.msra.mxu0 0.0
      %2656 = vmatprep.subr.mxu0 0.0
      %2657 = vmatpush2.msra.mxu0 0.0
      %2658 = vmatprep.subr.mxu0 0.0
      %2659 = vmatpush2.msra.mxu0 0.0
      %2660 = vmatprep.subr.mxu0 0.0
      %2661 = vmatpush2.msra.mxu0 0.0
      %2662 = vmatprep.mubr.f32.mxu0 0.0
      %2663 = vmatmul.mubr.f32.gmra.mxu0 %v2587
      %v2664 = vpop.f32.mrf.mxu0
      %v2665 = vadd.f32 %v2569, %v2664
      %v2666 = vpop.f32.mrf.mxu0
      %v2667 = vadd.f32 %v2569, %v2666
      %2668 = vmatprep.mubr.f32.mxu0 0.0
      %2669 = vmatmul.mubr.f32.gmra.mxu0 %v2590
      %v2670 = vpop.f32.mrf.mxu0
      %v2671 = vadd.f32 %v2574, %v2670
      %v2672 = vpop.f32.mrf.mxu0
      %v2673 = vadd.f32 %v2574, %v2672
      %2674 = vmatprep.mubr.f32.mxu0 0.0
      %2675 = vmatmul.mubr.f32.gmra.mxu0 %v2593
      %v2676 = vpop.f32.mrf.mxu0
      %v2677 = vadd.f32 %v2579, %v2676
      %v2678 = vpop.f32.mrf.mxu0
      %v2679 = vadd.f32 %v2579, %v2678
      %2680 = vmatprep.mubr.f32.mxu0 0.0
      %2681 = vmatmul.mubr.f32.gmra.mxu0 %v2596
      %v2682 = vpop.f32.mrf.mxu0
      %v2683 = vadd.f32 %v2584, %v2682
      %v2684 = vpop.f32.mrf.mxu0
      %v2685 = vadd.f32 %v2584, %v2684
      %2686 = vdwg.mxu0
      %v2687 = vadd.f32 %v2665, %v2536
      %v2688 = vadd.f32 %v2667, %v2538
      %v2689 = vadd.f32 %v2671, %v2542
      %v2690 = vadd.f32 %v2673, %v2544
      %v2691 = vadd.f32 %v2677, %v2548
      %v2692 = vadd.f32 %v2679, %v2550
      %v2693 = vadd.f32 %v2683, %v2554
      %v2694 = vadd.f32 %v2685, %v2556
      %2703 = vrot.lane.b32.xlu0 %v2687, 17
      %v2704 = vpop.permute.xlu0 %2703
      %2705 = vrot.lane.b32.xlu0 %v2688, 17
      %v2706 = vpop.permute.xlu0 %2705
      %2707 = vrot.lane.b32.xlu0 %v2689, 17
      %v2708 = vpop.permute.xlu0 %2707
      %2709 = vrot.lane.b32.xlu0 %v2690, 17
      %v2710 = vpop.permute.xlu0 %2709
      %2711 = vrot.lane.b32.xlu0 %v2691, 17
      %v2712 = vpop.permute.xlu0 %2711
      %2713 = vrot.lane.b32.xlu0 %v2692, 17
      %v2714 = vpop.permute.xlu0 %2713
      %2715 = vrot.lane.b32.xlu0 %v2693, 17
      %v2716 = vpop.permute.xlu0 %2715
      %2717 = vrot.lane.b32.xlu0 %v2694, 17
      %v2718 = vpop.permute.xlu0 %2717
      %vm2719 = vcmask 138240
      %v2720 = vsel %vm2719, %v2704, %v2706
      %v2721 = vsel %vm2719, %v2708, %v2710
      %v2722 = vsel %vm2719, %v2712, %v2714
      %v2723 = vsel %vm2719, %v2716, %v2718
      %v2736 = vsel %vm2719, 0.0, %v2704
      %v2737 = vsel %vm2719, 0.0, %v2708
      %v2738 = vsel %vm2719, 0.0, %v2712
      %v2739 = vsel %vm2719, 0.0, %v2716
      %v2740 = vsel %vm2719, %v2706, 0.0
      %v2741 = vsel %vm2719, %v2710, 0.0
      %v2742 = vsel %vm2719, %v2714, 0.0
      %v2743 = vsel %vm2719, %v2718, 0.0
      %v2744 = vlaneseq
      %v2745 = vshrl.u32 %v2744, 7
      %v2746 = vsub.s32 0, %v2745
      %v2747 = vrot.slane %v447, %v2746
      %v2748 = vlaneseq
      %v2749 = vshrl.u32 %v2748, 7
      %v2750 = vsub.s32 0, %v2749
      %v2751 = vrot.slane %v448, %v2750
      %v2752 = vmul.f32 %v2736, %v2747
      %v2753 = vmul.f32 %v2720, %v2751
      %v2754 = vmul.f32 %v2737, %v2747
      %v2755 = vmul.f32 %v2721, %v2751
      %v2756 = vmul.f32 %v2738, %v2747
      %v2757 = vmul.f32 %v2722, %v2751
      %v2758 = vmul.f32 %v2739, %v2747
      %v2759 = vmul.f32 %v2723, %v2751
      %v2760 = vlaneseq
      %v2761 = vshrl.u32 %v2760, 7
      %v2762 = vsub.s32 1, %v2761
      %v2763 = vrot.slane %v447, %v2762
      %v2764 = vlaneseq
      %v2765 = vshrl.u32 %v2764, 7
      %v2766 = vsub.s32 1, %v2765
      %v2767 = vrot.slane %v448, %v2766
      %2770 = vrot.lane.b32.xlu0 %v2763, 1
      %v2771 = vpop.permute.xlu0 %2770
      %2772 = vrot.lane.b32.xlu0 %v2767, 1
      %v2773 = vpop.permute.xlu0 %2772
      %vm2774 = vcmask 7168
      %v2775 = vsel %vm2774, %v2771, %v2773
      %v2779 = vmul.f32 %v2736, %v2771
      %v2780 = vmul.f32 %v2720, %v2775
      %v2781 = vmul.f32 %v2740, %v2773
      %v2782 = vmul.f32 %v2737, %v2771
      %v2783 = vmul.f32 %v2721, %v2775
      %v2784 = vmul.f32 %v2741, %v2773
      %v2785 = vmul.f32 %v2738, %v2771
      %v2786 = vmul.f32 %v2722, %v2775
      %v2787 = vmul.f32 %v2742, %v2773
      %v2788 = vmul.f32 %v2739, %v2771
      %v2789 = vmul.f32 %v2723, %v2775
      %v2790 = vmul.f32 %v2743, %v2773
      %v2791 = vlaneseq
      %v2792 = vshrl.u32 %v2791, 7
      %v2793 = vsub.s32 2, %v2792
      %v2794 = vrot.slane %v447, %v2793
      %v2795 = vlaneseq
      %v2796 = vshrl.u32 %v2795, 7
      %v2797 = vsub.s32 2, %v2796
      %v2798 = vrot.slane %v448, %v2797
      %2801 = vrot.lane.b32.xlu0 %v2794, 2
      %v2802 = vpop.permute.xlu0 %2801
      %2803 = vrot.lane.b32.xlu0 %v2798, 2
      %v2804 = vpop.permute.xlu0 %2803
      %vm2805 = vcmask 15360
      %v2806 = vsel %vm2805, %v2802, %v2804
      %v2810 = vmul.f32 %v2736, %v2802
      %v2811 = vmul.f32 %v2720, %v2806
      %v2812 = vmul.f32 %v2740, %v2804
      %v2813 = vmul.f32 %v2737, %v2802
      %v2814 = vmul.f32 %v2721, %v2806
      %v2815 = vmul.f32 %v2741, %v2804
      %v2816 = vmul.f32 %v2738, %v2802
      %v2817 = vmul.f32 %v2722, %v2806
      %v2818 = vmul.f32 %v2742, %v2804
      %v2819 = vmul.f32 %v2739, %v2802
      %v2820 = vmul.f32 %v2723, %v2806
      %v2821 = vmul.f32 %v2743, %v2804
      %v2822 = vlaneseq
      %v2823 = vshrl.u32 %v2822, 7
      %v2824 = vsub.s32 3, %v2823
      %v2825 = vrot.slane %v447, %v2824
      %v2826 = vlaneseq
      %v2827 = vshrl.u32 %v2826, 7
      %v2828 = vsub.s32 3, %v2827
      %v2829 = vrot.slane %v448, %v2828
      %2832 = vrot.lane.b32.xlu0 %v2825, 16
      %v2833 = vpop.permute.xlu0 %2832
      %2834 = vrot.lane.b32.xlu0 %v2829, 16
      %v2835 = vpop.permute.xlu0 %2834
      %v2836 = vsel %vm1792, %v2833, %v2835
      %v2840 = vmul.f32 %v2736, %v2833
      %v2841 = vmul.f32 %v2720, %v2836
      %v2842 = vmul.f32 %v2740, %v2835
      %v2843 = vmul.f32 %v2737, %v2833
      %v2844 = vmul.f32 %v2721, %v2836
      %v2845 = vmul.f32 %v2741, %v2835
      %v2846 = vmul.f32 %v2738, %v2833
      %v2847 = vmul.f32 %v2722, %v2836
      %v2848 = vmul.f32 %v2742, %v2835
      %v2849 = vmul.f32 %v2739, %v2833
      %v2850 = vmul.f32 %v2723, %v2836
      %v2851 = vmul.f32 %v2743, %v2835
      %v2852 = vlaneseq
      %v2853 = vshrl.u32 %v2852, 7
      %v2854 = vsub.s32 4, %v2853
      %v2855 = vrot.slane %v447, %v2854
      %v2856 = vlaneseq
      %v2857 = vshrl.u32 %v2856, 7
      %v2858 = vsub.s32 4, %v2857
      %v2859 = vrot.slane %v448, %v2858
      %2862 = vrot.lane.b32.xlu0 %v2855, 17
      %v2863 = vpop.permute.xlu0 %2862
      %2864 = vrot.lane.b32.xlu0 %v2859, 17
      %v2865 = vpop.permute.xlu0 %2864
      %v2866 = vsel %vm2719, %v2863, %v2865
      %v2870 = vmul.f32 %v2736, %v2863
      %v2871 = vmul.f32 %v2720, %v2866
      %v2872 = vmul.f32 %v2740, %v2865
      %v2873 = vmul.f32 %v2737, %v2863
      %v2874 = vmul.f32 %v2721, %v2866
      %v2875 = vmul.f32 %v2741, %v2865
      %v2876 = vmul.f32 %v2738, %v2863
      %v2877 = vmul.f32 %v2722, %v2866
      %v2878 = vmul.f32 %v2742, %v2865
      %v2879 = vmul.f32 %v2739, %v2863
      %v2880 = vmul.f32 %v2723, %v2866
      %v2881 = vmul.f32 %v2743, %v2865
      %v2882 = vlaneseq
      %v2883 = vshrl.u32 %v2882, 7
      %v2884 = vsub.s32 5, %v2883
      %v2885 = vrot.slane %v447, %v2884
      %v2886 = vlaneseq
      %v2887 = vshrl.u32 %v2886, 7
      %v2888 = vsub.s32 5, %v2887
      %v2889 = vrot.slane %v448, %v2888
      %2892 = vrot.lane.b32.xlu0 %v2885, 18
      %v2893 = vpop.permute.xlu0 %2892
      %2894 = vrot.lane.b32.xlu0 %v2889, 18
      %v2895 = vpop.permute.xlu0 %2894
      %vm2896 = vcmask 146432
      %v2897 = vsel %vm2896, %v2893, %v2895
      %v2901 = vmul.f32 %v2736, %v2893
      %v2902 = vmul.f32 %v2720, %v2897
      %v2903 = vmul.f32 %v2740, %v2895
      %v2904 = vmul.f32 %v2737, %v2893
      %v2905 = vmul.f32 %v2721, %v2897
      %v2906 = vmul.f32 %v2741, %v2895
      %v2907 = vmul.f32 %v2738, %v2893
      %v2908 = vmul.f32 %v2722, %v2897
      %v2909 = vmul.f32 %v2742, %v2895
      %v2910 = vmul.f32 %v2739, %v2893
      %v2911 = vmul.f32 %v2723, %v2897
      %v2912 = vmul.f32 %v2743, %v2895
      %v2913 = vlaneseq
      %v2914 = vshrl.u32 %v2913, 7
      %v2915 = vsub.s32 6, %v2914
      %v2916 = vrot.slane %v447, %v2915
      %v2917 = vlaneseq
      %v2918 = vshrl.u32 %v2917, 7
      %v2919 = vsub.s32 6, %v2918
      %v2920 = vrot.slane %v448, %v2919
      %2923 = vrot.lane.b32.xlu0 %v2916, 32
      %v2924 = vpop.permute.xlu0 %2923
      %2925 = vrot.lane.b32.xlu0 %v2920, 32
      %v2926 = vpop.permute.xlu0 %2925
      %v2927 = vsel %vm886, %v2924, %v2926
      %v2931 = vmul.f32 %v2736, %v2924
      %v2932 = vmul.f32 %v2720, %v2927
      %v2933 = vmul.f32 %v2740, %v2926
      %v2934 = vmul.f32 %v2737, %v2924
      %v2935 = vmul.f32 %v2721, %v2927
      %v2936 = vmul.f32 %v2741, %v2926
      %v2937 = vmul.f32 %v2738, %v2924
      %v2938 = vmul.f32 %v2722, %v2927
      %v2939 = vmul.f32 %v2742, %v2926
      %v2940 = vmul.f32 %v2739, %v2924
      %v2941 = vmul.f32 %v2723, %v2927
      %v2942 = vmul.f32 %v2743, %v2926
      %v2943 = vlaneseq
      %v2944 = vshrl.u32 %v2943, 7
      %v2945 = vsub.s32 7, %v2944
      %v2946 = vrot.slane %v447, %v2945
      %v2947 = vlaneseq
      %v2948 = vshrl.u32 %v2947, 7
      %v2949 = vsub.s32 7, %v2948
      %v2950 = vrot.slane %v448, %v2949
      %2953 = vrot.lane.b32.xlu0 %v2946, 33
      %v2954 = vpop.permute.xlu0 %2953
      %2955 = vrot.lane.b32.xlu0 %v2950, 33
      %v2956 = vpop.permute.xlu0 %2955
      %vm2957 = vcmask 269312
      %v2958 = vsel %vm2957, %v2954, %v2956
      %v2962 = vmul.f32 %v2736, %v2954
      %v2963 = vmul.f32 %v2720, %v2958
      %v2964 = vmul.f32 %v2740, %v2956
      %v2965 = vmul.f32 %v2737, %v2954
      %v2966 = vmul.f32 %v2721, %v2958
      %v2967 = vmul.f32 %v2741, %v2956
      %v2968 = vmul.f32 %v2738, %v2954
      %v2969 = vmul.f32 %v2722, %v2958
      %v2970 = vmul.f32 %v2742, %v2956
      %v2971 = vmul.f32 %v2739, %v2954
      %v2972 = vmul.f32 %v2723, %v2958
      %v2973 = vmul.f32 %v2743, %v2956
      %v2974 = vlaneseq
      %v2975 = vshrl.u32 %v2974, 7
      %v2976 = vsub.s32 0, %v2975
      %v2977 = vrot.slane %v450, %v2976
      %v2978 = vlaneseq
      %v2979 = vshrl.u32 %v2978, 7
      %v2980 = vsub.s32 0, %v2979
      %v2981 = vrot.slane %v451, %v2980
      %2984 = vrot.lane.b32.xlu0 %v2977, 34
      %v2985 = vpop.permute.xlu0 %2984
      %2986 = vrot.lane.b32.xlu0 %v2981, 34
      %v2987 = vpop.permute.xlu0 %2986
      %vm2988 = vcmask 277504
      %v2989 = vsel %vm2988, %v2985, %v2987
      %v2993 = vmul.f32 %v2736, %v2985
      %v2994 = vmul.f32 %v2720, %v2989
      %v2995 = vmul.f32 %v2740, %v2987
      %v2996 = vmul.f32 %v2737, %v2985
      %v2997 = vmul.f32 %v2721, %v2989
      %v2998 = vmul.f32 %v2741, %v2987
      %v2999 = vmul.f32 %v2738, %v2985
      %v3000 = vmul.f32 %v2722, %v2989
      %v3001 = vmul.f32 %v2742, %v2987
      %v3002 = vmul.f32 %v2739, %v2985
      %v3003 = vmul.f32 %v2723, %v2989
      %v3004 = vmul.f32 %v2743, %v2987
      %3017 = vrot.lane.b32.xlu0 %v2779, 127
      %v3018 = vpop.permute.xlu0 %3017
      %3019 = vrot.lane.b32.xlu0 %v2780, 127
      %v3020 = vpop.permute.xlu0 %3019
      %3021 = vrot.lane.b32.xlu0 %v2781, 127
      %v3022 = vpop.permute.xlu0 %3021
      %3023 = vrot.lane.b32.xlu0 %v2782, 127
      %v3024 = vpop.permute.xlu0 %3023
      %3025 = vrot.lane.b32.xlu0 %v2783, 127
      %v3026 = vpop.permute.xlu0 %3025
      %3027 = vrot.lane.b32.xlu0 %v2784, 127
      %v3028 = vpop.permute.xlu0 %3027
      %3029 = vrot.lane.b32.xlu0 %v2785, 127
      %v3030 = vpop.permute.xlu0 %3029
      %3031 = vrot.lane.b32.xlu0 %v2786, 127
      %v3032 = vpop.permute.xlu0 %3031
      %3033 = vrot.lane.b32.xlu0 %v2787, 127
      %v3034 = vpop.permute.xlu0 %3033
      %3035 = vrot.lane.b32.xlu0 %v2788, 127
      %v3036 = vpop.permute.xlu0 %3035
      %3037 = vrot.lane.b32.xlu0 %v2789, 127
      %v3038 = vpop.permute.xlu0 %3037
      %3039 = vrot.lane.b32.xlu0 %v2790, 127
      %v3040 = vpop.permute.xlu0 %3039
      %vm3041 = vcmask 1039360
      %v3042 = vsel %vm3041, %v3018, %v3020
      %v3043 = vsel %vm3041, %v3020, %v3022
      %v3044 = vsel %vm3041, %v3024, %v3026
      %v3045 = vsel %vm3041, %v3026, %v3028
      %v3046 = vsel %vm3041, %v3030, %v3032
      %v3047 = vsel %vm3041, %v3032, %v3034
      %v3048 = vsel %vm3041, %v3036, %v3038
      %v3049 = vsel %vm3041, %v3038, %v3040
      %3070 = vrot.lane.b32.xlu0 %v2810, 126
      %v3071 = vpop.permute.xlu0 %3070
      %3072 = vrot.lane.b32.xlu0 %v2811, 126
      %v3073 = vpop.permute.xlu0 %3072
      %3074 = vrot.lane.b32.xlu0 %v2812, 126
      %v3075 = vpop.permute.xlu0 %3074
      %3076 = vrot.lane.b32.xlu0 %v2813, 126
      %v3077 = vpop.permute.xlu0 %3076
      %3078 = vrot.lane.b32.xlu0 %v2814, 126
      %v3079 = vpop.permute.xlu0 %3078
      %3080 = vrot.lane.b32.xlu0 %v2815, 126
      %v3081 = vpop.permute.xlu0 %3080
      %3082 = vrot.lane.b32.xlu0 %v2816, 126
      %v3083 = vpop.permute.xlu0 %3082
      %3084 = vrot.lane.b32.xlu0 %v2817, 126
      %v3085 = vpop.permute.xlu0 %3084
      %3086 = vrot.lane.b32.xlu0 %v2818, 126
      %v3087 = vpop.permute.xlu0 %3086
      %3088 = vrot.lane.b32.xlu0 %v2819, 126
      %v3089 = vpop.permute.xlu0 %3088
      %3090 = vrot.lane.b32.xlu0 %v2820, 126
      %v3091 = vpop.permute.xlu0 %3090
      %3092 = vrot.lane.b32.xlu0 %v2821, 126
      %v3093 = vpop.permute.xlu0 %3092
      %vm3094 = vcmask 1031168
      %v3095 = vsel %vm3094, %v3071, %v3073
      %v3096 = vsel %vm3094, %v3073, %v3075
      %v3097 = vsel %vm3094, %v3077, %v3079
      %v3098 = vsel %vm3094, %v3079, %v3081
      %v3099 = vsel %vm3094, %v3083, %v3085
      %v3100 = vsel %vm3094, %v3085, %v3087
      %v3101 = vsel %vm3094, %v3089, %v3091
      %v3102 = vsel %vm3094, %v3091, %v3093
      %3123 = vrot.lane.b32.xlu0 %v2840, 112
      %v3124 = vpop.permute.xlu0 %3123
      %3125 = vrot.lane.b32.xlu0 %v2841, 112
      %v3126 = vpop.permute.xlu0 %3125
      %3127 = vrot.lane.b32.xlu0 %v2842, 112
      %v3128 = vpop.permute.xlu0 %3127
      %3129 = vrot.lane.b32.xlu0 %v2843, 112
      %v3130 = vpop.permute.xlu0 %3129
      %3131 = vrot.lane.b32.xlu0 %v2844, 112
      %v3132 = vpop.permute.xlu0 %3131
      %3133 = vrot.lane.b32.xlu0 %v2845, 112
      %v3134 = vpop.permute.xlu0 %3133
      %3135 = vrot.lane.b32.xlu0 %v2846, 112
      %v3136 = vpop.permute.xlu0 %3135
      %3137 = vrot.lane.b32.xlu0 %v2847, 112
      %v3138 = vpop.permute.xlu0 %3137
      %3139 = vrot.lane.b32.xlu0 %v2848, 112
      %v3140 = vpop.permute.xlu0 %3139
      %3141 = vrot.lane.b32.xlu0 %v2849, 112
      %v3142 = vpop.permute.xlu0 %3141
      %3143 = vrot.lane.b32.xlu0 %v2850, 112
      %v3144 = vpop.permute.xlu0 %3143
      %3145 = vrot.lane.b32.xlu0 %v2851, 112
      %v3146 = vpop.permute.xlu0 %3145
      %vm3147 = vcmask 916480
      %v3148 = vsel %vm3147, %v3124, %v3126
      %v3149 = vsel %vm3147, %v3126, %v3128
      %v3150 = vsel %vm3147, %v3130, %v3132
      %v3151 = vsel %vm3147, %v3132, %v3134
      %v3152 = vsel %vm3147, %v3136, %v3138
      %v3153 = vsel %vm3147, %v3138, %v3140
      %v3154 = vsel %vm3147, %v3142, %v3144
      %v3155 = vsel %vm3147, %v3144, %v3146
      %3176 = vrot.lane.b32.xlu0 %v2870, 111
      %v3177 = vpop.permute.xlu0 %3176
      %3178 = vrot.lane.b32.xlu0 %v2871, 111
      %v3179 = vpop.permute.xlu0 %3178
      %3180 = vrot.lane.b32.xlu0 %v2872, 111
      %v3181 = vpop.permute.xlu0 %3180
      %3182 = vrot.lane.b32.xlu0 %v2873, 111
      %v3183 = vpop.permute.xlu0 %3182
      %3184 = vrot.lane.b32.xlu0 %v2874, 111
      %v3185 = vpop.permute.xlu0 %3184
      %3186 = vrot.lane.b32.xlu0 %v2875, 111
      %v3187 = vpop.permute.xlu0 %3186
      %3188 = vrot.lane.b32.xlu0 %v2876, 111
      %v3189 = vpop.permute.xlu0 %3188
      %3190 = vrot.lane.b32.xlu0 %v2877, 111
      %v3191 = vpop.permute.xlu0 %3190
      %3192 = vrot.lane.b32.xlu0 %v2878, 111
      %v3193 = vpop.permute.xlu0 %3192
      %3194 = vrot.lane.b32.xlu0 %v2879, 111
      %v3195 = vpop.permute.xlu0 %3194
      %3196 = vrot.lane.b32.xlu0 %v2880, 111
      %v3197 = vpop.permute.xlu0 %3196
      %3198 = vrot.lane.b32.xlu0 %v2881, 111
      %v3199 = vpop.permute.xlu0 %3198
      %vm3200 = vcmask 908288
      %v3201 = vsel %vm3200, %v3177, %v3179
      %v3202 = vsel %vm3200, %v3179, %v3181
      %v3203 = vsel %vm3200, %v3183, %v3185
      %v3204 = vsel %vm3200, %v3185, %v3187
      %v3205 = vsel %vm3200, %v3189, %v3191
      %v3206 = vsel %vm3200, %v3191, %v3193
      %v3207 = vsel %vm3200, %v3195, %v3197
      %v3208 = vsel %vm3200, %v3197, %v3199
      %3229 = vrot.lane.b32.xlu0 %v2901, 110
      %v3230 = vpop.permute.xlu0 %3229
      %3231 = vrot.lane.b32.xlu0 %v2902, 110
      %v3232 = vpop.permute.xlu0 %3231
      %3233 = vrot.lane.b32.xlu0 %v2903, 110
      %v3234 = vpop.permute.xlu0 %3233
      %3235 = vrot.lane.b32.xlu0 %v2904, 110
      %v3236 = vpop.permute.xlu0 %3235
      %3237 = vrot.lane.b32.xlu0 %v2905, 110
      %v3238 = vpop.permute.xlu0 %3237
      %3239 = vrot.lane.b32.xlu0 %v2906, 110
      %v3240 = vpop.permute.xlu0 %3239
      %3241 = vrot.lane.b32.xlu0 %v2907, 110
      %v3242 = vpop.permute.xlu0 %3241
      %3243 = vrot.lane.b32.xlu0 %v2908, 110
      %v3244 = vpop.permute.xlu0 %3243
      %3245 = vrot.lane.b32.xlu0 %v2909, 110
      %v3246 = vpop.permute.xlu0 %3245
      %3247 = vrot.lane.b32.xlu0 %v2910, 110
      %v3248 = vpop.permute.xlu0 %3247
      %3249 = vrot.lane.b32.xlu0 %v2911, 110
      %v3250 = vpop.permute.xlu0 %3249
      %3251 = vrot.lane.b32.xlu0 %v2912, 110
      %v3252 = vpop.permute.xlu0 %3251
      %vm3253 = vcmask 900096
      %v3254 = vsel %vm3253, %v3230, %v3232
      %v3255 = vsel %vm3253, %v3232, %v3234
      %v3256 = vsel %vm3253, %v3236, %v3238
      %v3257 = vsel %vm3253, %v3238, %v3240
      %v3258 = vsel %vm3253, %v3242, %v3244
      %v3259 = vsel %vm3253, %v3244, %v3246
      %v3260 = vsel %vm3253, %v3248, %v3250
      %v3261 = vsel %vm3253, %v3250, %v3252
      %3282 = vrot.lane.b32.xlu0 %v2931, 96
      %v3283 = vpop.permute.xlu0 %3282
      %3284 = vrot.lane.b32.xlu0 %v2932, 96
      %v3285 = vpop.permute.xlu0 %3284
      %3286 = vrot.lane.b32.xlu0 %v2933, 96
      %v3287 = vpop.permute.xlu0 %3286
      %3288 = vrot.lane.b32.xlu0 %v2934, 96
      %v3289 = vpop.permute.xlu0 %3288
      %3290 = vrot.lane.b32.xlu0 %v2935, 96
      %v3291 = vpop.permute.xlu0 %3290
      %3292 = vrot.lane.b32.xlu0 %v2936, 96
      %v3293 = vpop.permute.xlu0 %3292
      %3294 = vrot.lane.b32.xlu0 %v2937, 96
      %v3295 = vpop.permute.xlu0 %3294
      %3296 = vrot.lane.b32.xlu0 %v2938, 96
      %v3297 = vpop.permute.xlu0 %3296
      %3298 = vrot.lane.b32.xlu0 %v2939, 96
      %v3299 = vpop.permute.xlu0 %3298
      %3300 = vrot.lane.b32.xlu0 %v2940, 96
      %v3301 = vpop.permute.xlu0 %3300
      %3302 = vrot.lane.b32.xlu0 %v2941, 96
      %v3303 = vpop.permute.xlu0 %3302
      %3304 = vrot.lane.b32.xlu0 %v2942, 96
      %v3305 = vpop.permute.xlu0 %3304
      %vm3306 = vcmask 785408
      %v3307 = vsel %vm3306, %v3283, %v3285
      %v3308 = vsel %vm3306, %v3285, %v3287
      %v3309 = vsel %vm3306, %v3289, %v3291
      %v3310 = vsel %vm3306, %v3291, %v3293
      %v3311 = vsel %vm3306, %v3295, %v3297
      %v3312 = vsel %vm3306, %v3297, %v3299
      %v3313 = vsel %vm3306, %v3301, %v3303
      %v3314 = vsel %vm3306, %v3303, %v3305
      %3335 = vrot.lane.b32.xlu0 %v2962, 95
      %v3336 = vpop.permute.xlu0 %3335
      %3337 = vrot.lane.b32.xlu0 %v2963, 95
      %v3338 = vpop.permute.xlu0 %3337
      %3339 = vrot.lane.b32.xlu0 %v2964, 95
      %v3340 = vpop.permute.xlu0 %3339
      %3341 = vrot.lane.b32.xlu0 %v2965, 95
      %v3342 = vpop.permute.xlu0 %3341
      %3343 = vrot.lane.b32.xlu0 %v2966, 95
      %v3344 = vpop.permute.xlu0 %3343
      %3345 = vrot.lane.b32.xlu0 %v2967, 95
      %v3346 = vpop.permute.xlu0 %3345
      %3347 = vrot.lane.b32.xlu0 %v2968, 95
      %v3348 = vpop.permute.xlu0 %3347
      %3349 = vrot.lane.b32.xlu0 %v2969, 95
      %v3350 = vpop.permute.xlu0 %3349
      %3351 = vrot.lane.b32.xlu0 %v2970, 95
      %v3352 = vpop.permute.xlu0 %3351
      %3353 = vrot.lane.b32.xlu0 %v2971, 95
      %v3354 = vpop.permute.xlu0 %3353
      %3355 = vrot.lane.b32.xlu0 %v2972, 95
      %v3356 = vpop.permute.xlu0 %3355
      %3357 = vrot.lane.b32.xlu0 %v2973, 95
      %v3358 = vpop.permute.xlu0 %3357
      %vm3359 = vcmask 777216
      %v3360 = vsel %vm3359, %v3336, %v3338
      %v3361 = vsel %vm3359, %v3338, %v3340
      %v3362 = vsel %vm3359, %v3342, %v3344
      %v3363 = vsel %vm3359, %v3344, %v3346
      %v3364 = vsel %vm3359, %v3348, %v3350
      %v3365 = vsel %vm3359, %v3350, %v3352
      %v3366 = vsel %vm3359, %v3354, %v3356
      %v3367 = vsel %vm3359, %v3356, %v3358
      %3388 = vrot.lane.b32.xlu0 %v2993, 94
      %v3389 = vpop.permute.xlu0 %3388
      %3390 = vrot.lane.b32.xlu0 %v2994, 94
      %v3391 = vpop.permute.xlu0 %3390
      %3392 = vrot.lane.b32.xlu0 %v2995, 94
      %v3393 = vpop.permute.xlu0 %3392
      %3394 = vrot.lane.b32.xlu0 %v2996, 94
      %v3395 = vpop.permute.xlu0 %3394
      %3396 = vrot.lane.b32.xlu0 %v2997, 94
      %v3397 = vpop.permute.xlu0 %3396
      %3398 = vrot.lane.b32.xlu0 %v2998, 94
      %v3399 = vpop.permute.xlu0 %3398
      %3400 = vrot.lane.b32.xlu0 %v2999, 94
      %v3401 = vpop.permute.xlu0 %3400
      %3402 = vrot.lane.b32.xlu0 %v3000, 94
      %v3403 = vpop.permute.xlu0 %3402
      %3404 = vrot.lane.b32.xlu0 %v3001, 94
      %v3405 = vpop.permute.xlu0 %3404
      %3406 = vrot.lane.b32.xlu0 %v3002, 94
      %v3407 = vpop.permute.xlu0 %3406
      %3408 = vrot.lane.b32.xlu0 %v3003, 94
      %v3409 = vpop.permute.xlu0 %3408
      %3410 = vrot.lane.b32.xlu0 %v3004, 94
      %v3411 = vpop.permute.xlu0 %3410
      %vm3412 = vcmask 769024
      %v3413 = vsel %vm3412, %v3389, %v3391
      %v3414 = vsel %vm3412, %v3391, %v3393
      %v3415 = vsel %vm3412, %v3395, %v3397
      %v3416 = vsel %vm3412, %v3397, %v3399
      %v3417 = vsel %vm3412, %v3401, %v3403
      %v3418 = vsel %vm3412, %v3403, %v3405
      %v3419 = vsel %vm3412, %v3407, %v3409
      %v3420 = vsel %vm3412, %v3409, %v3411
      %v3429 = vld [vmem:[%s6] sm:$0xff]
      %v3430 = vld [vmem:[%s6 + $0x8] sm:$0xff]
      %v3431 = vld [vmem:[%s6 + $0x10] sm:$0xff]
      %v3432 = vld [vmem:[%s6 + $0x18] sm:$0xff]
      %v3433 = vld [vmem:[%s6 + $0x20] sm:$0xff]
      %v3434 = vld [vmem:[%s6 + $0x28] sm:$0xff]
      %v3435 = vld [vmem:[%s6 + $0x30] sm:$0xff]
      %v3436 = vld [vmem:[%s6 + $0x38] sm:$0xff]
      %v3437 = vld [vmem:[%s6 + $0x40] sm:$0xff]
      %v3438 = vld [vmem:[%s6 + $0x48] sm:$0xff]
      %v3439 = vld [vmem:[%s6 + $0x50] sm:$0xff]
      %v3440 = vld [vmem:[%s6 + $0x58] sm:$0xff]
      %3441 = vset.pattern.permute.xlu0 1
      %3442 = vperm.xlu0 %3441, %v453
      %v3443 = vpop.permute.xlu0 %3442
      %3445 = vset.pattern.permute.xlu0 1
      %3446 = vperm.xlu0 %3445, %v454
      %v3447 = vpop.permute.xlu0 %3446
      %3449 = vset.pattern.permute.xlu0 1
      %3450 = vperm.xlu0 %3449, %v455
      %v3451 = vpop.permute.xlu0 %3450
      %3453 = vset.pattern.permute.xlu0 1
      %3454 = vperm.xlu0 %3453, %v456
      %v3455 = vpop.permute.xlu0 %3454
      %v3458 = vsel %vm886, %v3431, 0
      %v3461 = vsel %vm886, %v3434, 0
      %v3464 = vsel %vm886, %v3437, 0
      %v3467 = vsel %vm886, %v3440, 0
      %3469 = vmatprep.subr.mxu0 %v3155
      %3470 = vmatpush1.msra.mxu0 %v3154
      %3471 = vmatprep.subr.mxu0 %v3153
      %3472 = vmatpush1.msra.mxu0 %v3152
      %3473 = vmatprep.subr.mxu0 %v3151
      %3474 = vmatpush1.msra.mxu0 %v3150
      %3475 = vmatprep.subr.mxu0 %v3149
      %3476 = vmatpush1.msra.mxu0 %v3148
      %3477 = vmatprep.subr.mxu0 %v3102
      %3478 = vmatpush1.msra.mxu0 %v3101
      %3479 = vmatprep.subr.mxu0 %v3100
      %3480 = vmatpush1.msra.mxu0 %v3099
      %3481 = vmatprep.subr.mxu0 %v3098
      %3482 = vmatpush1.msra.mxu0 %v3097
      %3483 = vmatprep.subr.mxu0 %v3096
      %3484 = vmatpush1.msra.mxu0 %v3095
      %3485 = vmatprep.subr.mxu0 %v3049
      %3486 = vmatpush1.msra.mxu0 %v3048
      %3487 = vmatprep.subr.mxu0 %v3047
      %3488 = vmatpush1.msra.mxu0 %v3046
      %3489 = vmatprep.subr.mxu0 %v3045
      %3490 = vmatpush1.msra.mxu0 %v3044
      %3491 = vmatprep.subr.mxu0 %v3043
      %3492 = vmatpush1.msra.mxu0 %v3042
      %3493 = vmatprep.subr.mxu0 %v2759
      %3494 = vmatpush1.msra.mxu0 %v2758
      %3495 = vmatprep.subr.mxu0 %v2757
      %3496 = vmatpush1.msra.mxu0 %v2756
      %3497 = vmatprep.subr.mxu0 %v2755
      %3498 = vmatpush1.msra.mxu0 %v2754
      %3499 = vmatprep.subr.mxu0 %v2753
      %3500 = vmatpush1.msra.mxu0 %v2752
      %3501 = vmatprep.subr.mxu0 %v3367
      %3502 = vmatpush2.msra.mxu0 %v3366
      %3503 = vmatprep.subr.mxu0 %v3365
      %3504 = vmatpush2.msra.mxu0 %v3364
      %3505 = vmatprep.subr.mxu0 %v3363
      %3506 = vmatpush2.msra.mxu0 %v3362
      %3507 = vmatprep.subr.mxu0 %v3361
      %3508 = vmatpush2.msra.mxu0 %v3360
      %3509 = vmatprep.subr.mxu0 %v3314
      %3510 = vmatpush2.msra.mxu0 %v3313
      %3511 = vmatprep.subr.mxu0 %v3312
      %3512 = vmatpush2.msra.mxu0 %v3311
      %3513 = vmatprep.subr.mxu0 %v3310
      %3514 = vmatpush2.msra.mxu0 %v3309
      %3515 = vmatprep.subr.mxu0 %v3308
      %3516 = vmatpush2.msra.mxu0 %v3307
      %3517 = vmatprep.subr.mxu0 %v3261
      %3518 = vmatpush2.msra.mxu0 %v3260
      %3519 = vmatprep.subr.mxu0 %v3259
      %3520 = vmatpush2.msra.mxu0 %v3258
      %3521 = vmatprep.subr.mxu0 %v3257
      %3522 = vmatpush2.msra.mxu0 %v3256
      %3523 = vmatprep.subr.mxu0 %v3255
      %3524 = vmatpush2.msra.mxu0 %v3254
      %3525 = vmatprep.subr.mxu0 %v3208
      %3526 = vmatpush2.msra.mxu0 %v3207
      %3527 = vmatprep.subr.mxu0 %v3206
      %3528 = vmatpush2.msra.mxu0 %v3205
      %3529 = vmatprep.subr.mxu0 %v3204
      %3530 = vmatpush2.msra.mxu0 %v3203
      %3531 = vmatprep.subr.mxu0 %v3202
      %3532 = vmatpush2.msra.mxu0 %v3201
      %3533 = vmatprep.mubr.f32.mxu0 %v3430
      %3534 = vmatmul.mubr.f32.gmra.mxu0 %v3429
      %v3535 = vpop.f32.mrf.mxu0
      %v3536 = vadd.f32 %v3443, %v3535
      %v3537 = vpop.f32.mrf.mxu0
      %v3538 = vadd.f32 %v3443, %v3537
      %3539 = vmatprep.mubr.f32.mxu0 %v3433
      %3540 = vmatmul.mubr.f32.gmra.mxu0 %v3432
      %v3541 = vpop.f32.mrf.mxu0
      %v3542 = vadd.f32 %v3447, %v3541
      %v3543 = vpop.f32.mrf.mxu0
      %v3544 = vadd.f32 %v3447, %v3543
      %3545 = vmatprep.mubr.f32.mxu0 %v3436
      %3546 = vmatmul.mubr.f32.gmra.mxu0 %v3435
      %v3547 = vpop.f32.mrf.mxu0
      %v3548 = vadd.f32 %v3451, %v3547
      %v3549 = vpop.f32.mrf.mxu0
      %v3550 = vadd.f32 %v3451, %v3549
      %3551 = vmatprep.mubr.f32.mxu0 %v3439
      %3552 = vmatmul.mubr.f32.gmra.mxu0 %v3438
      %v3553 = vpop.f32.mrf.mxu0
      %v3554 = vadd.f32 %v3455, %v3553
      %v3555 = vpop.f32.mrf.mxu0
      %v3556 = vadd.f32 %v3455, %v3555
      %3557 = vdwg.mxu0
      %3558 = vmatprep.subr.mxu0 0.0
      %3559 = vmatpush1.msra.mxu0 0.0
      %3560 = vmatprep.subr.mxu0 0.0
      %3561 = vmatpush1.msra.mxu0 0.0
      %3562 = vmatprep.subr.mxu0 0.0
      %3563 = vmatpush1.msra.mxu0 0.0
      %3564 = vmatprep.subr.mxu0 0.0
      %3565 = vmatpush1.msra.mxu0 0.0
      %3566 = vmatprep.subr.mxu0 0.0
      %3567 = vmatpush1.msra.mxu0 0.0
      %3568 = vmatprep.subr.mxu0 0.0
      %3569 = vmatpush1.msra.mxu0 0.0
      %3570 = vmatprep.subr.mxu0 0.0
      %3571 = vmatpush1.msra.mxu0 0.0
      %3572 = vmatprep.subr.mxu0 0.0
      %3573 = vmatpush1.msra.mxu0 0.0
      %3574 = vmatprep.subr.mxu0 0.0
      %3575 = vmatpush1.msra.mxu0 0.0
      %3576 = vmatprep.subr.mxu0 0.0
      %3577 = vmatpush1.msra.mxu0 0.0
      %3578 = vmatprep.subr.mxu0 0.0
      %3579 = vmatpush1.msra.mxu0 0.0
      %3580 = vmatprep.subr.mxu0 0.0
      %3581 = vmatpush1.msra.mxu0 0.0
      %3582 = vmatprep.subr.mxu0 %v3420
      %3583 = vmatpush1.msra.mxu0 %v3419
      %3584 = vmatprep.subr.mxu0 %v3418
      %3585 = vmatpush1.msra.mxu0 %v3417
      %3586 = vmatprep.subr.mxu0 %v3416
      %3587 = vmatpush1.msra.mxu0 %v3415
      %3588 = vmatprep.subr.mxu0 %v3414
      %3589 = vmatpush1.msra.mxu0 %v3413
      %3590 = vmatprep.subr.mxu0 0.0
      %3591 = vmatpush2.msra.mxu0 0.0
      %3592 = vmatprep.subr.mxu0 0.0
      %3593 = vmatpush2.msra.mxu0 0.0
      %3594 = vmatprep.subr.mxu0 0.0
      %3595 = vmatpush2.msra.mxu0 0.0
      %3596 = vmatprep.subr.mxu0 0.0
      %3597 = vmatpush2.msra.mxu0 0.0
      %3598 = vmatprep.subr.mxu0 0.0
      %3599 = vmatpush2.msra.mxu0 0.0
      %3600 = vmatprep.subr.mxu0 0.0
      %3601 = vmatpush2.msra.mxu0 0.0
      %3602 = vmatprep.subr.mxu0 0.0
      %3603 = vmatpush2.msra.mxu0 0.0
      %3604 = vmatprep.subr.mxu0 0.0
      %3605 = vmatpush2.msra.mxu0 0.0
      %3606 = vmatprep.subr.mxu0 0.0
      %3607 = vmatpush2.msra.mxu0 0.0
      %3608 = vmatprep.subr.mxu0 0.0
      %3609 = vmatpush2.msra.mxu0 0.0
      %3610 = vmatprep.subr.mxu0 0.0
      %3611 = vmatpush2.msra.mxu0 0.0
      %3612 = vmatprep.subr.mxu0 0.0
      %3613 = vmatpush2.msra.mxu0 0.0
      %3614 = vmatprep.subr.mxu0 0.0
      %3615 = vmatpush2.msra.mxu0 0.0
      %3616 = vmatprep.subr.mxu0 0.0
      %3617 = vmatpush2.msra.mxu0 0.0
      %3618 = vmatprep.subr.mxu0 0.0
      %3619 = vmatpush2.msra.mxu0 0.0
      %3620 = vmatprep.subr.mxu0 0.0
      %3621 = vmatpush2.msra.mxu0 0.0
      %3622 = vmatprep.mubr.f32.mxu0 0.0
      %3623 = vmatmul.mubr.f32.gmra.mxu0 %v3458
      %v3624 = vpop.f32.mrf.mxu0
      %v3625 = vadd.f32 %v3536, %v3624
      %v3626 = vpop.f32.mrf.mxu0
      %v3627 = vadd.f32 %v3538, %v3626
      %3628 = vmatprep.mubr.f32.mxu0 0.0
      %3629 = vmatmul.mubr.f32.gmra.mxu0 %v3461
      %v3630 = vpop.f32.mrf.mxu0
      %v3631 = vadd.f32 %v3542, %v3630
      %v3632 = vpop.f32.mrf.mxu0
      %v3633 = vadd.f32 %v3544, %v3632
      %3634 = vmatprep.mubr.f32.mxu0 0.0
      %3635 = vmatmul.mubr.f32.gmra.mxu0 %v3464
      %v3636 = vpop.f32.mrf.mxu0
      %v3637 = vadd.f32 %v3548, %v3636
      %v3638 = vpop.f32.mrf.mxu0
      %v3639 = vadd.f32 %v3550, %v3638
      %3640 = vmatprep.mubr.f32.mxu0 0.0
      %3641 = vmatmul.mubr.f32.gmra.mxu0 %v3467
      %v3642 = vpop.f32.mrf.mxu0
      %v3643 = vadd.f32 %v3554, %v3642
      %v3644 = vpop.f32.mrf.mxu0
      %v3645 = vadd.f32 %v3556, %v3644
      %3646 = vdwg.mxu0
      %3647 = vst [vmem:[%s446] sm:$0xff] %v3625
      %3648 = vst [vmem:[%s446 + $0x8] sm:$0xff] %v3627
      %3649 = vst [vmem:[%s446 + $0x18] sm:$0xff] %v3631
      %3650 = vst [vmem:[%s446 + $0x20] sm:$0xff] %v3633
      %3651 = vst [vmem:[%s446 + $0x30] sm:$0xff] %v3637
      %3652 = vst [vmem:[%s446 + $0x38] sm:$0xff] %v3639
      %3653 = vst [vmem:[%s446 + $0x48] sm:$0xff] %v3643
      %3654 = vst [vmem:[%s446 + $0x50] sm:$0xff] %v3645
      %p3655 = scmp.lt.s32.totalorder %s22, 1
      %s3656 = scalar_select %p3655, %s22, 1
      %s3657 = smul.addr %s3656, 12
      %s3658 = smul.addr %s3657, 8
      %s3659 = scalar_lea.vmem %s11, %s3658
      // Predicated region
      $region65: #{fpn_forward.1} parent=63 // pred_check
        %p3660 = pneg %p291
      $region66: #{fpn_forward.1} parent=63 // pred_check_branch
        %3662 = sbr.rel (%p3660) target = $region68
      $region67: #{fpn_forward.1} parent=63 // pred_region
        _
      $region68: #{fpn_forward.1} parent=63 // pred_fallthru
        _
    $region64: #{fpn_forward.1} parent=5 // pred_fallthru
      _
    %p3663 = scmp.le.s32.totalorder 2, %s17
    // Predicated region
    $region69: #{fpn_forward.1} parent=5 // pred_check
      %p3664 = pneg %p3663
    $region70: #{fpn_forward.1} parent=5 // pred_check_branch
      %3666 = sbr.rel (%p3664) target = $region72
    $region71: #{fpn_forward.1} parent=5 // pred_region
      %s3667 = ssub.s32 %s17, 2
      // Predicated region
      $region73: #{fpn_forward.1} parent=71 // pred_check
        %p3668 = pneg %p297
      $region74: #{fpn_forward.1} parent=71 // pred_check_branch
        %3670 = sbr.rel (%p3668) target = $region76
      $region75: #{fpn_forward.1} parent=71 // pred_region
        %p3671 = scmp.lt.s32.totalorder %s23, 1
        %s3672 = scalar_select %p3671, %s23, 1
        %s3673 = smul.addr %s3672, 12
        %s3674 = smul.addr %s3673, 8
        %s3675 = scalar_lea.vmem %s11, %s3674
      $region76: #{fpn_forward.1} parent=71 // pred_fallthru
        _
    $region72: #{fpn_forward.1} parent=5 // pred_fallthru
      _
  $region6: #{fpn_forward.1} parent=0 // loop_footer
    %s21 = sadd.s32 1, %s17
  $region7: #{fpn_forward.1} parent=0 // loop_footer_branch
    %16 = sbr.rel target = $region3
  $region8: #{fpn_forward.1} parent=0 // loop_exit
    _

</llo_original>
